<compile_context>
chip_gen: v7x
topology: tpu7x:2x2x1
jax: 0.10.0
libtpu: 0.0.40
codegen_flags: <defaults>
</compile_context>

<pallas_src>
import functools

import jax
import jax.numpy as jnp
from jax.experimental import pallas as pl
from jax.experimental.pallas import tpu as pltpu


# ---------------------------------------------------------------------------
# Fused kernel
# ---------------------------------------------------------------------------

def _stem_fused_kernel(x_ref, w1_ref, w2_ref, wsc_ref, bn_ref, o_ref,
                       px_ref, po_ref, pat_ref, *, H, W, Cin, Cout):
    """conv3x3+BN+ReLU -> conv3x3+BN+ReLU, plus 1x1+BN+ReLU shortcut, fused.

    x_ref   : (1, H, W, Cin)    bf16  input image (one per grid step)
    w1_ref  : (9*Cin, Cout)     bf16  conv1 weights, rows ordered (dy, dx, ci)
    w2_ref  : (9*Cout, Cout)    bf16  conv2 weights, rows ordered (dy, dx, ci)
    wsc_ref : (Cin, Cout)       bf16  1x1 shortcut weights
    bn_ref  : (6, Cout)         f32   rows: s1, b1, s2, b2, sS, bS (folded BN)
    o_ref   : (1, H*W, Cout)    f32   output
    px_ref  : (H+2, W+2, Cin)   f32   zero-padded x             (VMEM scratch)
    po_ref  : (H+2, W+2, Cout)  f32   zero-padded out1          (VMEM scratch)
    pat_ref : (H*W, 9*Cout)     f32   shared im2col patch buffer (VMEM scratch)
    """
    f32 = jnp.float32
    bf16 = jnp.bfloat16

    # ---- stage x into a zero-padded VMEM scratch (replaces wrapper jnp.pad)
    px_ref[...] = jnp.zeros_like(px_ref)
    px_ref[1:H + 1, 1:W + 1, :] = x_ref[0].astype(f32)
    xp = px_ref[...]                                    # (H+2, W+2, Cin)

    # ---- conv1: ONE (H*W, 9*Cin) x (9*Cin, Cout) matmul + BN + ReLU
    t = 0
    for dy in range(3):
        for dx in range(3):
            pat_ref[:, t * Cin:(t + 1) * Cin] = (
                xp[dy:dy + H, dx:dx + W, :].reshape(H * W, Cin))
            t += 1
    patches1 = pat_ref[:, 0:9 * Cin].astype(bf16)       # (H*W, 9*Cin)
    out1 = jnp.dot(patches1, w1_ref[...], preferred_element_type=f32)
    out1 = jnp.maximum(out1 * bn_ref[0] + bn_ref[1], 0.0)   # (H*W, Cout) f32

    # ---- shortcut: 1x1 conv + BN + ReLU (never touches HBM)
    xs = xp[1:H + 1, 1:W + 1, :].reshape(H * W, Cin).astype(bf16)
    sc = jnp.dot(xs, wsc_ref[...], preferred_element_type=f32)
    sc = jnp.maximum(sc * bn_ref[4] + bn_ref[5], 0.0)        # (H*W, Cout) f32

    # ---- conv2: pad out1 in VMEM, ONE K=9*Cout matmul, BN + ReLU, add sc
    po_ref[...] = jnp.zeros_like(po_ref)
    po_ref[1:H + 1, 1:W + 1, :] = out1.reshape(H, W, Cout)
    op = po_ref[...]                                    # (H+2, W+2, Cout)
    t = 0
    for dy in range(3):
        for dx in range(3):
            pat_ref[:, t * Cout:(t + 1) * Cout] = (
                op[dy:dy + H, dx:dx + W, :].reshape(H * W, Cout))
            t += 1
    patches2 = pat_ref[...].astype(bf16)                # (H*W, 9*Cout)
    out2 = jnp.dot(patches2, w2_ref[...], preferred_element_type=f32)
    out2 = jnp.maximum(out2 * bn_ref[2] + bn_ref[3], 0.0) + sc

    o_ref[0] = out2.astype(o_ref.dtype)


# ---------------------------------------------------------------------------
# Wrapper
# ---------------------------------------------------------------------------

def stem_forward(params, x_nchw):
    """Matches Stem.forward (stride=1, in_chans != out_chans => conv shortcut).

    Input/output are NCHW (PyTorch convention); the kernel runs in NHWC with
    the whole stem fused into a single pallas_call.
    """
    N, Cin, H, W = x_nchw.shape
    Cout = params["w1"].shape[-1]

    # bf16 operands for the MXU; BN params stay f32 for the f32 epilogue.
    x = jnp.transpose(x_nchw, (0, 2, 3, 1)).astype(jnp.bfloat16)       # NHWC
    w1f = params["w1"].reshape(9 * Cin, Cout).astype(jnp.bfloat16)
    w2f = params["w2"].reshape(9 * Cout, Cout).astype(jnp.bfloat16)
    wsc = params["w_sc"].astype(jnp.bfloat16)
    bn = jnp.stack([params["bn1_scale"], params["bn1_bias"],
                    params["bn2_scale"], params["bn2_bias"],
                    params["bnS_scale"], params["bnS_bias"]]).astype(jnp.float32)

    kernel = functools.partial(_stem_fused_kernel, H=H, W=W, Cin=Cin, Cout=Cout)
    out = pl.pallas_call(
        kernel,
        out_shape=jax.ShapeDtypeStruct((N, H * W, Cout), jnp.float32),
        grid_spec=pltpu.PrefetchScalarGridSpec(
            num_scalar_prefetch=0,
            grid=(N,),
            in_specs=[
                pl.BlockSpec((1, H, W, Cin), lambda n: (n, 0, 0, 0)),
                pl.BlockSpec((9 * Cin, Cout), lambda n: (0, 0)),
                pl.BlockSpec((9 * Cout, Cout), lambda n: (0, 0)),
                pl.BlockSpec((Cin, Cout), lambda n: (0, 0)),
                pl.BlockSpec((6, Cout), lambda n: (0, 0)),
            ],
            out_specs=pl.BlockSpec((1, H * W, Cout), lambda n: (n, 0, 0)),
            scratch_shapes=[
                pltpu.VMEM((H + 2, W + 2, Cin), jnp.float32),
                pltpu.VMEM((H + 2, W + 2, Cout), jnp.float32),
                pltpu.VMEM((H * W, 9 * Cout), jnp.float32),
            ],
        ),
        compiler_params=pltpu.CompilerParams(
            dimension_semantics=("parallel",)),
    )(x, w1f, w2f, wsc, bn)

    out = out.reshape(N, H, W, Cout)
    return jnp.transpose(out, (0, 3, 1, 2))             # NHWC -> NCHW, f32


# ---------------------------------------------------------------------------
# Parameters (eval-mode BatchNorm folded to scale/bias)
# ---------------------------------------------------------------------------

def _fold_bn(gamma, beta, mean, var, eps=1e-5):
    scale = gamma / jnp.sqrt(var + eps)
    bias = beta - mean * scale
    return scale, bias


def make_stem_params(key, in_chans, out_chans):
    ks = jax.random.split(key, 6)
    p = {}
    p["w1"] = jax.random.normal(ks[0], (3, 3, in_chans, out_chans),
                                jnp.float32) * 0.1
    p["w2"] = jax.random.normal(ks[1], (3, 3, out_chans, out_chans),
                                jnp.float32) * 0.05
    p["w_sc"] = jax.random.normal(ks[2], (in_chans, out_chans),
                                  jnp.float32) * 0.1

    def bn(kk, c):
        gamma = 1.0 + 0.1 * jax.random.normal(kk[0], (c,), jnp.float32)
        beta = 0.1 * jax.random.normal(kk[1], (c,), jnp.float32)
        mean = 0.05 * jax.random.normal(kk[2], (c,), jnp.float32)
        var = jnp.abs(1.0 + 0.1 * jax.random.normal(kk[3], (c,), jnp.float32))
        return _fold_bn(gamma, beta, mean, var)

    p["bn1_scale"], p["bn1_bias"] = bn(jax.random.split(ks[3], 4), out_chans)
    p["bn2_scale"], p["bn2_bias"] = bn(jax.random.split(ks[4], 4), out_chans)
    p["bnS_scale"], p["bnS_bias"] = bn(jax.random.split(ks[5], 4), out_chans)
    return p


# ---------------------------------------------------------------------------
# Pure-JAX reference (mirrors the kernel's bf16 operand rounding)
# ---------------------------------------------------------------------------

def _ref_conv3x3(x, w):
    """x: (N,H,W,Cin) f32, w: (3,3,Cin,Cout) f32 -> (N,H,W,Cout) f32."""
    N, H, W, _ = x.shape
    xp = jnp.pad(x, ((0, 0), (1, 1), (1, 1), (0, 0)))
    out = jnp.zeros((N, H, W, w.shape[-1]), jnp.float32)
    for dy in range(3):
        for dx in range(3):
            out = out + jnp.einsum(
                "nhwc,cd->nhwd", xp[:, dy:dy + H, dx:dx + W, :], w[dy, dx],
                precision=jax.lax.Precision.HIGHEST)
    return out


def stem_reference(params, x_nchw):
    bf = lambda a: a.astype(jnp.bfloat16).astype(jnp.float32)
    x = bf(jnp.transpose(x_nchw, (0, 2, 3, 1)))
    o = _ref_conv3x3(x, bf(params["w1"]))
    o = jnp.maximum(o * params["bn1_scale"] + params["bn1_bias"], 0.0)
    o = _ref_conv3x3(bf(o), bf(params["w2"]))
    o = jnp.maximum(o * params["bn2_scale"] + params["bn2_bias"], 0.0)
    sc = jnp.einsum("nhwc,cd->nhwd", x, bf(params["w_sc"]),
                    precision=jax.lax.Precision.HIGHEST)
    sc = jnp.maximum(sc * params["bnS_scale"] + params["bnS_bias"], 0.0)
    return jnp.transpose(o + sc, (0, 3, 1, 2))


if __name__ == "__main__":
    key = jax.random.PRNGKey(0)
    k_x, k_p = jax.random.split(key)

    N, Cin, H, W = 2, 4, 16, 16      # NCHW, as in the PyTorch module
    Cout = 32
    x = jax.random.normal(k_x, (N, Cin, H, W), jnp.float32)
    params = make_stem_params(k_p, Cin, Cout)

    y = stem_forward(params, x)
    y = jax.block_until_ready(y)

    y_ref = stem_reference(params, x)
    assert y.shape == (N, Cout, H, W)
    max_err = float(jnp.max(jnp.abs(y - y_ref)))
    assert jnp.allclose(y, y_ref, atol=2e-3, rtol=2e-3), max_err

    print("KERNEL_OK")
</pallas_src>

<mosaic_0001>
module attributes {stable_mosaic.version = 11 : i64} {
  func.func @_stem_fused_kernel(%arg0: i32, %arg1: memref<1x16x16x4xbf16, #tpu.memory_space<vmem>>, %arg2: memref<36x32xbf16, #tpu.memory_space<vmem>>, %arg3: memref<288x32xbf16, #tpu.memory_space<vmem>>, %arg4: memref<4x32xbf16, #tpu.memory_space<vmem>>, %arg5: memref<6x32xf32, #tpu.memory_space<vmem>>, %arg6: memref<1x256x32xf32, #tpu.memory_space<vmem>>, %arg7: memref<18x18x4xf32, #tpu.memory_space<vmem>>, %arg8: memref<18x18x32xf32, #tpu.memory_space<vmem>>, %arg9: memref<256x288xf32, #tpu.memory_space<vmem>>) attributes {dimension_semantics = [#tpu.dimension_semantics<parallel>], iteration_bounds = array<i64: 2>, scalar_prefetch = 0 : i64, scratch_operands = 3 : i64, tpu.core_type = #tpu.core_type<tc>, window_params = [{transform_indices = @transform_0, window_bounds = array<i64: 1, 16, 16, 4>}, {pipeline_mode = #tpu.pipeline_mode<synchronous>, transform_indices = @transform_1, window_bounds = array<i64: 36, 32>}, {pipeline_mode = #tpu.pipeline_mode<synchronous>, transform_indices = @transform_2, window_bounds = array<i64: 288, 32>}, {pipeline_mode = #tpu.pipeline_mode<synchronous>, transform_indices = @transform_3, window_bounds = array<i64: 4, 32>}, {pipeline_mode = #tpu.pipeline_mode<synchronous>, transform_indices = @transform_4, window_bounds = array<i64: 6, 32>}, {transform_indices = @transform_5, window_bounds = array<i64: 1, 256, 32>}]} {
    %cst = arith.constant 0.000000e+00 : f32
    %0 = vector.broadcast %cst : f32 to vector<18x18x4xf32>
    %c0 = arith.constant 0 : index
    %c0_0 = arith.constant 0 : index
    %c0_1 = arith.constant 0 : index
    %1 = vector.load %arg7[%c0, %c0_0, %c0_1] : memref<18x18x4xf32, #tpu.memory_space<vmem>>, vector<18x18x4xf32>
    tpu.vector_store %arg7[%c0, %c0_0, %c0_1], %0 {strides = array<i32>} : memref<18x18x4xf32, #tpu.memory_space<vmem>>, vector<18x18x4xf32>,
    %c0_2 = arith.constant 0 : index
    %c0_3 = arith.constant 0 : index
    %c0_4 = arith.constant 0 : index
    %c0_5 = arith.constant 0 : index
    %2 = vector.load %arg1[%c0_2, %c0_3, %c0_4, %c0_5] : memref<1x16x16x4xbf16, #tpu.memory_space<vmem>>, vector<1x16x16x4xbf16>
    %3 = vector.shape_cast %2 : vector<1x16x16x4xbf16> to vector<16x16x4xbf16>
    %4 = arith.extf %3 : vector<16x16x4xbf16> to vector<16x16x4xf32>
    %c1 = arith.constant 1 : index
    %c1_6 = arith.constant 1 : index
    %c0_7 = arith.constant 0 : index
    %5 = vector.load %arg7[%c1, %c1_6, %c0_7] : memref<18x18x4xf32, #tpu.memory_space<vmem>>, vector<16x16x4xf32>
    tpu.vector_store %arg7[%c1, %c1_6, %c0_7], %4 {strides = array<i32>} : memref<18x18x4xf32, #tpu.memory_space<vmem>>, vector<16x16x4xf32>,
    %c0_8 = arith.constant 0 : index
    %c0_9 = arith.constant 0 : index
    %c0_10 = arith.constant 0 : index
    %6 = vector.load %arg7[%c0_8, %c0_9, %c0_10] : memref<18x18x4xf32, #tpu.memory_space<vmem>>, vector<18x18x4xf32>
    %7 = vector.extract_strided_slice %6 {offsets = [0, 0, 0], sizes = [16, 16, 4], strides = [1, 1, 1]} : vector<18x18x4xf32> to vector<16x16x4xf32>
    %8 = vector.shape_cast %7 : vector<16x16x4xf32> to vector<256x4xf32>
    %c0_11 = arith.constant 0 : index
    %c0_12 = arith.constant 0 : index
    %9 = vector.load %arg9[%c0_11, %c0_12] : memref<256x288xf32, #tpu.memory_space<vmem>>, vector<256x4xf32>
    tpu.vector_store %arg9[%c0_11, %c0_12], %8 {strides = array<i32>} : memref<256x288xf32, #tpu.memory_space<vmem>>, vector<256x4xf32>,
    %10 = vector.extract_strided_slice %6 {offsets = [0, 1, 0], sizes = [16, 16, 4], strides = [1, 1, 1]} : vector<18x18x4xf32> to vector<16x16x4xf32>
    %11 = vector.shape_cast %10 : vector<16x16x4xf32> to vector<256x4xf32>
    %c0_13 = arith.constant 0 : index
    %c4 = arith.constant 4 : index
    %12 = vector.load %arg9[%c0_13, %c4] : memref<256x288xf32, #tpu.memory_space<vmem>>, vector<256x4xf32>
    tpu.vector_store %arg9[%c0_13, %c4], %11 {strides = array<i32>} : memref<256x288xf32, #tpu.memory_space<vmem>>, vector<256x4xf32>,
    %13 = vector.extract_strided_slice %6 {offsets = [0, 2, 0], sizes = [16, 16, 4], strides = [1, 1, 1]} : vector<18x18x4xf32> to vector<16x16x4xf32>
    %14 = vector.shape_cast %13 : vector<16x16x4xf32> to vector<256x4xf32>
    %c0_14 = arith.constant 0 : index
    %c8 = arith.constant 8 : index
    %15 = vector.load %arg9[%c0_14, %c8] : memref<256x288xf32, #tpu.memory_space<vmem>>, vector<256x4xf32>
    tpu.vector_store %arg9[%c0_14, %c8], %14 {strides = array<i32>} : memref<256x288xf32, #tpu.memory_space<vmem>>, vector<256x4xf32>,
    %16 = vector.extract_strided_slice %6 {offsets = [1, 0, 0], sizes = [16, 16, 4], strides = [1, 1, 1]} : vector<18x18x4xf32> to vector<16x16x4xf32>
    %17 = vector.shape_cast %16 : vector<16x16x4xf32> to vector<256x4xf32>
    %c0_15 = arith.constant 0 : index
    %c12 = arith.constant 12 : index
    %18 = vector.load %arg9[%c0_15, %c12] : memref<256x288xf32, #tpu.memory_space<vmem>>, vector<256x4xf32>
    tpu.vector_store %arg9[%c0_15, %c12], %17 {strides = array<i32>} : memref<256x288xf32, #tpu.memory_space<vmem>>, vector<256x4xf32>,
    %19 = vector.extract_strided_slice %6 {offsets = [1, 1, 0], sizes = [16, 16, 4], strides = [1, 1, 1]} : vector<18x18x4xf32> to vector<16x16x4xf32>
    %20 = vector.shape_cast %19 : vector<16x16x4xf32> to vector<256x4xf32>
    %c0_16 = arith.constant 0 : index
    %c16 = arith.constant 16 : index
    %21 = vector.load %arg9[%c0_16, %c16] : memref<256x288xf32, #tpu.memory_space<vmem>>, vector<256x4xf32>
    tpu.vector_store %arg9[%c0_16, %c16], %20 {strides = array<i32>} : memref<256x288xf32, #tpu.memory_space<vmem>>, vector<256x4xf32>,
    %22 = vector.extract_strided_slice %6 {offsets = [1, 2, 0], sizes = [16, 16, 4], strides = [1, 1, 1]} : vector<18x18x4xf32> to vector<16x16x4xf32>
    %23 = vector.shape_cast %22 : vector<16x16x4xf32> to vector<256x4xf32>
    %c0_17 = arith.constant 0 : index
    %c20 = arith.constant 20 : index
    %24 = vector.load %arg9[%c0_17, %c20] : memref<256x288xf32, #tpu.memory_space<vmem>>, vector<256x4xf32>
    tpu.vector_store %arg9[%c0_17, %c20], %23 {strides = array<i32>} : memref<256x288xf32, #tpu.memory_space<vmem>>, vector<256x4xf32>,
    %25 = vector.extract_strided_slice %6 {offsets = [2, 0, 0], sizes = [16, 16, 4], strides = [1, 1, 1]} : vector<18x18x4xf32> to vector<16x16x4xf32>
    %26 = vector.shape_cast %25 : vector<16x16x4xf32> to vector<256x4xf32>
    %c0_18 = arith.constant 0 : index
    %c24 = arith.constant 24 : index
    %27 = vector.load %arg9[%c0_18, %c24] : memref<256x288xf32, #tpu.memory_space<vmem>>, vector<256x4xf32>
    tpu.vector_store %arg9[%c0_18, %c24], %26 {strides = array<i32>} : memref<256x288xf32, #tpu.memory_space<vmem>>, vector<256x4xf32>,
    %28 = vector.extract_strided_slice %6 {offsets = [2, 1, 0], sizes = [16, 16, 4], strides = [1, 1, 1]} : vector<18x18x4xf32> to vector<16x16x4xf32>
    %29 = vector.shape_cast %28 : vector<16x16x4xf32> to vector<256x4xf32>
    %c0_19 = arith.constant 0 : index
    %c28 = arith.constant 28 : index
    %30 = vector.load %arg9[%c0_19, %c28] : memref<256x288xf32, #tpu.memory_space<vmem>>, vector<256x4xf32>
    tpu.vector_store %arg9[%c0_19, %c28], %29 {strides = array<i32>} : memref<256x288xf32, #tpu.memory_space<vmem>>, vector<256x4xf32>,
    %31 = vector.extract_strided_slice %6 {offsets = [2, 2, 0], sizes = [16, 16, 4], strides = [1, 1, 1]} : vector<18x18x4xf32> to vector<16x16x4xf32>
    %32 = vector.shape_cast %31 : vector<16x16x4xf32> to vector<256x4xf32>
    %c0_20 = arith.constant 0 : index
    %c32 = arith.constant 32 : index
    %33 = vector.load %arg9[%c0_20, %c32] : memref<256x288xf32, #tpu.memory_space<vmem>>, vector<256x4xf32>
    tpu.vector_store %arg9[%c0_20, %c32], %32 {strides = array<i32>} : memref<256x288xf32, #tpu.memory_space<vmem>>, vector<256x4xf32>,
    %c0_21 = arith.constant 0 : index
    %c0_22 = arith.constant 0 : index
    %34 = vector.load %arg9[%c0_21, %c0_22] : memref<256x288xf32, #tpu.memory_space<vmem>>, vector<256x36xf32>
    %35 = arith.truncf %34 : vector<256x36xf32> to vector<256x36xbf16>
    %c0_23 = arith.constant 0 : index
    %c0_24 = arith.constant 0 : index
    %36 = vector.load %arg2[%c0_23, %c0_24] : memref<36x32xbf16, #tpu.memory_space<vmem>>, vector<36x32xbf16>
    %cst_25 = arith.constant dense<0.000000e+00> : vector<256x32xf32>
    %37 = tpu.matmul %35, %36, %cst_25 {dimension_numbers = #tpu.dot_dimension_numbers<[1], [0], [0], [1], [0, 0, 1, 1], [], []>} : vector<256x36xbf16>, vector<36x32xbf16>, vector<256x32xf32> -> vector<256x32xf32>
    %c0_26 = arith.constant 0 : index
    %c0_27 = arith.constant 0 : index
    %38 = vector.load %arg5[%c0_26, %c0_27] : memref<6x32xf32, #tpu.memory_space<vmem>>, vector<1x32xf32>
    %39 = vector.shape_cast %38 : vector<1x32xf32> to vector<32xf32>
    %40 = vector.shape_cast %39 : vector<32xf32> to vector<1x32xf32>
    %41 = vector.broadcast %40 : vector<1x32xf32> to vector<256x32xf32>
    %42 = arith.mulf %37, %41 : vector<256x32xf32>
    %c1_28 = arith.constant 1 : index
    %c0_29 = arith.constant 0 : index
    %43 = vector.load %arg5[%c1_28, %c0_29] : memref<6x32xf32, #tpu.memory_space<vmem>>, vector<1x32xf32>
    %44 = vector.shape_cast %43 : vector<1x32xf32> to vector<32xf32>
    %45 = vector.shape_cast %44 : vector<32xf32> to vector<1x32xf32>
    %46 = vector.broadcast %45 : vector<1x32xf32> to vector<256x32xf32>
    %47 = arith.addf %42, %46 : vector<256x32xf32>
    %cst_30 = arith.constant 0.000000e+00 : f32
    %48 = vector.broadcast %cst_30 : f32 to vector<256x32xf32>
    %49 = arith.maximumf %47, %48 : vector<256x32xf32>
    %50 = vector.extract_strided_slice %6 {offsets = [1, 1, 0], sizes = [16, 16, 4], strides = [1, 1, 1]} : vector<18x18x4xf32> to vector<16x16x4xf32>
    %51 = vector.shape_cast %50 : vector<16x16x4xf32> to vector<256x4xf32>
    %52 = arith.truncf %51 : vector<256x4xf32> to vector<256x4xbf16>
    %c0_31 = arith.constant 0 : index
    %c0_32 = arith.constant 0 : index
    %53 = vector.load %arg4[%c0_31, %c0_32] : memref<4x32xbf16, #tpu.memory_space<vmem>>, vector<4x32xbf16>
    %cst_33 = arith.constant dense<0.000000e+00> : vector<256x32xf32>
    %54 = tpu.matmul %52, %53, %cst_33 {dimension_numbers = #tpu.dot_dimension_numbers<[1], [0], [0], [1], [0, 0, 1, 1], [], []>} : vector<256x4xbf16>, vector<4x32xbf16>, vector<256x32xf32> -> vector<256x32xf32>
    %c4_34 = arith.constant 4 : index
    %c0_35 = arith.constant 0 : index
    %55 = vector.load %arg5[%c4_34, %c0_35] : memref<6x32xf32, #tpu.memory_space<vmem>>, vector<1x32xf32>
    %56 = vector.shape_cast %55 : vector<1x32xf32> to vector<32xf32>
    %57 = vector.shape_cast %56 : vector<32xf32> to vector<1x32xf32>
    %58 = vector.broadcast %57 : vector<1x32xf32> to vector<256x32xf32>
    %59 = arith.mulf %54, %58 : vector<256x32xf32>
    %c5 = arith.constant 5 : index
    %c0_36 = arith.constant 0 : index
    %60 = vector.load %arg5[%c5, %c0_36] : memref<6x32xf32, #tpu.memory_space<vmem>>, vector<1x32xf32>
    %61 = vector.shape_cast %60 : vector<1x32xf32> to vector<32xf32>
    %62 = vector.shape_cast %61 : vector<32xf32> to vector<1x32xf32>
    %63 = vector.broadcast %62 : vector<1x32xf32> to vector<256x32xf32>
    %64 = arith.addf %59, %63 : vector<256x32xf32>
    %cst_37 = arith.constant 0.000000e+00 : f32
    %65 = vector.broadcast %cst_37 : f32 to vector<256x32xf32>
    %66 = arith.maximumf %64, %65 : vector<256x32xf32>
    %cst_38 = arith.constant 0.000000e+00 : f32
    %67 = vector.broadcast %cst_38 : f32 to vector<18x18x32xf32>
    %c0_39 = arith.constant 0 : index
    %c0_40 = arith.constant 0 : index
    %c0_41 = arith.constant 0 : index
    %68 = vector.load %arg8[%c0_39, %c0_40, %c0_41] : memref<18x18x32xf32, #tpu.memory_space<vmem>>, vector<18x18x32xf32>
    tpu.vector_store %arg8[%c0_39, %c0_40, %c0_41], %67 {strides = array<i32>} : memref<18x18x32xf32, #tpu.memory_space<vmem>>, vector<18x18x32xf32>,
    %69 = vector.shape_cast %49 : vector<256x32xf32> to vector<16x16x32xf32>
    %c1_42 = arith.constant 1 : index
    %c1_43 = arith.constant 1 : index
    %c0_44 = arith.constant 0 : index
    %70 = vector.load %arg8[%c1_42, %c1_43, %c0_44] : memref<18x18x32xf32, #tpu.memory_space<vmem>>, vector<16x16x32xf32>
    tpu.vector_store %arg8[%c1_42, %c1_43, %c0_44], %69 {strides = array<i32>} : memref<18x18x32xf32, #tpu.memory_space<vmem>>, vector<16x16x32xf32>,
    %c0_45 = arith.constant 0 : index
    %c0_46 = arith.constant 0 : index
    %c0_47 = arith.constant 0 : index
    %71 = vector.load %arg8[%c0_45, %c0_46, %c0_47] : memref<18x18x32xf32, #tpu.memory_space<vmem>>, vector<18x18x32xf32>
    %72 = vector.extract_strided_slice %71 {offsets = [0, 0, 0], sizes = [16, 16, 32], strides = [1, 1, 1]} : vector<18x18x32xf32> to vector<16x16x32xf32>
    %73 = vector.shape_cast %72 : vector<16x16x32xf32> to vector<256x32xf32>
    %c0_48 = arith.constant 0 : index
    %c0_49 = arith.constant 0 : index
    %74 = vector.load %arg9[%c0_48, %c0_49] : memref<256x288xf32, #tpu.memory_space<vmem>>, vector<256x32xf32>
    tpu.vector_store %arg9[%c0_48, %c0_49], %73 {strides = array<i32>} : memref<256x288xf32, #tpu.memory_space<vmem>>, vector<256x32xf32>,
    %75 = vector.extract_strided_slice %71 {offsets = [0, 1, 0], sizes = [16, 16, 32], strides = [1, 1, 1]} : vector<18x18x32xf32> to vector<16x16x32xf32>
    %76 = vector.shape_cast %75 : vector<16x16x32xf32> to vector<256x32xf32>
    %c0_50 = arith.constant 0 : index
    %c32_51 = arith.constant 32 : index
    %77 = vector.load %arg9[%c0_50, %c32_51] : memref<256x288xf32, #tpu.memory_space<vmem>>, vector<256x32xf32>
    tpu.vector_store %arg9[%c0_50, %c32_51], %76 {strides = array<i32>} : memref<256x288xf32, #tpu.memory_space<vmem>>, vector<256x32xf32>,
    %78 = vector.extract_strided_slice %71 {offsets = [0, 2, 0], sizes = [16, 16, 32], strides = [1, 1, 1]} : vector<18x18x32xf32> to vector<16x16x32xf32>
    %79 = vector.shape_cast %78 : vector<16x16x32xf32> to vector<256x32xf32>
    %c0_52 = arith.constant 0 : index
    %c64 = arith.constant 64 : index
    %80 = vector.load %arg9[%c0_52, %c64] : memref<256x288xf32, #tpu.memory_space<vmem>>, vector<256x32xf32>
    tpu.vector_store %arg9[%c0_52, %c64], %79 {strides = array<i32>} : memref<256x288xf32, #tpu.memory_space<vmem>>, vector<256x32xf32>,
    %81 = vector.extract_strided_slice %71 {offsets = [1, 0, 0], sizes = [16, 16, 32], strides = [1, 1, 1]} : vector<18x18x32xf32> to vector<16x16x32xf32>
    %82 = vector.shape_cast %81 : vector<16x16x32xf32> to vector<256x32xf32>
    %c0_53 = arith.constant 0 : index
    %c96 = arith.constant 96 : index
    %83 = vector.load %arg9[%c0_53, %c96] : memref<256x288xf32, #tpu.memory_space<vmem>>, vector<256x32xf32>
    tpu.vector_store %arg9[%c0_53, %c96], %82 {strides = array<i32>} : memref<256x288xf32, #tpu.memory_space<vmem>>, vector<256x32xf32>,
    %84 = vector.extract_strided_slice %71 {offsets = [1, 1, 0], sizes = [16, 16, 32], strides = [1, 1, 1]} : vector<18x18x32xf32> to vector<16x16x32xf32>
    %85 = vector.shape_cast %84 : vector<16x16x32xf32> to vector<256x32xf32>
    %c0_54 = arith.constant 0 : index
    %c128 = arith.constant 128 : index
    %86 = vector.load %arg9[%c0_54, %c128] : memref<256x288xf32, #tpu.memory_space<vmem>>, vector<256x32xf32>
    tpu.vector_store %arg9[%c0_54, %c128], %85 {strides = array<i32>} : memref<256x288xf32, #tpu.memory_space<vmem>>, vector<256x32xf32>,
    %87 = vector.extract_strided_slice %71 {offsets = [1, 2, 0], sizes = [16, 16, 32], strides = [1, 1, 1]} : vector<18x18x32xf32> to vector<16x16x32xf32>
    %88 = vector.shape_cast %87 : vector<16x16x32xf32> to vector<256x32xf32>
    %c0_55 = arith.constant 0 : index
    %c160 = arith.constant 160 : index
    %89 = vector.load %arg9[%c0_55, %c160] : memref<256x288xf32, #tpu.memory_space<vmem>>, vector<256x32xf32>
    tpu.vector_store %arg9[%c0_55, %c160], %88 {strides = array<i32>} : memref<256x288xf32, #tpu.memory_space<vmem>>, vector<256x32xf32>,
    %90 = vector.extract_strided_slice %71 {offsets = [2, 0, 0], sizes = [16, 16, 32], strides = [1, 1, 1]} : vector<18x18x32xf32> to vector<16x16x32xf32>
    %91 = vector.shape_cast %90 : vector<16x16x32xf32> to vector<256x32xf32>
    %c0_56 = arith.constant 0 : index
    %c192 = arith.constant 192 : index
    %92 = vector.load %arg9[%c0_56, %c192] : memref<256x288xf32, #tpu.memory_space<vmem>>, vector<256x32xf32>
    tpu.vector_store %arg9[%c0_56, %c192], %91 {strides = array<i32>} : memref<256x288xf32, #tpu.memory_space<vmem>>, vector<256x32xf32>,
    %93 = vector.extract_strided_slice %71 {offsets = [2, 1, 0], sizes = [16, 16, 32], strides = [1, 1, 1]} : vector<18x18x32xf32> to vector<16x16x32xf32>
    %94 = vector.shape_cast %93 : vector<16x16x32xf32> to vector<256x32xf32>
    %c0_57 = arith.constant 0 : index
    %c224 = arith.constant 224 : index
    %95 = vector.load %arg9[%c0_57, %c224] : memref<256x288xf32, #tpu.memory_space<vmem>>, vector<256x32xf32>
    tpu.vector_store %arg9[%c0_57, %c224], %94 {strides = array<i32>} : memref<256x288xf32, #tpu.memory_space<vmem>>, vector<256x32xf32>,
    %96 = vector.extract_strided_slice %71 {offsets = [2, 2, 0], sizes = [16, 16, 32], strides = [1, 1, 1]} : vector<18x18x32xf32> to vector<16x16x32xf32>
    %97 = vector.shape_cast %96 : vector<16x16x32xf32> to vector<256x32xf32>
    %c0_58 = arith.constant 0 : index
    %c256 = arith.constant 256 : index
    %98 = vector.load %arg9[%c0_58, %c256] : memref<256x288xf32, #tpu.memory_space<vmem>>, vector<256x32xf32>
    tpu.vector_store %arg9[%c0_58, %c256], %97 {strides = array<i32>} : memref<256x288xf32, #tpu.memory_space<vmem>>, vector<256x32xf32>,
    %c0_59 = arith.constant 0 : index
    %c0_60 = arith.constant 0 : index
    %99 = vector.load %arg9[%c0_59, %c0_60] : memref<256x288xf32, #tpu.memory_space<vmem>>, vector<256x288xf32>
    %100 = arith.truncf %99 : vector<256x288xf32> to vector<256x288xbf16>
    %c0_61 = arith.constant 0 : index
    %c0_62 = arith.constant 0 : index
    %101 = vector.load %arg3[%c0_61, %c0_62] : memref<288x32xbf16, #tpu.memory_space<vmem>>, vector<288x32xbf16>
    %cst_63 = arith.constant dense<0.000000e+00> : vector<256x32xf32>
    %102 = tpu.matmul %100, %101, %cst_63 {dimension_numbers = #tpu.dot_dimension_numbers<[1], [0], [0], [1], [0, 0, 1, 1], [], []>} : vector<256x288xbf16>, vector<288x32xbf16>, vector<256x32xf32> -> vector<256x32xf32>
    %c2 = arith.constant 2 : index
    %c0_64 = arith.constant 0 : index
    %103 = vector.load %arg5[%c2, %c0_64] : memref<6x32xf32, #tpu.memory_space<vmem>>, vector<1x32xf32>
    %104 = vector.shape_cast %103 : vector<1x32xf32> to vector<32xf32>
    %105 = vector.shape_cast %104 : vector<32xf32> to vector<1x32xf32>
    %106 = vector.broadcast %105 : vector<1x32xf32> to vector<256x32xf32>
    %107 = arith.mulf %102, %106 : vector<256x32xf32>
    %c3 = arith.constant 3 : index
    %c0_65 = arith.constant 0 : index
    %108 = vector.load %arg5[%c3, %c0_65] : memref<6x32xf32, #tpu.memory_space<vmem>>, vector<1x32xf32>
    %109 = vector.shape_cast %108 : vector<1x32xf32> to vector<32xf32>
    %110 = vector.shape_cast %109 : vector<32xf32> to vector<1x32xf32>
    %111 = vector.broadcast %110 : vector<1x32xf32> to vector<256x32xf32>
    %112 = arith.addf %107, %111 : vector<256x32xf32>
    %cst_66 = arith.constant 0.000000e+00 : f32
    %113 = vector.broadcast %cst_66 : f32 to vector<256x32xf32>
    %114 = arith.maximumf %112, %113 : vector<256x32xf32>
    %115 = arith.addf %114, %66 : vector<256x32xf32>
    %c0_67 = arith.constant 0 : index
    %c0_68 = arith.constant 0 : index
    %c0_69 = arith.constant 0 : index
    %116 = vector.load %arg6[%c0_67, %c0_68, %c0_69] : memref<1x256x32xf32, #tpu.memory_space<vmem>>, vector<1x256x32xf32>
    %117 = vector.shape_cast %116 : vector<1x256x32xf32> to vector<256x32xf32>
    %118 = vector.shape_cast %115 : vector<256x32xf32> to vector<1x256x32xf32>
    tpu.vector_store %arg6[%c0_67, %c0_68, %c0_69], %118 {strides = array<i32>} : memref<1x256x32xf32, #tpu.memory_space<vmem>>, vector<1x256x32xf32>,
    return
  }
  func.func @transform_0(%arg0: i32) -> (i32, i32, i32, i32) {
    %c0_i32 = arith.constant 0 : i32
    %c0_i32_0 = arith.constant 0 : i32
    %c0_i32_1 = arith.constant 0 : i32
    %c0_i32_2 = arith.constant 0 : i32
    return %arg0, %c0_i32, %c0_i32_0, %c0_i32_1 : i32, i32, i32, i32
  }
  func.func @transform_1(%arg0: i32) -> (i32, i32) {
    %c0_i32 = arith.constant 0 : i32
    %c0_i32_0 = arith.constant 0 : i32
    %c0_i32_1 = arith.constant 0 : i32
    return %c0_i32, %c0_i32_0 : i32, i32
  }
  func.func @transform_2(%arg0: i32) -> (i32, i32) {
    %c0_i32 = arith.constant 0 : i32
    %c0_i32_0 = arith.constant 0 : i32
    %c0_i32_1 = arith.constant 0 : i32
    return %c0_i32, %c0_i32_0 : i32, i32
  }
  func.func @transform_3(%arg0: i32) -> (i32, i32) {
    %c0_i32 = arith.constant 0 : i32
    %c0_i32_0 = arith.constant 0 : i32
    %c0_i32_1 = arith.constant 0 : i32
    return %c0_i32, %c0_i32_0 : i32, i32
  }
  func.func @transform_4(%arg0: i32) -> (i32, i32) {
    %c0_i32 = arith.constant 0 : i32
    %c0_i32_0 = arith.constant 0 : i32
    %c0_i32_1 = arith.constant 0 : i32
    return %c0_i32, %c0_i32_0 : i32, i32
  }
  func.func @transform_5(%arg0: i32) -> (i32, i32, i32) {
    %c0_i32 = arith.constant 0 : i32
    %c0_i32_0 = arith.constant 0 : i32
    %c0_i32_1 = arith.constant 0 : i32
    return %arg0, %c0_i32, %c0_i32_0 : i32, i32, i32
  }
}

</mosaic_0001>

<llo_original>
// kernel: tpu_custom_call.1
$region0: #{tpu_custom_call.1}
  #allocation0 [shape = 'u32[]', space=smem, size = 0x4, offset = 0x4, fixed_abs, tag = 'smem constant byte address 0x4 - core index']
  #allocation1 [shape = 'u32[144,128]{1,0:T(1,128)}', space=vmem, size = 0x12000, scoped, tag = 'internal scratch']
  #allocation2 [shape = 'f32[18,18,4]{2,1,0:T(8,128)}', space=vmem, size = 0x36000, scoped, tag = 'scratch operand']
  #allocation3 [shape = 'f32[18,18,32]{2,1,0:T(8,128)}', space=vmem, size = 0x36000, scoped, tag = 'scratch operand']
  #allocation4 [shape = 'f32[256,288]{1,0:T(8,128)}', space=vmem, size = 0x60000, scoped, tag = 'scratch operand']
  %s0 = inlined_call_operand.vmem [shape: bf16[2,16,16,4], index: 0, kind: input, shape index: {}]
  %s1 = inlined_call_operand.vmem [shape: bf16[36,32], index: 1, kind: input, shape index: {}]
  %s2 = inlined_call_operand.vmem [shape: bf16[288,32], index: 2, kind: input, shape index: {}]
  %s3 = inlined_call_operand.vmem [shape: bf16[4,32], index: 3, kind: input, shape index: {}]
  %s4 = inlined_call_operand.vmem [shape: f32[6,32], index: 4, kind: input, shape index: {}]
  %s5 = inlined_call_operand.vmem [shape: f32[2,256,32], index: 5, kind: output, shape index: {}]
  %s6 = sld [smem:[#allocation0]]
  $region53: #{tpu_custom_call.1} parent=0
    _
  %s8 = ssub.s32 1, %s6
  %s9 = scalar_select 0, %s8, %s6
  loop: start=0, step=1, limit=4
  $region2: #{tpu_custom_call.1} parent=0 // loop_pre_header
    _
  $region3: #{tpu_custom_call.1} parent=0 // loop_header
    %s11 = sphi 0, %s15
    %p12 = scmp.ge.s32.totalorder %s11, 4
    %s21 = sphi 0, %s23
    %s24 = sphi 0, %s21
    %s25 = sphi 0, %s24
    %s41 = sphi 0, %s25
    %s45 = sphi 0, %s45
    %s47 = sphi 0, %s45
    %s48 = sphi 0, %s47
    %s62 = sphi 0, %s48
    %s66 = sphi 0, %s66
    %s68 = sphi 0, %s66
    %s69 = sphi 0, %s68
    %s83 = sphi 0, %s69
    %s87 = sphi 0, %s87
    %s89 = sphi 0, %s87
    %s90 = sphi 0, %s89
    %s104 = sphi 0, %s90
    %s108 = sphi 0, %s108
    %s110 = sphi 0, %s108
    %s111 = sphi 0, %s110
    %s125 = sphi 0, %s111
    %s131 = sphi 0, %s133
    %s134 = sphi 0, %s131
    %s135 = sphi 0, %s134
    %s151 = sphi 0, %s135
  $region4: #{tpu_custom_call.1} parent=0 // loop_header_branch
    %14 = sbr.rel (%p12) target = $region8
  $region5: #{tpu_custom_call.1} parent=0 // loop_body
    %s16 = ssub.s32 %s11, 1
    %s17 = ssub.s32 %s11, 2
    %s18 = sadd.s32 %s11, 1
    %s19 = ssub.s32 %s11, %s18
    %p20 = scmp.eq.s32.totalorder %s19, 0
    %s22 = sadd.s32 %s21, 1
    %s23 = scalar_select %p20, %s21, %s22
    %p26 = pneg %p20
    %p27 = scmp.eq.s32.totalorder %s11, 1
    %p28 = por %p26, %p27
    %p29 = scmp.ne.s32.totalorder %s21, %s24
    %p30 = scmp.eq.s32.totalorder %s11, 0
    %p31 = por %p29, %p30
    %p32 = scmp.ne.s32.totalorder %s21, %s24
    %p33 = scmp.eq.s32.totalorder %s16, 1
    %p34 = por %p32, %p33
    %p35 = scmp.ne.s32.totalorder %s24, %s25
    %p36 = scmp.eq.s32.totalorder %s16, 0
    %p37 = por %p35, %p36
    %p38 = scmp.ne.s32.totalorder %s24, %s25
    %p39 = scmp.eq.s32.totalorder %s17, 1
    %p40 = por %p38, %p39
    %p42 = scmp.ne.s32.totalorder %s25, %s41
    %p43 = scmp.eq.s32.totalorder %s17, 0
    %p44 = por %p42, %p43
    %s46 = sadd.s32 %s45, 1
    %p49 = scmp.eq.s32.totalorder %s11, 1
    %p50 = scmp.ne.s32.totalorder %s45, %s47
    %p51 = scmp.eq.s32.totalorder %s11, 0
    %p52 = por %p50, %p51
    %p53 = scmp.ne.s32.totalorder %s45, %s47
    %p54 = scmp.eq.s32.totalorder %s16, 1
    %p55 = por %p53, %p54
    %p56 = scmp.ne.s32.totalorder %s47, %s48
    %p57 = scmp.eq.s32.totalorder %s16, 0
    %p58 = por %p56, %p57
    %p59 = scmp.ne.s32.totalorder %s47, %s48
    %p60 = scmp.eq.s32.totalorder %s17, 1
    %p61 = por %p59, %p60
    %p63 = scmp.ne.s32.totalorder %s48, %s62
    %p64 = scmp.eq.s32.totalorder %s17, 0
    %p65 = por %p63, %p64
    %s67 = sadd.s32 %s66, 1
    %p70 = scmp.eq.s32.totalorder %s11, 1
    %p71 = scmp.ne.s32.totalorder %s66, %s68
    %p72 = scmp.eq.s32.totalorder %s11, 0
    %p73 = por %p71, %p72
    %p74 = scmp.ne.s32.totalorder %s66, %s68
    %p75 = scmp.eq.s32.totalorder %s16, 1
    %p76 = por %p74, %p75
    %p77 = scmp.ne.s32.totalorder %s68, %s69
    %p78 = scmp.eq.s32.totalorder %s16, 0
    %p79 = por %p77, %p78
    %p80 = scmp.ne.s32.totalorder %s68, %s69
    %p81 = scmp.eq.s32.totalorder %s17, 1
    %p82 = por %p80, %p81
    %p84 = scmp.ne.s32.totalorder %s69, %s83
    %p85 = scmp.eq.s32.totalorder %s17, 0
    %p86 = por %p84, %p85
    %s88 = sadd.s32 %s87, 1
    %p91 = scmp.eq.s32.totalorder %s11, 1
    %p92 = scmp.ne.s32.totalorder %s87, %s89
    %p93 = scmp.eq.s32.totalorder %s11, 0
    %p94 = por %p92, %p93
    %p95 = scmp.ne.s32.totalorder %s87, %s89
    %p96 = scmp.eq.s32.totalorder %s16, 1
    %p97 = por %p95, %p96
    %p98 = scmp.ne.s32.totalorder %s89, %s90
    %p99 = scmp.eq.s32.totalorder %s16, 0
    %p100 = por %p98, %p99
    %p101 = scmp.ne.s32.totalorder %s89, %s90
    %p102 = scmp.eq.s32.totalorder %s17, 1
    %p103 = por %p101, %p102
    %p105 = scmp.ne.s32.totalorder %s90, %s104
    %p106 = scmp.eq.s32.totalorder %s17, 0
    %p107 = por %p105, %p106
    %s109 = sadd.s32 %s108, 1
    %p112 = scmp.eq.s32.totalorder %s11, 1
    %p113 = scmp.ne.s32.totalorder %s108, %s110
    %p114 = scmp.eq.s32.totalorder %s11, 0
    %p115 = por %p113, %p114
    %p116 = scmp.ne.s32.totalorder %s108, %s110
    %p117 = scmp.eq.s32.totalorder %s16, 1
    %p118 = por %p116, %p117
    %p119 = scmp.ne.s32.totalorder %s110, %s111
    %p120 = scmp.eq.s32.totalorder %s16, 0
    %p121 = por %p119, %p120
    %p122 = scmp.ne.s32.totalorder %s110, %s111
    %p123 = scmp.eq.s32.totalorder %s17, 1
    %p124 = por %p122, %p123
    %p126 = scmp.ne.s32.totalorder %s111, %s125
    %p127 = scmp.eq.s32.totalorder %s17, 0
    %p128 = por %p126, %p127
    %s129 = ssub.s32 %s11, %s18
    %p130 = scmp.eq.s32.totalorder %s129, 0
    %s132 = sadd.s32 %s131, 1
    %s133 = scalar_select %p130, %s131, %s132
    %p136 = pneg %p130
    %p137 = scmp.eq.s32.totalorder %s11, 1
    %p138 = por %p136, %p137
    %p139 = scmp.ne.s32.totalorder %s131, %s134
    %p140 = scmp.eq.s32.totalorder %s11, 0
    %p141 = por %p139, %p140
    %p142 = scmp.ne.s32.totalorder %s131, %s134
    %p143 = scmp.eq.s32.totalorder %s16, 1
    %p144 = por %p142, %p143
    %p145 = scmp.ne.s32.totalorder %s134, %s135
    %p146 = scmp.eq.s32.totalorder %s16, 0
    %p147 = por %p145, %p146
    %p148 = scmp.ne.s32.totalorder %s134, %s135
    %p149 = scmp.eq.s32.totalorder %s17, 1
    %p150 = por %p148, %p149
    %p152 = scmp.ne.s32.totalorder %s135, %s151
    %p153 = scmp.eq.s32.totalorder %s17, 0
    %p154 = por %p152, %p153
    %p155 = scmp.le.s32.totalorder 1, %s11
    %p156 = scmp.lt.s32.totalorder %s11, 3
    %p157 = pnand %p155, %p156
    %p158 = pneg %p157
    // Predicated region
    $region9: #{tpu_custom_call.1} parent=5 // pred_check
      _
    $region10: #{tpu_custom_call.1} parent=5 // pred_check_branch
      %160 = sbr.rel (%p157) target = $region12
    $region11: #{tpu_custom_call.1} parent=5 // pred_region
      %s161 = ssub.s32 %s11, 1
      // Predicated region
      $region13: #{tpu_custom_call.1} parent=11 // pred_check
        %p162 = pneg %p58
      $region14: #{tpu_custom_call.1} parent=11 // pred_check_branch
        %164 = sbr.rel (%p162) target = $region16
      $region15: #{tpu_custom_call.1} parent=11 // pred_region
        _
      $region16: #{tpu_custom_call.1} parent=11 // pred_fallthru
        _
      // Predicated region
      $region17: #{tpu_custom_call.1} parent=11 // pred_check
        %p165 = pneg %p79
      $region18: #{tpu_custom_call.1} parent=11 // pred_check_branch
        %167 = sbr.rel (%p165) target = $region20
      $region19: #{tpu_custom_call.1} parent=11 // pred_region
        _
      $region20: #{tpu_custom_call.1} parent=11 // pred_fallthru
        _
      // Predicated region
      $region21: #{tpu_custom_call.1} parent=11 // pred_check
        %p168 = pneg %p100
      $region22: #{tpu_custom_call.1} parent=11 // pred_check_branch
        %170 = sbr.rel (%p168) target = $region24
      $region23: #{tpu_custom_call.1} parent=11 // pred_region
        _
      $region24: #{tpu_custom_call.1} parent=11 // pred_fallthru
        _
      // Predicated region
      $region25: #{tpu_custom_call.1} parent=11 // pred_check
        %p171 = pneg %p121
      $region26: #{tpu_custom_call.1} parent=11 // pred_check_branch
        %173 = sbr.rel (%p171) target = $region28
      $region27: #{tpu_custom_call.1} parent=11 // pred_region
        _
      $region28: #{tpu_custom_call.1} parent=11 // pred_fallthru
        _
    $region12: #{tpu_custom_call.1} parent=5 // pred_fallthru
      _
    %p174 = scmp.lt.s32.totalorder %s11, 2
    // Predicated region
    $region29: #{tpu_custom_call.1} parent=5 // pred_check
      %p175 = pneg %p174
    $region30: #{tpu_custom_call.1} parent=5 // pred_check_branch
      %177 = sbr.rel (%p175) target = $region32
    $region31: #{tpu_custom_call.1} parent=5 // pred_region
      // Predicated region
      $region33: #{tpu_custom_call.1} parent=31 // pred_check
        %p178 = pneg %p31
      $region34: #{tpu_custom_call.1} parent=31 // pred_check_branch
        %180 = sbr.rel (%p178) target = $region36
      $region35: #{tpu_custom_call.1} parent=31 // pred_region
        %p181 = scmp.lt.s32.totalorder %s11, 1
        %s182 = scalar_select %p181, %s11, 1
        %s183 = smul.addr %s182, 32
        %s184 = smul.addr %s183, 4
        %s185 = scalar_lea.vmem %s0, %s184
      $region36: #{tpu_custom_call.1} parent=31 // pred_fallthru
        _
    $region32: #{tpu_custom_call.1} parent=5 // pred_fallthru
      _
    %p186 = scmp.le.s32.totalorder 1, %s11
    %p187 = scmp.lt.s32.totalorder %s11, 3
    %p188 = pnand %p186, %p187
    %p189 = pneg %p188
    // Predicated region
    $region37: #{tpu_custom_call.1} parent=5 // pred_check
      _
    $region38: #{tpu_custom_call.1} parent=5 // pred_check_branch
      %191 = sbr.rel (%p188) target = $region40
    $region39: #{tpu_custom_call.1} parent=5 // pred_region
      %s192 = ssub.s32 %s11, 1
      %p193 = scmp.lt.s32.totalorder %s16, 1
      %s194 = scalar_select %p193, %s16, 1
      %s195 = smul.addr %s194, 32
      %s196 = smul.addr %s195, 4
      %s197 = scalar_lea.vmem %s0, %s196
      %p198 = pneg %p37
      %p199 = pneg %p34
      %p200 = pneg %p58
      %p201 = pneg %p55
      %p202 = pneg %p79
      %p203 = pneg %p76
      %p204 = pneg %p100
      %p205 = pneg %p97
      %p206 = pneg %p121
      %p207 = pneg %p118
      %p208 = pneg %p147
      %p209 = pneg %p144
      %p210 = scmp.lt.s32.totalorder %s16, 1
      %s211 = scalar_select %p210, %s16, 1
      %s212 = smul.addr %s211, 32
      %s213 = smul.addr %s212, 8
      %s214 = scalar_lea.vmem %s5, %s213
      %p215 = scmp.lt.s32.totalorder %s16, 1
      %s216 = scalar_select %p215, %s16, 1
      %s217 = smul.addr %s216, 32
      %s218 = smul.addr %s217, 4
      %s219 = scalar_lea.vmem %s0, %s218
      %p220 = scmp.lt.s32.totalorder %s16, 1
      %s221 = scalar_select %p220, %s16, 1
      %s222 = smul.addr %s221, 32
      %s223 = smul.addr %s222, 8
      %s224 = scalar_lea.vmem %s5, %s223
      %vm226 = vcmask 31744
      %227 = vst.msk [vmem:[#allocation2] sm:$0xff] %vm226, 0.0
      %228 = vst.msk [vmem:[#allocation2 + $0x8] sm:$0xff] %vm226, 0.0
      %vm229 = vcmask 25600
      %230 = vst.msk [vmem:[#allocation2 + $0x10] sm:$0x3] %vm229, 0.0
      %231 = vst.msk [vmem:[#allocation2 + $0x18] sm:$0xff] %vm226, 0.0
      %232 = vst.msk [vmem:[#allocation2 + $0x20] sm:$0xff] %vm226, 0.0
      %233 = vst.msk [vmem:[#allocation2 + $0x28] sm:$0x3] %vm229, 0.0
      %234 = vst.msk [vmem:[#allocation2 + $0x30] sm:$0xff] %vm226, 0.0
      %235 = vst.msk [vmem:[#allocation2 + $0x38] sm:$0xff] %vm226, 0.0
      %236 = vst.msk [vmem:[#allocation2 + $0x40] sm:$0x3] %vm229, 0.0
      %237 = vst.msk [vmem:[#allocation2 + $0x48] sm:$0xff] %vm226, 0.0
      %238 = vst.msk [vmem:[#allocation2 + $0x50] sm:$0xff] %vm226, 0.0
      %239 = vst.msk [vmem:[#allocation2 + $0x58] sm:$0x3] %vm229, 0.0
      %240 = vst.msk [vmem:[#allocation2 + $0x60] sm:$0xff] %vm226, 0.0
      %241 = vst.msk [vmem:[#allocation2 + $0x68] sm:$0xff] %vm226, 0.0
      %242 = vst.msk [vmem:[#allocation2 + $0x70] sm:$0x3] %vm229, 0.0
      %243 = vst.msk [vmem:[#allocation2 + $0x78] sm:$0xff] %vm226, 0.0
      %244 = vst.msk [vmem:[#allocation2 + $0x80] sm:$0xff] %vm226, 0.0
      %245 = vst.msk [vmem:[#allocation2 + $0x88] sm:$0x3] %vm229, 0.0
      %246 = vst.msk [vmem:[#allocation2 + $0x90] sm:$0xff] %vm226, 0.0
      %247 = vst.msk [vmem:[#allocation2 + $0x98] sm:$0xff] %vm226, 0.0
      %248 = vst.msk [vmem:[#allocation2 + $0xa0] sm:$0x3] %vm229, 0.0
      %249 = vst.msk [vmem:[#allocation2 + $0xa8] sm:$0xff] %vm226, 0.0
      %250 = vst.msk [vmem:[#allocation2 + $0xb0] sm:$0xff] %vm226, 0.0
      %251 = vst.msk [vmem:[#allocation2 + $0xb8] sm:$0x3] %vm229, 0.0
      %252 = vst.msk [vmem:[#allocation2 + $0xc0] sm:$0xff] %vm226, 0.0
      %253 = vst.msk [vmem:[#allocation2 + $0xc8] sm:$0xff] %vm226, 0.0
      %254 = vst.msk [vmem:[#allocation2 + $0xd0] sm:$0x3] %vm229, 0.0
      %255 = vst.msk [vmem:[#allocation2 + $0xd8] sm:$0xff] %vm226, 0.0
      %256 = vst.msk [vmem:[#allocation2 + $0xe0] sm:$0xff] %vm226, 0.0
      %257 = vst.msk [vmem:[#allocation2 + $0xe8] sm:$0x3] %vm229, 0.0
      %258 = vst.msk [vmem:[#allocation2 + $0xf0] sm:$0xff] %vm226, 0.0
      %259 = vst.msk [vmem:[#allocation2 + $0xf8] sm:$0xff] %vm226, 0.0
      %260 = vst.msk [vmem:[#allocation2 + $0x100] sm:$0x3] %vm229, 0.0
      %261 = vst.msk [vmem:[#allocation2 + $0x108] sm:$0xff] %vm226, 0.0
      %262 = vst.msk [vmem:[#allocation2 + $0x110] sm:$0xff] %vm226, 0.0
      %263 = vst.msk [vmem:[#allocation2 + $0x118] sm:$0x3] %vm229, 0.0
      %264 = vst.msk [vmem:[#allocation2 + $0x120] sm:$0xff] %vm226, 0.0
      %265 = vst.msk [vmem:[#allocation2 + $0x128] sm:$0xff] %vm226, 0.0
      %266 = vst.msk [vmem:[#allocation2 + $0x130] sm:$0x3] %vm229, 0.0
      %267 = vst.msk [vmem:[#allocation2 + $0x138] sm:$0xff] %vm226, 0.0
      %268 = vst.msk [vmem:[#allocation2 + $0x140] sm:$0xff] %vm226, 0.0
      %269 = vst.msk [vmem:[#allocation2 + $0x148] sm:$0x3] %vm229, 0.0
      %270 = vst.msk [vmem:[#allocation2 + $0x150] sm:$0xff] %vm226, 0.0
      %271 = vst.msk [vmem:[#allocation2 + $0x158] sm:$0xff] %vm226, 0.0
      %272 = vst.msk [vmem:[#allocation2 + $0x160] sm:$0x3] %vm229, 0.0
      %273 = vst.msk [vmem:[#allocation2 + $0x168] sm:$0xff] %vm226, 0.0
      %274 = vst.msk [vmem:[#allocation2 + $0x170] sm:$0xff] %vm226, 0.0
      %275 = vst.msk [vmem:[#allocation2 + $0x178] sm:$0x3] %vm229, 0.0
      %276 = vst.msk [vmem:[#allocation2 + $0x180] sm:$0xff] %vm226, 0.0
      %277 = vst.msk [vmem:[#allocation2 + $0x188] sm:$0xff] %vm226, 0.0
      %278 = vst.msk [vmem:[#allocation2 + $0x190] sm:$0x3] %vm229, 0.0
      %279 = vst.msk [vmem:[#allocation2 + $0x198] sm:$0xff] %vm226, 0.0
      %280 = vst.msk [vmem:[#allocation2 + $0x1a0] sm:$0xff] %vm226, 0.0
      %281 = vst.msk [vmem:[#allocation2 + $0x1a8] sm:$0x3] %vm229, 0.0
      %v282 = vld [vmem:[%s219] sm:$0xf]
      %v283 = vld [vmem:[%s219 + $0x4] sm:$0xf]
      %v284 = vld [vmem:[%s219 + $0x8] sm:$0xf]
      %v285 = vld [vmem:[%s219 + $0xc] sm:$0xf]
      %v286 = vld [vmem:[%s219 + $0x10] sm:$0xf]
      %v287 = vld [vmem:[%s219 + $0x14] sm:$0xf]
      %v288 = vld [vmem:[%s219 + $0x18] sm:$0xf]
      %v289 = vld [vmem:[%s219 + $0x1c] sm:$0xf]
      %v290 = vld [vmem:[%s219 + $0x20] sm:$0xf]
      %v291 = vld [vmem:[%s219 + $0x24] sm:$0xf]
      %v292 = vld [vmem:[%s219 + $0x28] sm:$0xf]
      %v293 = vld [vmem:[%s219 + $0x2c] sm:$0xf]
      %v294 = vld [vmem:[%s219 + $0x30] sm:$0xf]
      %v295 = vld [vmem:[%s219 + $0x34] sm:$0xf]
      %v296 = vld [vmem:[%s219 + $0x38] sm:$0xf]
      %v297 = vld [vmem:[%s219 + $0x3c] sm:$0xf]
      %v298 = vld [vmem:[%s219 + $0x40] sm:$0xf]
      %v299 = vld [vmem:[%s219 + $0x44] sm:$0xf]
      %v300 = vld [vmem:[%s219 + $0x48] sm:$0xf]
      %v301 = vld [vmem:[%s219 + $0x4c] sm:$0xf]
      %v302 = vld [vmem:[%s219 + $0x50] sm:$0xf]
      %v303 = vld [vmem:[%s219 + $0x54] sm:$0xf]
      %v304 = vld [vmem:[%s219 + $0x58] sm:$0xf]
      %v305 = vld [vmem:[%s219 + $0x5c] sm:$0xf]
      %v306 = vld [vmem:[%s219 + $0x60] sm:$0xf]
      %v307 = vld [vmem:[%s219 + $0x64] sm:$0xf]
      %v308 = vld [vmem:[%s219 + $0x68] sm:$0xf]
      %v309 = vld [vmem:[%s219 + $0x6c] sm:$0xf]
      %v310 = vld [vmem:[%s219 + $0x70] sm:$0xf]
      %v311 = vld [vmem:[%s219 + $0x74] sm:$0xf]
      %v312 = vld [vmem:[%s219 + $0x78] sm:$0xf]
      %v313 = vld [vmem:[%s219 + $0x7c] sm:$0xf]
      %v314 = vunpack.c.l.bf16 %v282
      %v315 = vunpack.c.l.bf16 %v283
      %v316 = vunpack.c.l.bf16 %v284
      %v317 = vunpack.c.l.bf16 %v285
      %v318 = vunpack.c.l.bf16 %v286
      %v319 = vunpack.c.l.bf16 %v287
      %v320 = vunpack.c.l.bf16 %v288
      %v321 = vunpack.c.l.bf16 %v289
      %v322 = vunpack.c.l.bf16 %v290
      %v323 = vunpack.c.l.bf16 %v291
      %v324 = vunpack.c.l.bf16 %v292
      %v325 = vunpack.c.l.bf16 %v293
      %v326 = vunpack.c.l.bf16 %v294
      %v327 = vunpack.c.l.bf16 %v295
      %v328 = vunpack.c.l.bf16 %v296
      %v329 = vunpack.c.l.bf16 %v297
      %v330 = vunpack.c.l.bf16 %v298
      %v331 = vunpack.c.l.bf16 %v299
      %v332 = vunpack.c.l.bf16 %v300
      %v333 = vunpack.c.l.bf16 %v301
      %v334 = vunpack.c.l.bf16 %v302
      %v335 = vunpack.c.l.bf16 %v303
      %v336 = vunpack.c.l.bf16 %v304
      %v337 = vunpack.c.l.bf16 %v305
      %v338 = vunpack.c.l.bf16 %v306
      %v339 = vunpack.c.l.bf16 %v307
      %v340 = vunpack.c.l.bf16 %v308
      %v341 = vunpack.c.l.bf16 %v309
      %v342 = vunpack.c.l.bf16 %v310
      %v343 = vunpack.c.l.bf16 %v311
      %v344 = vunpack.c.l.bf16 %v312
      %v345 = vunpack.c.l.bf16 %v313
      %s346 = scalar_lea.vmem [#allocation2], 24
      %347 = vst.msk [vmem:[%s346 + $0x1] sm:$0xff] %vm226, %v314
      %348 = vst.msk [vmem:[%s346 + $0x9] sm:$0xff] %vm226, %v315
      %349 = vst.msk [vmem:[%s346 + $0x19] sm:$0xff] %vm226, %v316
      %350 = vst.msk [vmem:[%s346 + $0x21] sm:$0xff] %vm226, %v317
      %351 = vst.msk [vmem:[%s346 + $0x31] sm:$0xff] %vm226, %v318
      %352 = vst.msk [vmem:[%s346 + $0x39] sm:$0xff] %vm226, %v319
      %353 = vst.msk [vmem:[%s346 + $0x49] sm:$0xff] %vm226, %v320
      %354 = vst.msk [vmem:[%s346 + $0x51] sm:$0xff] %vm226, %v321
      %355 = vst.msk [vmem:[%s346 + $0x61] sm:$0xff] %vm226, %v322
      %356 = vst.msk [vmem:[%s346 + $0x69] sm:$0xff] %vm226, %v323
      %357 = vst.msk [vmem:[%s346 + $0x79] sm:$0xff] %vm226, %v324
      %358 = vst.msk [vmem:[%s346 + $0x81] sm:$0xff] %vm226, %v325
      %359 = vst.msk [vmem:[%s346 + $0x91] sm:$0xff] %vm226, %v326
      %360 = vst.msk [vmem:[%s346 + $0x99] sm:$0xff] %vm226, %v327
      %361 = vst.msk [vmem:[%s346 + $0xa9] sm:$0xff] %vm226, %v328
      %362 = vst.msk [vmem:[%s346 + $0xb1] sm:$0xff] %vm226, %v329
      %363 = vst.msk [vmem:[%s346 + $0xc1] sm:$0xff] %vm226, %v330
      %364 = vst.msk [vmem:[%s346 + $0xc9] sm:$0xff] %vm226, %v331
      %365 = vst.msk [vmem:[%s346 + $0xd9] sm:$0xff] %vm226, %v332
      %366 = vst.msk [vmem:[%s346 + $0xe1] sm:$0xff] %vm226, %v333
      %367 = vst.msk [vmem:[%s346 + $0xf1] sm:$0xff] %vm226, %v334
      %368 = vst.msk [vmem:[%s346 + $0xf9] sm:$0xff] %vm226, %v335
      %369 = vst.msk [vmem:[%s346 + $0x109] sm:$0xff] %vm226, %v336
      %370 = vst.msk [vmem:[%s346 + $0x111] sm:$0xff] %vm226, %v337
      %371 = vst.msk [vmem:[%s346 + $0x121] sm:$0xff] %vm226, %v338
      %372 = vst.msk [vmem:[%s346 + $0x129] sm:$0xff] %vm226, %v339
      %373 = vst.msk [vmem:[%s346 + $0x139] sm:$0xff] %vm226, %v340
      %374 = vst.msk [vmem:[%s346 + $0x141] sm:$0xff] %vm226, %v341
      %375 = vst.msk [vmem:[%s346 + $0x151] sm:$0xff] %vm226, %v342
      %376 = vst.msk [vmem:[%s346 + $0x159] sm:$0xff] %vm226, %v343
      %377 = vst.msk [vmem:[%s346 + $0x169] sm:$0xff] %vm226, %v344
      %378 = vst.msk [vmem:[%s346 + $0x171] sm:$0xff] %vm226, %v345
      %v379 = vld [vmem:[#allocation2] sm:$0xff]
      %v380 = vld [vmem:[#allocation2 + $0x8] sm:$0xff]
      %v381 = vld [vmem:[#allocation2 + $0x10] sm:$0x3]
      %v382 = vld [vmem:[#allocation2 + $0x18] sm:$0xff]
      %v383 = vld [vmem:[#allocation2 + $0x20] sm:$0xff]
      %v384 = vld [vmem:[#allocation2 + $0x28] sm:$0x3]
      %v385 = vld [vmem:[#allocation2 + $0x30] sm:$0xff]
      %v386 = vld [vmem:[#allocation2 + $0x38] sm:$0xff]
      %v387 = vld [vmem:[#allocation2 + $0x40] sm:$0x3]
      %v388 = vld [vmem:[#allocation2 + $0x48] sm:$0xff]
      %v389 = vld [vmem:[#allocation2 + $0x50] sm:$0xff]
      %v390 = vld [vmem:[#allocation2 + $0x58] sm:$0x3]
      %v391 = vld [vmem:[#allocation2 + $0x60] sm:$0xff]
      %v392 = vld [vmem:[#allocation2 + $0x68] sm:$0xff]
      %v393 = vld [vmem:[#allocation2 + $0x70] sm:$0x3]
      %v394 = vld [vmem:[#allocation2 + $0x78] sm:$0xff]
      %v395 = vld [vmem:[#allocation2 + $0x80] sm:$0xff]
      %v396 = vld [vmem:[#allocation2 + $0x88] sm:$0x3]
      %v397 = vld [vmem:[#allocation2 + $0x90] sm:$0xff]
      %v398 = vld [vmem:[#allocation2 + $0x98] sm:$0xff]
      %v399 = vld [vmem:[#allocation2 + $0xa0] sm:$0x3]
      %v400 = vld [vmem:[#allocation2 + $0xa8] sm:$0xff]
      %v401 = vld [vmem:[#allocation2 + $0xb0] sm:$0xff]
      %v402 = vld [vmem:[#allocation2 + $0xb8] sm:$0x3]
      %v403 = vld [vmem:[#allocation2 + $0xc0] sm:$0xff]
      %v404 = vld [vmem:[#allocation2 + $0xc8] sm:$0xff]
      %v405 = vld [vmem:[#allocation2 + $0xd0] sm:$0x3]
      %v406 = vld [vmem:[#allocation2 + $0xd8] sm:$0xff]
      %v407 = vld [vmem:[#allocation2 + $0xe0] sm:$0xff]
      %v408 = vld [vmem:[#allocation2 + $0xe8] sm:$0x3]
      %v409 = vld [vmem:[#allocation2 + $0xf0] sm:$0xff]
      %v410 = vld [vmem:[#allocation2 + $0xf8] sm:$0xff]
      %v411 = vld [vmem:[#allocation2 + $0x100] sm:$0x3]
      %v412 = vld [vmem:[#allocation2 + $0x108] sm:$0xff]
      %v413 = vld [vmem:[#allocation2 + $0x110] sm:$0xff]
      %v414 = vld [vmem:[#allocation2 + $0x118] sm:$0x3]
      %v415 = vld [vmem:[#allocation2 + $0x120] sm:$0xff]
      %v416 = vld [vmem:[#allocation2 + $0x128] sm:$0xff]
      %v417 = vld [vmem:[#allocation2 + $0x130] sm:$0x3]
      %v418 = vld [vmem:[#allocation2 + $0x138] sm:$0xff]
      %v419 = vld [vmem:[#allocation2 + $0x140] sm:$0xff]
      %v420 = vld [vmem:[#allocation2 + $0x148] sm:$0x3]
      %v421 = vld [vmem:[#allocation2 + $0x150] sm:$0xff]
      %v422 = vld [vmem:[#allocation2 + $0x158] sm:$0xff]
      %v423 = vld [vmem:[#allocation2 + $0x160] sm:$0x3]
      %v424 = vld [vmem:[#allocation2 + $0x168] sm:$0xff]
      %v425 = vld [vmem:[#allocation2 + $0x170] sm:$0xff]
      %v426 = vld [vmem:[#allocation2 + $0x178] sm:$0x3]
      %v427 = vld [vmem:[#allocation2 + $0x180] sm:$0xff]
      %v428 = vld [vmem:[#allocation2 + $0x188] sm:$0xff]
      %v429 = vld [vmem:[#allocation2 + $0x190] sm:$0x3]
      %v430 = vld [vmem:[#allocation2 + $0x198] sm:$0xff]
      %v431 = vld [vmem:[#allocation2 + $0x1a0] sm:$0xff]
      %v432 = vld [vmem:[#allocation2 + $0x1a8] sm:$0x3]
      %433 = vst.msk [vmem:[#allocation4] sm:$0xff] %vm226, %v379
      %434 = vst.msk [vmem:[#allocation4 + $0x18] sm:$0xff] %vm226, %v380
      %435 = vst.msk [vmem:[#allocation4 + $0x30] sm:$0xff] %vm226, %v382
      %436 = vst.msk [vmem:[#allocation4 + $0x48] sm:$0xff] %vm226, %v383
      %437 = vst.msk [vmem:[#allocation4 + $0x60] sm:$0xff] %vm226, %v385
      %438 = vst.msk [vmem:[#allocation4 + $0x78] sm:$0xff] %vm226, %v386
      %439 = vst.msk [vmem:[#allocation4 + $0x90] sm:$0xff] %vm226, %v388
      %440 = vst.msk [vmem:[#allocation4 + $0xa8] sm:$0xff] %vm226, %v389
      %441 = vst.msk [vmem:[#allocation4 + $0xc0] sm:$0xff] %vm226, %v391
      %442 = vst.msk [vmem:[#allocation4 + $0xd8] sm:$0xff] %vm226, %v392
      %443 = vst.msk [vmem:[#allocation4 + $0xf0] sm:$0xff] %vm226, %v394
      %444 = vst.msk [vmem:[#allocation4 + $0x108] sm:$0xff] %vm226, %v395
      %445 = vst.msk [vmem:[#allocation4 + $0x120] sm:$0xff] %vm226, %v397
      %446 = vst.msk [vmem:[#allocation4 + $0x138] sm:$0xff] %vm226, %v398
      %447 = vst.msk [vmem:[#allocation4 + $0x150] sm:$0xff] %vm226, %v400
      %448 = vst.msk [vmem:[#allocation4 + $0x168] sm:$0xff] %vm226, %v401
      %449 = vst.msk [vmem:[#allocation4 + $0x180] sm:$0xff] %vm226, %v403
      %450 = vst.msk [vmem:[#allocation4 + $0x198] sm:$0xff] %vm226, %v404
      %451 = vst.msk [vmem:[#allocation4 + $0x1b0] sm:$0xff] %vm226, %v406
      %452 = vst.msk [vmem:[#allocation4 + $0x1c8] sm:$0xff] %vm226, %v407
      %453 = vst.msk [vmem:[#allocation4 + $0x1e0] sm:$0xff] %vm226, %v409
      %454 = vst.msk [vmem:[#allocation4 + $0x1f8] sm:$0xff] %vm226, %v410
      %455 = vst.msk [vmem:[#allocation4 + $0x210] sm:$0xff] %vm226, %v412
      %456 = vst.msk [vmem:[#allocation4 + $0x228] sm:$0xff] %vm226, %v413
      %457 = vst.msk [vmem:[#allocation4 + $0x240] sm:$0xff] %vm226, %v415
      %458 = vst.msk [vmem:[#allocation4 + $0x258] sm:$0xff] %vm226, %v416
      %459 = vst.msk [vmem:[#allocation4 + $0x270] sm:$0xff] %vm226, %v418
      %460 = vst.msk [vmem:[#allocation4 + $0x288] sm:$0xff] %vm226, %v419
      %461 = vst.msk [vmem:[#allocation4 + $0x2a0] sm:$0xff] %vm226, %v421
      %462 = vst.msk [vmem:[#allocation4 + $0x2b8] sm:$0xff] %vm226, %v422
      %463 = vst.msk [vmem:[#allocation4 + $0x2d0] sm:$0xff] %vm226, %v424
      %464 = vst.msk [vmem:[#allocation4 + $0x2e8] sm:$0xff] %vm226, %v425
      %vm513 = vcmask 1046528
      %v514 = vrot.slane %v379, 1
      %v515 = vrot.slane %v380, 1
      %v516 = vsel %vm513, %v514, %v515
      %v517 = vrot.slane %v381, 1
      %v518 = vsel %vm513, %v515, %v517
      %v519 = vrot.slane %v382, 1
      %v520 = vrot.slane %v383, 1
      %v521 = vsel %vm513, %v519, %v520
      %v522 = vrot.slane %v384, 1
      %v523 = vsel %vm513, %v520, %v522
      %v524 = vrot.slane %v385, 1
      %v525 = vrot.slane %v386, 1
      %v526 = vsel %vm513, %v524, %v525
      %v527 = vrot.slane %v387, 1
      %v528 = vsel %vm513, %v525, %v527
      %v529 = vrot.slane %v388, 1
      %v530 = vrot.slane %v389, 1
      %v531 = vsel %vm513, %v529, %v530
      %v532 = vrot.slane %v390, 1
      %v533 = vsel %vm513, %v530, %v532
      %v534 = vrot.slane %v391, 1
      %v535 = vrot.slane %v392, 1
      %v536 = vsel %vm513, %v534, %v535
      %v537 = vrot.slane %v393, 1
      %v538 = vsel %vm513, %v535, %v537
      %v539 = vrot.slane %v394, 1
      %v540 = vrot.slane %v395, 1
      %v541 = vsel %vm513, %v539, %v540
      %v542 = vrot.slane %v396, 1
      %v543 = vsel %vm513, %v540, %v542
      %v544 = vrot.slane %v397, 1
      %v545 = vrot.slane %v398, 1
      %v546 = vsel %vm513, %v544, %v545
      %v547 = vrot.slane %v399, 1
      %v548 = vsel %vm513, %v545, %v547
      %v549 = vrot.slane %v400, 1
      %v550 = vrot.slane %v401, 1
      %v551 = vsel %vm513, %v549, %v550
      %v552 = vrot.slane %v402, 1
      %v553 = vsel %vm513, %v550, %v552
      %v554 = vrot.slane %v403, 1
      %v555 = vrot.slane %v404, 1
      %v556 = vsel %vm513, %v554, %v555
      %v557 = vrot.slane %v405, 1
      %v558 = vsel %vm513, %v555, %v557
      %v559 = vrot.slane %v406, 1
      %v560 = vrot.slane %v407, 1
      %v561 = vsel %vm513, %v559, %v560
      %v562 = vrot.slane %v408, 1
      %v563 = vsel %vm513, %v560, %v562
      %v564 = vrot.slane %v409, 1
      %v565 = vrot.slane %v410, 1
      %v566 = vsel %vm513, %v564, %v565
      %v567 = vrot.slane %v411, 1
      %v568 = vsel %vm513, %v565, %v567
      %v569 = vrot.slane %v412, 1
      %v570 = vrot.slane %v413, 1
      %v571 = vsel %vm513, %v569, %v570
      %v572 = vrot.slane %v414, 1
      %v573 = vsel %vm513, %v570, %v572
      %v574 = vrot.slane %v415, 1
      %v575 = vrot.slane %v416, 1
      %v576 = vsel %vm513, %v574, %v575
      %v577 = vrot.slane %v417, 1
      %v578 = vsel %vm513, %v575, %v577
      %v579 = vrot.slane %v418, 1
      %v580 = vrot.slane %v419, 1
      %v581 = vsel %vm513, %v579, %v580
      %v582 = vrot.slane %v420, 1
      %v583 = vsel %vm513, %v580, %v582
      %v584 = vrot.slane %v421, 1
      %v585 = vrot.slane %v422, 1
      %v586 = vsel %vm513, %v584, %v585
      %v587 = vrot.slane %v423, 1
      %v588 = vsel %vm513, %v585, %v587
      %v589 = vrot.slane %v424, 1
      %v590 = vrot.slane %v425, 1
      %v591 = vsel %vm513, %v589, %v590
      %v592 = vrot.slane %v426, 1
      %v593 = vsel %vm513, %v590, %v592
      %594 = vrot.lane.b32.xlu0 %v516, 4
      %v595 = vpop.permute.xlu0 %594
      %596 = vrot.lane.b32.xlu0 %v518, 4
      %v597 = vpop.permute.xlu0 %596
      %598 = vrot.lane.b32.xlu0 %v521, 4
      %v599 = vpop.permute.xlu0 %598
      %600 = vrot.lane.b32.xlu0 %v523, 4
      %v601 = vpop.permute.xlu0 %600
      %602 = vrot.lane.b32.xlu0 %v526, 4
      %v603 = vpop.permute.xlu0 %602
      %604 = vrot.lane.b32.xlu0 %v528, 4
      %v605 = vpop.permute.xlu0 %604
      %606 = vrot.lane.b32.xlu0 %v531, 4
      %v607 = vpop.permute.xlu0 %606
      %608 = vrot.lane.b32.xlu0 %v533, 4
      %v609 = vpop.permute.xlu0 %608
      %610 = vrot.lane.b32.xlu0 %v536, 4
      %v611 = vpop.permute.xlu0 %610
      %612 = vrot.lane.b32.xlu0 %v538, 4
      %v613 = vpop.permute.xlu0 %612
      %614 = vrot.lane.b32.xlu0 %v541, 4
      %v615 = vpop.permute.xlu0 %614
      %616 = vrot.lane.b32.xlu0 %v543, 4
      %v617 = vpop.permute.xlu0 %616
      %618 = vrot.lane.b32.xlu0 %v546, 4
      %v619 = vpop.permute.xlu0 %618
      %620 = vrot.lane.b32.xlu0 %v548, 4
      %v621 = vpop.permute.xlu0 %620
      %622 = vrot.lane.b32.xlu0 %v551, 4
      %v623 = vpop.permute.xlu0 %622
      %624 = vrot.lane.b32.xlu0 %v553, 4
      %v625 = vpop.permute.xlu0 %624
      %626 = vrot.lane.b32.xlu0 %v556, 4
      %v627 = vpop.permute.xlu0 %626
      %628 = vrot.lane.b32.xlu0 %v558, 4
      %v629 = vpop.permute.xlu0 %628
      %630 = vrot.lane.b32.xlu0 %v561, 4
      %v631 = vpop.permute.xlu0 %630
      %632 = vrot.lane.b32.xlu0 %v563, 4
      %v633 = vpop.permute.xlu0 %632
      %634 = vrot.lane.b32.xlu0 %v566, 4
      %v635 = vpop.permute.xlu0 %634
      %636 = vrot.lane.b32.xlu0 %v568, 4
      %v637 = vpop.permute.xlu0 %636
      %638 = vrot.lane.b32.xlu0 %v571, 4
      %v639 = vpop.permute.xlu0 %638
      %640 = vrot.lane.b32.xlu0 %v573, 4
      %v641 = vpop.permute.xlu0 %640
      %642 = vrot.lane.b32.xlu0 %v576, 4
      %v643 = vpop.permute.xlu0 %642
      %644 = vrot.lane.b32.xlu0 %v578, 4
      %v645 = vpop.permute.xlu0 %644
      %646 = vrot.lane.b32.xlu0 %v581, 4
      %v647 = vpop.permute.xlu0 %646
      %648 = vrot.lane.b32.xlu0 %v583, 4
      %v649 = vpop.permute.xlu0 %648
      %650 = vrot.lane.b32.xlu0 %v586, 4
      %v651 = vpop.permute.xlu0 %650
      %652 = vrot.lane.b32.xlu0 %v588, 4
      %v653 = vpop.permute.xlu0 %652
      %654 = vrot.lane.b32.xlu0 %v591, 4
      %v655 = vpop.permute.xlu0 %654
      %656 = vrot.lane.b32.xlu0 %v593, 4
      %v657 = vpop.permute.xlu0 %656
      %vm690 = vcmask 64544
      %691 = vst.msk [vmem:[#allocation4] sm:$0xff] %vm690, %v595
      %692 = vst.msk [vmem:[#allocation4 + $0x18] sm:$0xff] %vm690, %v597
      %693 = vst.msk [vmem:[#allocation4 + $0x30] sm:$0xff] %vm690, %v599
      %694 = vst.msk [vmem:[#allocation4 + $0x48] sm:$0xff] %vm690, %v601
      %695 = vst.msk [vmem:[#allocation4 + $0x60] sm:$0xff] %vm690, %v603
      %696 = vst.msk [vmem:[#allocation4 + $0x78] sm:$0xff] %vm690, %v605
      %697 = vst.msk [vmem:[#allocation4 + $0x90] sm:$0xff] %vm690, %v607
      %698 = vst.msk [vmem:[#allocation4 + $0xa8] sm:$0xff] %vm690, %v609
      %699 = vst.msk [vmem:[#allocation4 + $0xc0] sm:$0xff] %vm690, %v611
      %700 = vst.msk [vmem:[#allocation4 + $0xd8] sm:$0xff] %vm690, %v613
      %701 = vst.msk [vmem:[#allocation4 + $0xf0] sm:$0xff] %vm690, %v615
      %702 = vst.msk [vmem:[#allocation4 + $0x108] sm:$0xff] %vm690, %v617
      %703 = vst.msk [vmem:[#allocation4 + $0x120] sm:$0xff] %vm690, %v619
      %704 = vst.msk [vmem:[#allocation4 + $0x138] sm:$0xff] %vm690, %v621
      %705 = vst.msk [vmem:[#allocation4 + $0x150] sm:$0xff] %vm690, %v623
      %706 = vst.msk [vmem:[#allocation4 + $0x168] sm:$0xff] %vm690, %v625
      %707 = vst.msk [vmem:[#allocation4 + $0x180] sm:$0xff] %vm690, %v627
      %708 = vst.msk [vmem:[#allocation4 + $0x198] sm:$0xff] %vm690, %v629
      %709 = vst.msk [vmem:[#allocation4 + $0x1b0] sm:$0xff] %vm690, %v631
      %710 = vst.msk [vmem:[#allocation4 + $0x1c8] sm:$0xff] %vm690, %v633
      %711 = vst.msk [vmem:[#allocation4 + $0x1e0] sm:$0xff] %vm690, %v635
      %712 = vst.msk [vmem:[#allocation4 + $0x1f8] sm:$0xff] %vm690, %v637
      %713 = vst.msk [vmem:[#allocation4 + $0x210] sm:$0xff] %vm690, %v639
      %714 = vst.msk [vmem:[#allocation4 + $0x228] sm:$0xff] %vm690, %v641
      %715 = vst.msk [vmem:[#allocation4 + $0x240] sm:$0xff] %vm690, %v643
      %716 = vst.msk [vmem:[#allocation4 + $0x258] sm:$0xff] %vm690, %v645
      %717 = vst.msk [vmem:[#allocation4 + $0x270] sm:$0xff] %vm690, %v647
      %718 = vst.msk [vmem:[#allocation4 + $0x288] sm:$0xff] %vm690, %v649
      %719 = vst.msk [vmem:[#allocation4 + $0x2a0] sm:$0xff] %vm690, %v651
      %720 = vst.msk [vmem:[#allocation4 + $0x2b8] sm:$0xff] %vm690, %v653
      %721 = vst.msk [vmem:[#allocation4 + $0x2d0] sm:$0xff] %vm690, %v655
      %722 = vst.msk [vmem:[#allocation4 + $0x2e8] sm:$0xff] %vm690, %v657
      %vm723 = vcmask 1045504
      %v724 = vrot.slane %v379, 2
      %v725 = vrot.slane %v380, 2
      %v726 = vsel %vm723, %v724, %v725
      %v727 = vrot.slane %v381, 2
      %v728 = vsel %vm723, %v725, %v727
      %v729 = vrot.slane %v382, 2
      %v730 = vrot.slane %v383, 2
      %v731 = vsel %vm723, %v729, %v730
      %v732 = vrot.slane %v384, 2
      %v733 = vsel %vm723, %v730, %v732
      %v734 = vrot.slane %v385, 2
      %v735 = vrot.slane %v386, 2
      %v736 = vsel %vm723, %v734, %v735
      %v737 = vrot.slane %v387, 2
      %v738 = vsel %vm723, %v735, %v737
      %v739 = vrot.slane %v388, 2
      %v740 = vrot.slane %v389, 2
      %v741 = vsel %vm723, %v739, %v740
      %v742 = vrot.slane %v390, 2
      %v743 = vsel %vm723, %v740, %v742
      %v744 = vrot.slane %v391, 2
      %v745 = vrot.slane %v392, 2
      %v746 = vsel %vm723, %v744, %v745
      %v747 = vrot.slane %v393, 2
      %v748 = vsel %vm723, %v745, %v747
      %v749 = vrot.slane %v394, 2
      %v750 = vrot.slane %v395, 2
      %v751 = vsel %vm723, %v749, %v750
      %v752 = vrot.slane %v396, 2
      %v753 = vsel %vm723, %v750, %v752
      %v754 = vrot.slane %v397, 2
      %v755 = vrot.slane %v398, 2
      %v756 = vsel %vm723, %v754, %v755
      %v757 = vrot.slane %v399, 2
      %v758 = vsel %vm723, %v755, %v757
      %v759 = vrot.slane %v400, 2
      %v760 = vrot.slane %v401, 2
      %v761 = vsel %vm723, %v759, %v760
      %v762 = vrot.slane %v402, 2
      %v763 = vsel %vm723, %v760, %v762
      %v764 = vrot.slane %v403, 2
      %v765 = vrot.slane %v404, 2
      %v766 = vsel %vm723, %v764, %v765
      %v767 = vrot.slane %v405, 2
      %v768 = vsel %vm723, %v765, %v767
      %v769 = vrot.slane %v406, 2
      %v770 = vrot.slane %v407, 2
      %v771 = vsel %vm723, %v769, %v770
      %v772 = vrot.slane %v408, 2
      %v773 = vsel %vm723, %v770, %v772
      %v774 = vrot.slane %v409, 2
      %v775 = vrot.slane %v410, 2
      %v776 = vsel %vm723, %v774, %v775
      %v777 = vrot.slane %v411, 2
      %v778 = vsel %vm723, %v775, %v777
      %v779 = vrot.slane %v412, 2
      %v780 = vrot.slane %v413, 2
      %v781 = vsel %vm723, %v779, %v780
      %v782 = vrot.slane %v414, 2
      %v783 = vsel %vm723, %v780, %v782
      %v784 = vrot.slane %v415, 2
      %v785 = vrot.slane %v416, 2
      %v786 = vsel %vm723, %v784, %v785
      %v787 = vrot.slane %v417, 2
      %v788 = vsel %vm723, %v785, %v787
      %v789 = vrot.slane %v418, 2
      %v790 = vrot.slane %v419, 2
      %v791 = vsel %vm723, %v789, %v790
      %v792 = vrot.slane %v420, 2
      %v793 = vsel %vm723, %v790, %v792
      %v794 = vrot.slane %v421, 2
      %v795 = vrot.slane %v422, 2
      %v796 = vsel %vm723, %v794, %v795
      %v797 = vrot.slane %v423, 2
      %v798 = vsel %vm723, %v795, %v797
      %v799 = vrot.slane %v424, 2
      %v800 = vrot.slane %v425, 2
      %v801 = vsel %vm723, %v799, %v800
      %v802 = vrot.slane %v426, 2
      %v803 = vsel %vm723, %v800, %v802
      %804 = vrot.lane.b32.xlu0 %v726, 8
      %v805 = vpop.permute.xlu0 %804
      %806 = vrot.lane.b32.xlu0 %v728, 8
      %v807 = vpop.permute.xlu0 %806
      %808 = vrot.lane.b32.xlu0 %v731, 8
      %v809 = vpop.permute.xlu0 %808
      %810 = vrot.lane.b32.xlu0 %v733, 8
      %v811 = vpop.permute.xlu0 %810
      %812 = vrot.lane.b32.xlu0 %v736, 8
      %v813 = vpop.permute.xlu0 %812
      %814 = vrot.lane.b32.xlu0 %v738, 8
      %v815 = vpop.permute.xlu0 %814
      %816 = vrot.lane.b32.xlu0 %v741, 8
      %v817 = vpop.permute.xlu0 %816
      %818 = vrot.lane.b32.xlu0 %v743, 8
      %v819 = vpop.permute.xlu0 %818
      %820 = vrot.lane.b32.xlu0 %v746, 8
      %v821 = vpop.permute.xlu0 %820
      %822 = vrot.lane.b32.xlu0 %v748, 8
      %v823 = vpop.permute.xlu0 %822
      %824 = vrot.lane.b32.xlu0 %v751, 8
      %v825 = vpop.permute.xlu0 %824
      %826 = vrot.lane.b32.xlu0 %v753, 8
      %v827 = vpop.permute.xlu0 %826
      %828 = vrot.lane.b32.xlu0 %v756, 8
      %v829 = vpop.permute.xlu0 %828
      %830 = vrot.lane.b32.xlu0 %v758, 8
      %v831 = vpop.permute.xlu0 %830
      %832 = vrot.lane.b32.xlu0 %v761, 8
      %v833 = vpop.permute.xlu0 %832
      %834 = vrot.lane.b32.xlu0 %v763, 8
      %v835 = vpop.permute.xlu0 %834
      %836 = vrot.lane.b32.xlu0 %v766, 8
      %v837 = vpop.permute.xlu0 %836
      %838 = vrot.lane.b32.xlu0 %v768, 8
      %v839 = vpop.permute.xlu0 %838
      %840 = vrot.lane.b32.xlu0 %v771, 8
      %v841 = vpop.permute.xlu0 %840
      %842 = vrot.lane.b32.xlu0 %v773, 8
      %v843 = vpop.permute.xlu0 %842
      %844 = vrot.lane.b32.xlu0 %v776, 8
      %v845 = vpop.permute.xlu0 %844
      %846 = vrot.lane.b32.xlu0 %v778, 8
      %v847 = vpop.permute.xlu0 %846
      %848 = vrot.lane.b32.xlu0 %v781, 8
      %v849 = vpop.permute.xlu0 %848
      %850 = vrot.lane.b32.xlu0 %v783, 8
      %v851 = vpop.permute.xlu0 %850
      %852 = vrot.lane.b32.xlu0 %v786, 8
      %v853 = vpop.permute.xlu0 %852
      %854 = vrot.lane.b32.xlu0 %v788, 8
      %v855 = vpop.permute.xlu0 %854
      %856 = vrot.lane.b32.xlu0 %v791, 8
      %v857 = vpop.permute.xlu0 %856
      %858 = vrot.lane.b32.xlu0 %v793, 8
      %v859 = vpop.permute.xlu0 %858
      %860 = vrot.lane.b32.xlu0 %v796, 8
      %v861 = vpop.permute.xlu0 %860
      %862 = vrot.lane.b32.xlu0 %v798, 8
      %v863 = vpop.permute.xlu0 %862
      %864 = vrot.lane.b32.xlu0 %v801, 8
      %v865 = vpop.permute.xlu0 %864
      %866 = vrot.lane.b32.xlu0 %v803, 8
      %v867 = vpop.permute.xlu0 %866
      %vm900 = vcmask 97344
      %901 = vst.msk [vmem:[#allocation4] sm:$0xff] %vm900, %v805
      %902 = vst.msk [vmem:[#allocation4 + $0x18] sm:$0xff] %vm900, %v807
      %903 = vst.msk [vmem:[#allocation4 + $0x30] sm:$0xff] %vm900, %v809
      %904 = vst.msk [vmem:[#allocation4 + $0x48] sm:$0xff] %vm900, %v811
      %905 = vst.msk [vmem:[#allocation4 + $0x60] sm:$0xff] %vm900, %v813
      %906 = vst.msk [vmem:[#allocation4 + $0x78] sm:$0xff] %vm900, %v815
      %907 = vst.msk [vmem:[#allocation4 + $0x90] sm:$0xff] %vm900, %v817
      %908 = vst.msk [vmem:[#allocation4 + $0xa8] sm:$0xff] %vm900, %v819
      %909 = vst.msk [vmem:[#allocation4 + $0xc0] sm:$0xff] %vm900, %v821
      %910 = vst.msk [vmem:[#allocation4 + $0xd8] sm:$0xff] %vm900, %v823
      %911 = vst.msk [vmem:[#allocation4 + $0xf0] sm:$0xff] %vm900, %v825
      %912 = vst.msk [vmem:[#allocation4 + $0x108] sm:$0xff] %vm900, %v827
      %913 = vst.msk [vmem:[#allocation4 + $0x120] sm:$0xff] %vm900, %v829
      %914 = vst.msk [vmem:[#allocation4 + $0x138] sm:$0xff] %vm900, %v831
      %915 = vst.msk [vmem:[#allocation4 + $0x150] sm:$0xff] %vm900, %v833
      %916 = vst.msk [vmem:[#allocation4 + $0x168] sm:$0xff] %vm900, %v835
      %917 = vst.msk [vmem:[#allocation4 + $0x180] sm:$0xff] %vm900, %v837
      %918 = vst.msk [vmem:[#allocation4 + $0x198] sm:$0xff] %vm900, %v839
      %919 = vst.msk [vmem:[#allocation4 + $0x1b0] sm:$0xff] %vm900, %v841
      %920 = vst.msk [vmem:[#allocation4 + $0x1c8] sm:$0xff] %vm900, %v843
      %921 = vst.msk [vmem:[#allocation4 + $0x1e0] sm:$0xff] %vm900, %v845
      %922 = vst.msk [vmem:[#allocation4 + $0x1f8] sm:$0xff] %vm900, %v847
      %923 = vst.msk [vmem:[#allocation4 + $0x210] sm:$0xff] %vm900, %v849
      %924 = vst.msk [vmem:[#allocation4 + $0x228] sm:$0xff] %vm900, %v851
      %925 = vst.msk [vmem:[#allocation4 + $0x240] sm:$0xff] %vm900, %v853
      %926 = vst.msk [vmem:[#allocation4 + $0x258] sm:$0xff] %vm900, %v855
      %927 = vst.msk [vmem:[#allocation4 + $0x270] sm:$0xff] %vm900, %v857
      %928 = vst.msk [vmem:[#allocation4 + $0x288] sm:$0xff] %vm900, %v859
      %929 = vst.msk [vmem:[#allocation4 + $0x2a0] sm:$0xff] %vm900, %v861
      %930 = vst.msk [vmem:[#allocation4 + $0x2b8] sm:$0xff] %vm900, %v863
      %931 = vst.msk [vmem:[#allocation4 + $0x2d0] sm:$0xff] %vm900, %v865
      %932 = vst.msk [vmem:[#allocation4 + $0x2e8] sm:$0xff] %vm900, %v867
      %935 = vrot.lane.b32.xlu0 %v382, 12
      %v936 = vpop.permute.xlu0 %935
      %937 = vrot.lane.b32.xlu0 %v383, 12
      %v938 = vpop.permute.xlu0 %937
      %939 = vrot.lane.b32.xlu0 %v385, 12
      %v940 = vpop.permute.xlu0 %939
      %941 = vrot.lane.b32.xlu0 %v386, 12
      %v942 = vpop.permute.xlu0 %941
      %943 = vrot.lane.b32.xlu0 %v388, 12
      %v944 = vpop.permute.xlu0 %943
      %945 = vrot.lane.b32.xlu0 %v389, 12
      %v946 = vpop.permute.xlu0 %945
      %947 = vrot.lane.b32.xlu0 %v391, 12
      %v948 = vpop.permute.xlu0 %947
      %949 = vrot.lane.b32.xlu0 %v392, 12
      %v950 = vpop.permute.xlu0 %949
      %951 = vrot.lane.b32.xlu0 %v394, 12
      %v952 = vpop.permute.xlu0 %951
      %953 = vrot.lane.b32.xlu0 %v395, 12
      %v954 = vpop.permute.xlu0 %953
      %955 = vrot.lane.b32.xlu0 %v397, 12
      %v956 = vpop.permute.xlu0 %955
      %957 = vrot.lane.b32.xlu0 %v398, 12
      %v958 = vpop.permute.xlu0 %957
      %959 = vrot.lane.b32.xlu0 %v400, 12
      %v960 = vpop.permute.xlu0 %959
      %961 = vrot.lane.b32.xlu0 %v401, 12
      %v962 = vpop.permute.xlu0 %961
      %963 = vrot.lane.b32.xlu0 %v403, 12
      %v964 = vpop.permute.xlu0 %963
      %965 = vrot.lane.b32.xlu0 %v404, 12
      %v966 = vpop.permute.xlu0 %965
      %967 = vrot.lane.b32.xlu0 %v406, 12
      %v968 = vpop.permute.xlu0 %967
      %969 = vrot.lane.b32.xlu0 %v407, 12
      %v970 = vpop.permute.xlu0 %969
      %971 = vrot.lane.b32.xlu0 %v409, 12
      %v972 = vpop.permute.xlu0 %971
      %973 = vrot.lane.b32.xlu0 %v410, 12
      %v974 = vpop.permute.xlu0 %973
      %975 = vrot.lane.b32.xlu0 %v412, 12
      %v976 = vpop.permute.xlu0 %975
      %977 = vrot.lane.b32.xlu0 %v413, 12
      %v978 = vpop.permute.xlu0 %977
      %979 = vrot.lane.b32.xlu0 %v415, 12
      %v980 = vpop.permute.xlu0 %979
      %981 = vrot.lane.b32.xlu0 %v416, 12
      %v982 = vpop.permute.xlu0 %981
      %983 = vrot.lane.b32.xlu0 %v418, 12
      %v984 = vpop.permute.xlu0 %983
      %985 = vrot.lane.b32.xlu0 %v419, 12
      %v986 = vpop.permute.xlu0 %985
      %987 = vrot.lane.b32.xlu0 %v421, 12
      %v988 = vpop.permute.xlu0 %987
      %989 = vrot.lane.b32.xlu0 %v422, 12
      %v990 = vpop.permute.xlu0 %989
      %991 = vrot.lane.b32.xlu0 %v424, 12
      %v992 = vpop.permute.xlu0 %991
      %993 = vrot.lane.b32.xlu0 %v425, 12
      %v994 = vpop.permute.xlu0 %993
      %995 = vrot.lane.b32.xlu0 %v427, 12
      %v996 = vpop.permute.xlu0 %995
      %997 = vrot.lane.b32.xlu0 %v428, 12
      %v998 = vpop.permute.xlu0 %997
      %vm1031 = vcmask 130144
      %1032 = vst.msk [vmem:[#allocation4] sm:$0xff] %vm1031, %v936
      %1033 = vst.msk [vmem:[#allocation4 + $0x18] sm:$0xff] %vm1031, %v938
      %1034 = vst.msk [vmem:[#allocation4 + $0x30] sm:$0xff] %vm1031, %v940
      %1035 = vst.msk [vmem:[#allocation4 + $0x48] sm:$0xff] %vm1031, %v942
      %1036 = vst.msk [vmem:[#allocation4 + $0x60] sm:$0xff] %vm1031, %v944
      %1037 = vst.msk [vmem:[#allocation4 + $0x78] sm:$0xff] %vm1031, %v946
      %1038 = vst.msk [vmem:[#allocation4 + $0x90] sm:$0xff] %vm1031, %v948
      %1039 = vst.msk [vmem:[#allocation4 + $0xa8] sm:$0xff] %vm1031, %v950
      %1040 = vst.msk [vmem:[#allocation4 + $0xc0] sm:$0xff] %vm1031, %v952
      %1041 = vst.msk [vmem:[#allocation4 + $0xd8] sm:$0xff] %vm1031, %v954
      %1042 = vst.msk [vmem:[#allocation4 + $0xf0] sm:$0xff] %vm1031, %v956
      %1043 = vst.msk [vmem:[#allocation4 + $0x108] sm:$0xff] %vm1031, %v958
      %1044 = vst.msk [vmem:[#allocation4 + $0x120] sm:$0xff] %vm1031, %v960
      %1045 = vst.msk [vmem:[#allocation4 + $0x138] sm:$0xff] %vm1031, %v962
      %1046 = vst.msk [vmem:[#allocation4 + $0x150] sm:$0xff] %vm1031, %v964
      %1047 = vst.msk [vmem:[#allocation4 + $0x168] sm:$0xff] %vm1031, %v966
      %1048 = vst.msk [vmem:[#allocation4 + $0x180] sm:$0xff] %vm1031, %v968
      %1049 = vst.msk [vmem:[#allocation4 + $0x198] sm:$0xff] %vm1031, %v970
      %1050 = vst.msk [vmem:[#allocation4 + $0x1b0] sm:$0xff] %vm1031, %v972
      %1051 = vst.msk [vmem:[#allocation4 + $0x1c8] sm:$0xff] %vm1031, %v974
      %1052 = vst.msk [vmem:[#allocation4 + $0x1e0] sm:$0xff] %vm1031, %v976
      %1053 = vst.msk [vmem:[#allocation4 + $0x1f8] sm:$0xff] %vm1031, %v978
      %1054 = vst.msk [vmem:[#allocation4 + $0x210] sm:$0xff] %vm1031, %v980
      %1055 = vst.msk [vmem:[#allocation4 + $0x228] sm:$0xff] %vm1031, %v982
      %1056 = vst.msk [vmem:[#allocation4 + $0x240] sm:$0xff] %vm1031, %v984
      %1057 = vst.msk [vmem:[#allocation4 + $0x258] sm:$0xff] %vm1031, %v986
      %1058 = vst.msk [vmem:[#allocation4 + $0x270] sm:$0xff] %vm1031, %v988
      %1059 = vst.msk [vmem:[#allocation4 + $0x288] sm:$0xff] %vm1031, %v990
      %1060 = vst.msk [vmem:[#allocation4 + $0x2a0] sm:$0xff] %vm1031, %v992
      %1061 = vst.msk [vmem:[#allocation4 + $0x2b8] sm:$0xff] %vm1031, %v994
      %1062 = vst.msk [vmem:[#allocation4 + $0x2d0] sm:$0xff] %vm1031, %v996
      %1063 = vst.msk [vmem:[#allocation4 + $0x2e8] sm:$0xff] %vm1031, %v998
      %v1065 = vrot.slane %v427, 1
      %v1066 = vrot.slane %v428, 1
      %v1067 = vsel %vm513, %v1065, %v1066
      %v1068 = vrot.slane %v429, 1
      %v1069 = vsel %vm513, %v1066, %v1068
      %1102 = vrot.lane.b32.xlu0 %v521, 16
      %v1103 = vpop.permute.xlu0 %1102
      %1104 = vrot.lane.b32.xlu0 %v523, 16
      %v1105 = vpop.permute.xlu0 %1104
      %1106 = vrot.lane.b32.xlu0 %v526, 16
      %v1107 = vpop.permute.xlu0 %1106
      %1108 = vrot.lane.b32.xlu0 %v528, 16
      %v1109 = vpop.permute.xlu0 %1108
      %1110 = vrot.lane.b32.xlu0 %v531, 16
      %v1111 = vpop.permute.xlu0 %1110
      %1112 = vrot.lane.b32.xlu0 %v533, 16
      %v1113 = vpop.permute.xlu0 %1112
      %1114 = vrot.lane.b32.xlu0 %v536, 16
      %v1115 = vpop.permute.xlu0 %1114
      %1116 = vrot.lane.b32.xlu0 %v538, 16
      %v1117 = vpop.permute.xlu0 %1116
      %1118 = vrot.lane.b32.xlu0 %v541, 16
      %v1119 = vpop.permute.xlu0 %1118
      %1120 = vrot.lane.b32.xlu0 %v543, 16
      %v1121 = vpop.permute.xlu0 %1120
      %1122 = vrot.lane.b32.xlu0 %v546, 16
      %v1123 = vpop.permute.xlu0 %1122
      %1124 = vrot.lane.b32.xlu0 %v548, 16
      %v1125 = vpop.permute.xlu0 %1124
      %1126 = vrot.lane.b32.xlu0 %v551, 16
      %v1127 = vpop.permute.xlu0 %1126
      %1128 = vrot.lane.b32.xlu0 %v553, 16
      %v1129 = vpop.permute.xlu0 %1128
      %1130 = vrot.lane.b32.xlu0 %v556, 16
      %v1131 = vpop.permute.xlu0 %1130
      %1132 = vrot.lane.b32.xlu0 %v558, 16
      %v1133 = vpop.permute.xlu0 %1132
      %1134 = vrot.lane.b32.xlu0 %v561, 16
      %v1135 = vpop.permute.xlu0 %1134
      %1136 = vrot.lane.b32.xlu0 %v563, 16
      %v1137 = vpop.permute.xlu0 %1136
      %1138 = vrot.lane.b32.xlu0 %v566, 16
      %v1139 = vpop.permute.xlu0 %1138
      %1140 = vrot.lane.b32.xlu0 %v568, 16
      %v1141 = vpop.permute.xlu0 %1140
      %1142 = vrot.lane.b32.xlu0 %v571, 16
      %v1143 = vpop.permute.xlu0 %1142
      %1144 = vrot.lane.b32.xlu0 %v573, 16
      %v1145 = vpop.permute.xlu0 %1144
      %1146 = vrot.lane.b32.xlu0 %v576, 16
      %v1147 = vpop.permute.xlu0 %1146
      %1148 = vrot.lane.b32.xlu0 %v578, 16
      %v1149 = vpop.permute.xlu0 %1148
      %1150 = vrot.lane.b32.xlu0 %v581, 16
      %v1151 = vpop.permute.xlu0 %1150
      %1152 = vrot.lane.b32.xlu0 %v583, 16
      %v1153 = vpop.permute.xlu0 %1152
      %1154 = vrot.lane.b32.xlu0 %v586, 16
      %v1155 = vpop.permute.xlu0 %1154
      %1156 = vrot.lane.b32.xlu0 %v588, 16
      %v1157 = vpop.permute.xlu0 %1156
      %1158 = vrot.lane.b32.xlu0 %v591, 16
      %v1159 = vpop.permute.xlu0 %1158
      %1160 = vrot.lane.b32.xlu0 %v593, 16
      %v1161 = vpop.permute.xlu0 %1160
      %1162 = vrot.lane.b32.xlu0 %v1067, 16
      %v1163 = vpop.permute.xlu0 %1162
      %1164 = vrot.lane.b32.xlu0 %v1069, 16
      %v1165 = vpop.permute.xlu0 %1164
      %vm1198 = vcmask 162944
      %1199 = vst.msk [vmem:[#allocation4] sm:$0xff] %vm1198, %v1103
      %1200 = vst.msk [vmem:[#allocation4 + $0x18] sm:$0xff] %vm1198, %v1105
      %1201 = vst.msk [vmem:[#allocation4 + $0x30] sm:$0xff] %vm1198, %v1107
      %1202 = vst.msk [vmem:[#allocation4 + $0x48] sm:$0xff] %vm1198, %v1109
      %1203 = vst.msk [vmem:[#allocation4 + $0x60] sm:$0xff] %vm1198, %v1111
      %1204 = vst.msk [vmem:[#allocation4 + $0x78] sm:$0xff] %vm1198, %v1113
      %1205 = vst.msk [vmem:[#allocation4 + $0x90] sm:$0xff] %vm1198, %v1115
      %1206 = vst.msk [vmem:[#allocation4 + $0xa8] sm:$0xff] %vm1198, %v1117
      %1207 = vst.msk [vmem:[#allocation4 + $0xc0] sm:$0xff] %vm1198, %v1119
      %1208 = vst.msk [vmem:[#allocation4 + $0xd8] sm:$0xff] %vm1198, %v1121
      %1209 = vst.msk [vmem:[#allocation4 + $0xf0] sm:$0xff] %vm1198, %v1123
      %1210 = vst.msk [vmem:[#allocation4 + $0x108] sm:$0xff] %vm1198, %v1125
      %1211 = vst.msk [vmem:[#allocation4 + $0x120] sm:$0xff] %vm1198, %v1127
      %1212 = vst.msk [vmem:[#allocation4 + $0x138] sm:$0xff] %vm1198, %v1129
      %1213 = vst.msk [vmem:[#allocation4 + $0x150] sm:$0xff] %vm1198, %v1131
      %1214 = vst.msk [vmem:[#allocation4 + $0x168] sm:$0xff] %vm1198, %v1133
      %1215 = vst.msk [vmem:[#allocation4 + $0x180] sm:$0xff] %vm1198, %v1135
      %1216 = vst.msk [vmem:[#allocation4 + $0x198] sm:$0xff] %vm1198, %v1137
      %1217 = vst.msk [vmem:[#allocation4 + $0x1b0] sm:$0xff] %vm1198, %v1139
      %1218 = vst.msk [vmem:[#allocation4 + $0x1c8] sm:$0xff] %vm1198, %v1141
      %1219 = vst.msk [vmem:[#allocation4 + $0x1e0] sm:$0xff] %vm1198, %v1143
      %1220 = vst.msk [vmem:[#allocation4 + $0x1f8] sm:$0xff] %vm1198, %v1145
      %1221 = vst.msk [vmem:[#allocation4 + $0x210] sm:$0xff] %vm1198, %v1147
      %1222 = vst.msk [vmem:[#allocation4 + $0x228] sm:$0xff] %vm1198, %v1149
      %1223 = vst.msk [vmem:[#allocation4 + $0x240] sm:$0xff] %vm1198, %v1151
      %1224 = vst.msk [vmem:[#allocation4 + $0x258] sm:$0xff] %vm1198, %v1153
      %1225 = vst.msk [vmem:[#allocation4 + $0x270] sm:$0xff] %vm1198, %v1155
      %1226 = vst.msk [vmem:[#allocation4 + $0x288] sm:$0xff] %vm1198, %v1157
      %1227 = vst.msk [vmem:[#allocation4 + $0x2a0] sm:$0xff] %vm1198, %v1159
      %1228 = vst.msk [vmem:[#allocation4 + $0x2b8] sm:$0xff] %vm1198, %v1161
      %1229 = vst.msk [vmem:[#allocation4 + $0x2d0] sm:$0xff] %vm1198, %v1163
      %1230 = vst.msk [vmem:[#allocation4 + $0x2e8] sm:$0xff] %vm1198, %v1165
      %v1231 = vrot.slane %v427, 2
      %v1232 = vrot.slane %v428, 2
      %v1233 = vsel %vm723, %v1231, %v1232
      %v1234 = vrot.slane %v429, 2
      %v1235 = vsel %vm723, %v1232, %v1234
      %1236 = vrot.lane.b32.xlu0 %v731, 20
      %v1237 = vpop.permute.xlu0 %1236
      %1238 = vrot.lane.b32.xlu0 %v733, 20
      %v1239 = vpop.permute.xlu0 %1238
      %1240 = vrot.lane.b32.xlu0 %v736, 20
      %v1241 = vpop.permute.xlu0 %1240
      %1242 = vrot.lane.b32.xlu0 %v738, 20
      %v1243 = vpop.permute.xlu0 %1242
      %1244 = vrot.lane.b32.xlu0 %v741, 20
      %v1245 = vpop.permute.xlu0 %1244
      %1246 = vrot.lane.b32.xlu0 %v743, 20
      %v1247 = vpop.permute.xlu0 %1246
      %1248 = vrot.lane.b32.xlu0 %v746, 20
      %v1249 = vpop.permute.xlu0 %1248
      %1250 = vrot.lane.b32.xlu0 %v748, 20
      %v1251 = vpop.permute.xlu0 %1250
      %1252 = vrot.lane.b32.xlu0 %v751, 20
      %v1253 = vpop.permute.xlu0 %1252
      %1254 = vrot.lane.b32.xlu0 %v753, 20
      %v1255 = vpop.permute.xlu0 %1254
      %1256 = vrot.lane.b32.xlu0 %v756, 20
      %v1257 = vpop.permute.xlu0 %1256
      %1258 = vrot.lane.b32.xlu0 %v758, 20
      %v1259 = vpop.permute.xlu0 %1258
      %1260 = vrot.lane.b32.xlu0 %v761, 20
      %v1261 = vpop.permute.xlu0 %1260
      %1262 = vrot.lane.b32.xlu0 %v763, 20
      %v1263 = vpop.permute.xlu0 %1262
      %1264 = vrot.lane.b32.xlu0 %v766, 20
      %v1265 = vpop.permute.xlu0 %1264
      %1266 = vrot.lane.b32.xlu0 %v768, 20
      %v1267 = vpop.permute.xlu0 %1266
      %1268 = vrot.lane.b32.xlu0 %v771, 20
      %v1269 = vpop.permute.xlu0 %1268
      %1270 = vrot.lane.b32.xlu0 %v773, 20
      %v1271 = vpop.permute.xlu0 %1270
      %1272 = vrot.lane.b32.xlu0 %v776, 20
      %v1273 = vpop.permute.xlu0 %1272
      %1274 = vrot.lane.b32.xlu0 %v778, 20
      %v1275 = vpop.permute.xlu0 %1274
      %1276 = vrot.lane.b32.xlu0 %v781, 20
      %v1277 = vpop.permute.xlu0 %1276
      %1278 = vrot.lane.b32.xlu0 %v783, 20
      %v1279 = vpop.permute.xlu0 %1278
      %1280 = vrot.lane.b32.xlu0 %v786, 20
      %v1281 = vpop.permute.xlu0 %1280
      %1282 = vrot.lane.b32.xlu0 %v788, 20
      %v1283 = vpop.permute.xlu0 %1282
      %1284 = vrot.lane.b32.xlu0 %v791, 20
      %v1285 = vpop.permute.xlu0 %1284
      %1286 = vrot.lane.b32.xlu0 %v793, 20
      %v1287 = vpop.permute.xlu0 %1286
      %1288 = vrot.lane.b32.xlu0 %v796, 20
      %v1289 = vpop.permute.xlu0 %1288
      %1290 = vrot.lane.b32.xlu0 %v798, 20
      %v1291 = vpop.permute.xlu0 %1290
      %1292 = vrot.lane.b32.xlu0 %v801, 20
      %v1293 = vpop.permute.xlu0 %1292
      %1294 = vrot.lane.b32.xlu0 %v803, 20
      %v1295 = vpop.permute.xlu0 %1294
      %1296 = vrot.lane.b32.xlu0 %v1233, 20
      %v1297 = vpop.permute.xlu0 %1296
      %1298 = vrot.lane.b32.xlu0 %v1235, 20
      %v1299 = vpop.permute.xlu0 %1298
      %vm1332 = vcmask 195744
      %1333 = vst.msk [vmem:[#allocation4] sm:$0xff] %vm1332, %v1237
      %1334 = vst.msk [vmem:[#allocation4 + $0x18] sm:$0xff] %vm1332, %v1239
      %1335 = vst.msk [vmem:[#allocation4 + $0x30] sm:$0xff] %vm1332, %v1241
      %1336 = vst.msk [vmem:[#allocation4 + $0x48] sm:$0xff] %vm1332, %v1243
      %1337 = vst.msk [vmem:[#allocation4 + $0x60] sm:$0xff] %vm1332, %v1245
      %1338 = vst.msk [vmem:[#allocation4 + $0x78] sm:$0xff] %vm1332, %v1247
      %1339 = vst.msk [vmem:[#allocation4 + $0x90] sm:$0xff] %vm1332, %v1249
      %1340 = vst.msk [vmem:[#allocation4 + $0xa8] sm:$0xff] %vm1332, %v1251
      %1341 = vst.msk [vmem:[#allocation4 + $0xc0] sm:$0xff] %vm1332, %v1253
      %1342 = vst.msk [vmem:[#allocation4 + $0xd8] sm:$0xff] %vm1332, %v1255
      %1343 = vst.msk [vmem:[#allocation4 + $0xf0] sm:$0xff] %vm1332, %v1257
      %1344 = vst.msk [vmem:[#allocation4 + $0x108] sm:$0xff] %vm1332, %v1259
      %1345 = vst.msk [vmem:[#allocation4 + $0x120] sm:$0xff] %vm1332, %v1261
      %1346 = vst.msk [vmem:[#allocation4 + $0x138] sm:$0xff] %vm1332, %v1263
      %1347 = vst.msk [vmem:[#allocation4 + $0x150] sm:$0xff] %vm1332, %v1265
      %1348 = vst.msk [vmem:[#allocation4 + $0x168] sm:$0xff] %vm1332, %v1267
      %1349 = vst.msk [vmem:[#allocation4 + $0x180] sm:$0xff] %vm1332, %v1269
      %1350 = vst.msk [vmem:[#allocation4 + $0x198] sm:$0xff] %vm1332, %v1271
      %1351 = vst.msk [vmem:[#allocation4 + $0x1b0] sm:$0xff] %vm1332, %v1273
      %1352 = vst.msk [vmem:[#allocation4 + $0x1c8] sm:$0xff] %vm1332, %v1275
      %1353 = vst.msk [vmem:[#allocation4 + $0x1e0] sm:$0xff] %vm1332, %v1277
      %1354 = vst.msk [vmem:[#allocation4 + $0x1f8] sm:$0xff] %vm1332, %v1279
      %1355 = vst.msk [vmem:[#allocation4 + $0x210] sm:$0xff] %vm1332, %v1281
      %1356 = vst.msk [vmem:[#allocation4 + $0x228] sm:$0xff] %vm1332, %v1283
      %1357 = vst.msk [vmem:[#allocation4 + $0x240] sm:$0xff] %vm1332, %v1285
      %1358 = vst.msk [vmem:[#allocation4 + $0x258] sm:$0xff] %vm1332, %v1287
      %1359 = vst.msk [vmem:[#allocation4 + $0x270] sm:$0xff] %vm1332, %v1289
      %1360 = vst.msk [vmem:[#allocation4 + $0x288] sm:$0xff] %vm1332, %v1291
      %1361 = vst.msk [vmem:[#allocation4 + $0x2a0] sm:$0xff] %vm1332, %v1293
      %1362 = vst.msk [vmem:[#allocation4 + $0x2b8] sm:$0xff] %vm1332, %v1295
      %1363 = vst.msk [vmem:[#allocation4 + $0x2d0] sm:$0xff] %vm1332, %v1297
      %1364 = vst.msk [vmem:[#allocation4 + $0x2e8] sm:$0xff] %vm1332, %v1299
      %1367 = vrot.lane.b32.xlu0 %v385, 24
      %v1368 = vpop.permute.xlu0 %1367
      %1369 = vrot.lane.b32.xlu0 %v386, 24
      %v1370 = vpop.permute.xlu0 %1369
      %1371 = vrot.lane.b32.xlu0 %v388, 24
      %v1372 = vpop.permute.xlu0 %1371
      %1373 = vrot.lane.b32.xlu0 %v389, 24
      %v1374 = vpop.permute.xlu0 %1373
      %1375 = vrot.lane.b32.xlu0 %v391, 24
      %v1376 = vpop.permute.xlu0 %1375
      %1377 = vrot.lane.b32.xlu0 %v392, 24
      %v1378 = vpop.permute.xlu0 %1377
      %1379 = vrot.lane.b32.xlu0 %v394, 24
      %v1380 = vpop.permute.xlu0 %1379
      %1381 = vrot.lane.b32.xlu0 %v395, 24
      %v1382 = vpop.permute.xlu0 %1381
      %1383 = vrot.lane.b32.xlu0 %v397, 24
      %v1384 = vpop.permute.xlu0 %1383
      %1385 = vrot.lane.b32.xlu0 %v398, 24
      %v1386 = vpop.permute.xlu0 %1385
      %1387 = vrot.lane.b32.xlu0 %v400, 24
      %v1388 = vpop.permute.xlu0 %1387
      %1389 = vrot.lane.b32.xlu0 %v401, 24
      %v1390 = vpop.permute.xlu0 %1389
      %1391 = vrot.lane.b32.xlu0 %v403, 24
      %v1392 = vpop.permute.xlu0 %1391
      %1393 = vrot.lane.b32.xlu0 %v404, 24
      %v1394 = vpop.permute.xlu0 %1393
      %1395 = vrot.lane.b32.xlu0 %v406, 24
      %v1396 = vpop.permute.xlu0 %1395
      %1397 = vrot.lane.b32.xlu0 %v407, 24
      %v1398 = vpop.permute.xlu0 %1397
      %1399 = vrot.lane.b32.xlu0 %v409, 24
      %v1400 = vpop.permute.xlu0 %1399
      %1401 = vrot.lane.b32.xlu0 %v410, 24
      %v1402 = vpop.permute.xlu0 %1401
      %1403 = vrot.lane.b32.xlu0 %v412, 24
      %v1404 = vpop.permute.xlu0 %1403
      %1405 = vrot.lane.b32.xlu0 %v413, 24
      %v1406 = vpop.permute.xlu0 %1405
      %1407 = vrot.lane.b32.xlu0 %v415, 24
      %v1408 = vpop.permute.xlu0 %1407
      %1409 = vrot.lane.b32.xlu0 %v416, 24
      %v1410 = vpop.permute.xlu0 %1409
      %1411 = vrot.lane.b32.xlu0 %v418, 24
      %v1412 = vpop.permute.xlu0 %1411
      %1413 = vrot.lane.b32.xlu0 %v419, 24
      %v1414 = vpop.permute.xlu0 %1413
      %1415 = vrot.lane.b32.xlu0 %v421, 24
      %v1416 = vpop.permute.xlu0 %1415
      %1417 = vrot.lane.b32.xlu0 %v422, 24
      %v1418 = vpop.permute.xlu0 %1417
      %1419 = vrot.lane.b32.xlu0 %v424, 24
      %v1420 = vpop.permute.xlu0 %1419
      %1421 = vrot.lane.b32.xlu0 %v425, 24
      %v1422 = vpop.permute.xlu0 %1421
      %1423 = vrot.lane.b32.xlu0 %v427, 24
      %v1424 = vpop.permute.xlu0 %1423
      %1425 = vrot.lane.b32.xlu0 %v428, 24
      %v1426 = vpop.permute.xlu0 %1425
      %1427 = vrot.lane.b32.xlu0 %v430, 24
      %v1428 = vpop.permute.xlu0 %1427
      %1429 = vrot.lane.b32.xlu0 %v431, 24
      %v1430 = vpop.permute.xlu0 %1429
      %vm1463 = vcmask 228544
      %1464 = vst.msk [vmem:[#allocation4] sm:$0xff] %vm1463, %v1368
      %1465 = vst.msk [vmem:[#allocation4 + $0x18] sm:$0xff] %vm1463, %v1370
      %1466 = vst.msk [vmem:[#allocation4 + $0x30] sm:$0xff] %vm1463, %v1372
      %1467 = vst.msk [vmem:[#allocation4 + $0x48] sm:$0xff] %vm1463, %v1374
      %1468 = vst.msk [vmem:[#allocation4 + $0x60] sm:$0xff] %vm1463, %v1376
      %1469 = vst.msk [vmem:[#allocation4 + $0x78] sm:$0xff] %vm1463, %v1378
      %1470 = vst.msk [vmem:[#allocation4 + $0x90] sm:$0xff] %vm1463, %v1380
      %1471 = vst.msk [vmem:[#allocation4 + $0xa8] sm:$0xff] %vm1463, %v1382
      %1472 = vst.msk [vmem:[#allocation4 + $0xc0] sm:$0xff] %vm1463, %v1384
      %1473 = vst.msk [vmem:[#allocation4 + $0xd8] sm:$0xff] %vm1463, %v1386
      %1474 = vst.msk [vmem:[#allocation4 + $0xf0] sm:$0xff] %vm1463, %v1388
      %1475 = vst.msk [vmem:[#allocation4 + $0x108] sm:$0xff] %vm1463, %v1390
      %1476 = vst.msk [vmem:[#allocation4 + $0x120] sm:$0xff] %vm1463, %v1392
      %1477 = vst.msk [vmem:[#allocation4 + $0x138] sm:$0xff] %vm1463, %v1394
      %1478 = vst.msk [vmem:[#allocation4 + $0x150] sm:$0xff] %vm1463, %v1396
      %1479 = vst.msk [vmem:[#allocation4 + $0x168] sm:$0xff] %vm1463, %v1398
      %1480 = vst.msk [vmem:[#allocation4 + $0x180] sm:$0xff] %vm1463, %v1400
      %1481 = vst.msk [vmem:[#allocation4 + $0x198] sm:$0xff] %vm1463, %v1402
      %1482 = vst.msk [vmem:[#allocation4 + $0x1b0] sm:$0xff] %vm1463, %v1404
      %1483 = vst.msk [vmem:[#allocation4 + $0x1c8] sm:$0xff] %vm1463, %v1406
      %1484 = vst.msk [vmem:[#allocation4 + $0x1e0] sm:$0xff] %vm1463, %v1408
      %1485 = vst.msk [vmem:[#allocation4 + $0x1f8] sm:$0xff] %vm1463, %v1410
      %1486 = vst.msk [vmem:[#allocation4 + $0x210] sm:$0xff] %vm1463, %v1412
      %1487 = vst.msk [vmem:[#allocation4 + $0x228] sm:$0xff] %vm1463, %v1414
      %1488 = vst.msk [vmem:[#allocation4 + $0x240] sm:$0xff] %vm1463, %v1416
      %1489 = vst.msk [vmem:[#allocation4 + $0x258] sm:$0xff] %vm1463, %v1418
      %1490 = vst.msk [vmem:[#allocation4 + $0x270] sm:$0xff] %vm1463, %v1420
      %1491 = vst.msk [vmem:[#allocation4 + $0x288] sm:$0xff] %vm1463, %v1422
      %1492 = vst.msk [vmem:[#allocation4 + $0x2a0] sm:$0xff] %vm1463, %v1424
      %1493 = vst.msk [vmem:[#allocation4 + $0x2b8] sm:$0xff] %vm1463, %v1426
      %1494 = vst.msk [vmem:[#allocation4 + $0x2d0] sm:$0xff] %vm1463, %v1428
      %1495 = vst.msk [vmem:[#allocation4 + $0x2e8] sm:$0xff] %vm1463, %v1430
      %v1497 = vrot.slane %v430, 1
      %v1498 = vrot.slane %v431, 1
      %v1499 = vsel %vm513, %v1497, %v1498
      %v1500 = vrot.slane %v432, 1
      %v1501 = vsel %vm513, %v1498, %v1500
      %1502 = vrot.lane.b32.xlu0 %v526, 28
      %v1503 = vpop.permute.xlu0 %1502
      %1504 = vrot.lane.b32.xlu0 %v528, 28
      %v1505 = vpop.permute.xlu0 %1504
      %1506 = vrot.lane.b32.xlu0 %v531, 28
      %v1507 = vpop.permute.xlu0 %1506
      %1508 = vrot.lane.b32.xlu0 %v533, 28
      %v1509 = vpop.permute.xlu0 %1508
      %1510 = vrot.lane.b32.xlu0 %v536, 28
      %v1511 = vpop.permute.xlu0 %1510
      %1512 = vrot.lane.b32.xlu0 %v538, 28
      %v1513 = vpop.permute.xlu0 %1512
      %1514 = vrot.lane.b32.xlu0 %v541, 28
      %v1515 = vpop.permute.xlu0 %1514
      %1516 = vrot.lane.b32.xlu0 %v543, 28
      %v1517 = vpop.permute.xlu0 %1516
      %1518 = vrot.lane.b32.xlu0 %v546, 28
      %v1519 = vpop.permute.xlu0 %1518
      %1520 = vrot.lane.b32.xlu0 %v548, 28
      %v1521 = vpop.permute.xlu0 %1520
      %1522 = vrot.lane.b32.xlu0 %v551, 28
      %v1523 = vpop.permute.xlu0 %1522
      %1524 = vrot.lane.b32.xlu0 %v553, 28
      %v1525 = vpop.permute.xlu0 %1524
      %1526 = vrot.lane.b32.xlu0 %v556, 28
      %v1527 = vpop.permute.xlu0 %1526
      %1528 = vrot.lane.b32.xlu0 %v558, 28
      %v1529 = vpop.permute.xlu0 %1528
      %1530 = vrot.lane.b32.xlu0 %v561, 28
      %v1531 = vpop.permute.xlu0 %1530
      %1532 = vrot.lane.b32.xlu0 %v563, 28
      %v1533 = vpop.permute.xlu0 %1532
      %1534 = vrot.lane.b32.xlu0 %v566, 28
      %v1535 = vpop.permute.xlu0 %1534
      %1536 = vrot.lane.b32.xlu0 %v568, 28
      %v1537 = vpop.permute.xlu0 %1536
      %1538 = vrot.lane.b32.xlu0 %v571, 28
      %v1539 = vpop.permute.xlu0 %1538
      %1540 = vrot.lane.b32.xlu0 %v573, 28
      %v1541 = vpop.permute.xlu0 %1540
      %1542 = vrot.lane.b32.xlu0 %v576, 28
      %v1543 = vpop.permute.xlu0 %1542
      %1544 = vrot.lane.b32.xlu0 %v578, 28
      %v1545 = vpop.permute.xlu0 %1544
      %1546 = vrot.lane.b32.xlu0 %v581, 28
      %v1547 = vpop.permute.xlu0 %1546
      %1548 = vrot.lane.b32.xlu0 %v583, 28
      %v1549 = vpop.permute.xlu0 %1548
      %1550 = vrot.lane.b32.xlu0 %v586, 28
      %v1551 = vpop.permute.xlu0 %1550
      %1552 = vrot.lane.b32.xlu0 %v588, 28
      %v1553 = vpop.permute.xlu0 %1552
      %1554 = vrot.lane.b32.xlu0 %v591, 28
      %v1555 = vpop.permute.xlu0 %1554
      %1556 = vrot.lane.b32.xlu0 %v593, 28
      %v1557 = vpop.permute.xlu0 %1556
      %1558 = vrot.lane.b32.xlu0 %v1067, 28
      %v1559 = vpop.permute.xlu0 %1558
      %1560 = vrot.lane.b32.xlu0 %v1069, 28
      %v1561 = vpop.permute.xlu0 %1560
      %1562 = vrot.lane.b32.xlu0 %v1499, 28
      %v1563 = vpop.permute.xlu0 %1562
      %1564 = vrot.lane.b32.xlu0 %v1501, 28
      %v1565 = vpop.permute.xlu0 %1564
      %vm1598 = vcmask 261344
      %1599 = vst.msk [vmem:[#allocation4] sm:$0xff] %vm1598, %v1503
      %1600 = vst.msk [vmem:[#allocation4 + $0x18] sm:$0xff] %vm1598, %v1505
      %1601 = vst.msk [vmem:[#allocation4 + $0x30] sm:$0xff] %vm1598, %v1507
      %1602 = vst.msk [vmem:[#allocation4 + $0x48] sm:$0xff] %vm1598, %v1509
      %1603 = vst.msk [vmem:[#allocation4 + $0x60] sm:$0xff] %vm1598, %v1511
      %1604 = vst.msk [vmem:[#allocation4 + $0x78] sm:$0xff] %vm1598, %v1513
      %1605 = vst.msk [vmem:[#allocation4 + $0x90] sm:$0xff] %vm1598, %v1515
      %1606 = vst.msk [vmem:[#allocation4 + $0xa8] sm:$0xff] %vm1598, %v1517
      %1607 = vst.msk [vmem:[#allocation4 + $0xc0] sm:$0xff] %vm1598, %v1519
      %1608 = vst.msk [vmem:[#allocation4 + $0xd8] sm:$0xff] %vm1598, %v1521
      %1609 = vst.msk [vmem:[#allocation4 + $0xf0] sm:$0xff] %vm1598, %v1523
      %1610 = vst.msk [vmem:[#allocation4 + $0x108] sm:$0xff] %vm1598, %v1525
      %1611 = vst.msk [vmem:[#allocation4 + $0x120] sm:$0xff] %vm1598, %v1527
      %1612 = vst.msk [vmem:[#allocation4 + $0x138] sm:$0xff] %vm1598, %v1529
      %1613 = vst.msk [vmem:[#allocation4 + $0x150] sm:$0xff] %vm1598, %v1531
      %1614 = vst.msk [vmem:[#allocation4 + $0x168] sm:$0xff] %vm1598, %v1533
      %1615 = vst.msk [vmem:[#allocation4 + $0x180] sm:$0xff] %vm1598, %v1535
      %1616 = vst.msk [vmem:[#allocation4 + $0x198] sm:$0xff] %vm1598, %v1537
      %1617 = vst.msk [vmem:[#allocation4 + $0x1b0] sm:$0xff] %vm1598, %v1539
      %1618 = vst.msk [vmem:[#allocation4 + $0x1c8] sm:$0xff] %vm1598, %v1541
      %1619 = vst.msk [vmem:[#allocation4 + $0x1e0] sm:$0xff] %vm1598, %v1543
      %1620 = vst.msk [vmem:[#allocation4 + $0x1f8] sm:$0xff] %vm1598, %v1545
      %1621 = vst.msk [vmem:[#allocation4 + $0x210] sm:$0xff] %vm1598, %v1547
      %1622 = vst.msk [vmem:[#allocation4 + $0x228] sm:$0xff] %vm1598, %v1549
      %1623 = vst.msk [vmem:[#allocation4 + $0x240] sm:$0xff] %vm1598, %v1551
      %1624 = vst.msk [vmem:[#allocation4 + $0x258] sm:$0xff] %vm1598, %v1553
      %1625 = vst.msk [vmem:[#allocation4 + $0x270] sm:$0xff] %vm1598, %v1555
      %1626 = vst.msk [vmem:[#allocation4 + $0x288] sm:$0xff] %vm1598, %v1557
      %1627 = vst.msk [vmem:[#allocation4 + $0x2a0] sm:$0xff] %vm1598, %v1559
      %1628 = vst.msk [vmem:[#allocation4 + $0x2b8] sm:$0xff] %vm1598, %v1561
      %1629 = vst.msk [vmem:[#allocation4 + $0x2d0] sm:$0xff] %vm1598, %v1563
      %1630 = vst.msk [vmem:[#allocation4 + $0x2e8] sm:$0xff] %vm1598, %v1565
      %v1631 = vrot.slane %v430, 2
      %v1632 = vrot.slane %v431, 2
      %v1633 = vsel %vm723, %v1631, %v1632
      %v1634 = vrot.slane %v432, 2
      %v1635 = vsel %vm723, %v1632, %v1634
      %1636 = vrot.lane.b32.xlu0 %v736, 32
      %v1637 = vpop.permute.xlu0 %1636
      %1638 = vrot.lane.b32.xlu0 %v738, 32
      %v1639 = vpop.permute.xlu0 %1638
      %1640 = vrot.lane.b32.xlu0 %v741, 32
      %v1641 = vpop.permute.xlu0 %1640
      %1642 = vrot.lane.b32.xlu0 %v743, 32
      %v1643 = vpop.permute.xlu0 %1642
      %1644 = vrot.lane.b32.xlu0 %v746, 32
      %v1645 = vpop.permute.xlu0 %1644
      %1646 = vrot.lane.b32.xlu0 %v748, 32
      %v1647 = vpop.permute.xlu0 %1646
      %1648 = vrot.lane.b32.xlu0 %v751, 32
      %v1649 = vpop.permute.xlu0 %1648
      %1650 = vrot.lane.b32.xlu0 %v753, 32
      %v1651 = vpop.permute.xlu0 %1650
      %1652 = vrot.lane.b32.xlu0 %v756, 32
      %v1653 = vpop.permute.xlu0 %1652
      %1654 = vrot.lane.b32.xlu0 %v758, 32
      %v1655 = vpop.permute.xlu0 %1654
      %1656 = vrot.lane.b32.xlu0 %v761, 32
      %v1657 = vpop.permute.xlu0 %1656
      %1658 = vrot.lane.b32.xlu0 %v763, 32
      %v1659 = vpop.permute.xlu0 %1658
      %1660 = vrot.lane.b32.xlu0 %v766, 32
      %v1661 = vpop.permute.xlu0 %1660
      %1662 = vrot.lane.b32.xlu0 %v768, 32
      %v1663 = vpop.permute.xlu0 %1662
      %1664 = vrot.lane.b32.xlu0 %v771, 32
      %v1665 = vpop.permute.xlu0 %1664
      %1666 = vrot.lane.b32.xlu0 %v773, 32
      %v1667 = vpop.permute.xlu0 %1666
      %1668 = vrot.lane.b32.xlu0 %v776, 32
      %v1669 = vpop.permute.xlu0 %1668
      %1670 = vrot.lane.b32.xlu0 %v778, 32
      %v1671 = vpop.permute.xlu0 %1670
      %1672 = vrot.lane.b32.xlu0 %v781, 32
      %v1673 = vpop.permute.xlu0 %1672
      %1674 = vrot.lane.b32.xlu0 %v783, 32
      %v1675 = vpop.permute.xlu0 %1674
      %1676 = vrot.lane.b32.xlu0 %v786, 32
      %v1677 = vpop.permute.xlu0 %1676
      %1678 = vrot.lane.b32.xlu0 %v788, 32
      %v1679 = vpop.permute.xlu0 %1678
      %1680 = vrot.lane.b32.xlu0 %v791, 32
      %v1681 = vpop.permute.xlu0 %1680
      %1682 = vrot.lane.b32.xlu0 %v793, 32
      %v1683 = vpop.permute.xlu0 %1682
      %1684 = vrot.lane.b32.xlu0 %v796, 32
      %v1685 = vpop.permute.xlu0 %1684
      %1686 = vrot.lane.b32.xlu0 %v798, 32
      %v1687 = vpop.permute.xlu0 %1686
      %1688 = vrot.lane.b32.xlu0 %v801, 32
      %v1689 = vpop.permute.xlu0 %1688
      %1690 = vrot.lane.b32.xlu0 %v803, 32
      %v1691 = vpop.permute.xlu0 %1690
      %1692 = vrot.lane.b32.xlu0 %v1233, 32
      %v1693 = vpop.permute.xlu0 %1692
      %1694 = vrot.lane.b32.xlu0 %v1235, 32
      %v1695 = vpop.permute.xlu0 %1694
      %1696 = vrot.lane.b32.xlu0 %v1633, 32
      %v1697 = vpop.permute.xlu0 %1696
      %1698 = vrot.lane.b32.xlu0 %v1635, 32
      %v1699 = vpop.permute.xlu0 %1698
      %vm1732 = vcmask 294144
      %1733 = vst.msk [vmem:[#allocation4] sm:$0xff] %vm1732, %v1637
      %1734 = vst.msk [vmem:[#allocation4 + $0x18] sm:$0xff] %vm1732, %v1639
      %1735 = vst.msk [vmem:[#allocation4 + $0x30] sm:$0xff] %vm1732, %v1641
      %1736 = vst.msk [vmem:[#allocation4 + $0x48] sm:$0xff] %vm1732, %v1643
      %1737 = vst.msk [vmem:[#allocation4 + $0x60] sm:$0xff] %vm1732, %v1645
      %1738 = vst.msk [vmem:[#allocation4 + $0x78] sm:$0xff] %vm1732, %v1647
      %1739 = vst.msk [vmem:[#allocation4 + $0x90] sm:$0xff] %vm1732, %v1649
      %1740 = vst.msk [vmem:[#allocation4 + $0xa8] sm:$0xff] %vm1732, %v1651
      %1741 = vst.msk [vmem:[#allocation4 + $0xc0] sm:$0xff] %vm1732, %v1653
      %1742 = vst.msk [vmem:[#allocation4 + $0xd8] sm:$0xff] %vm1732, %v1655
      %1743 = vst.msk [vmem:[#allocation4 + $0xf0] sm:$0xff] %vm1732, %v1657
      %1744 = vst.msk [vmem:[#allocation4 + $0x108] sm:$0xff] %vm1732, %v1659
      %1745 = vst.msk [vmem:[#allocation4 + $0x120] sm:$0xff] %vm1732, %v1661
      %1746 = vst.msk [vmem:[#allocation4 + $0x138] sm:$0xff] %vm1732, %v1663
      %1747 = vst.msk [vmem:[#allocation4 + $0x150] sm:$0xff] %vm1732, %v1665
      %1748 = vst.msk [vmem:[#allocation4 + $0x168] sm:$0xff] %vm1732, %v1667
      %1749 = vst.msk [vmem:[#allocation4 + $0x180] sm:$0xff] %vm1732, %v1669
      %1750 = vst.msk [vmem:[#allocation4 + $0x198] sm:$0xff] %vm1732, %v1671
      %1751 = vst.msk [vmem:[#allocation4 + $0x1b0] sm:$0xff] %vm1732, %v1673
      %1752 = vst.msk [vmem:[#allocation4 + $0x1c8] sm:$0xff] %vm1732, %v1675
      %1753 = vst.msk [vmem:[#allocation4 + $0x1e0] sm:$0xff] %vm1732, %v1677
      %1754 = vst.msk [vmem:[#allocation4 + $0x1f8] sm:$0xff] %vm1732, %v1679
      %1755 = vst.msk [vmem:[#allocation4 + $0x210] sm:$0xff] %vm1732, %v1681
      %1756 = vst.msk [vmem:[#allocation4 + $0x228] sm:$0xff] %vm1732, %v1683
      %1757 = vst.msk [vmem:[#allocation4 + $0x240] sm:$0xff] %vm1732, %v1685
      %1758 = vst.msk [vmem:[#allocation4 + $0x258] sm:$0xff] %vm1732, %v1687
      %1759 = vst.msk [vmem:[#allocation4 + $0x270] sm:$0xff] %vm1732, %v1689
      %1760 = vst.msk [vmem:[#allocation4 + $0x288] sm:$0xff] %vm1732, %v1691
      %1761 = vst.msk [vmem:[#allocation4 + $0x2a0] sm:$0xff] %vm1732, %v1693
      %1762 = vst.msk [vmem:[#allocation4 + $0x2b8] sm:$0xff] %vm1732, %v1695
      %1763 = vst.msk [vmem:[#allocation4 + $0x2d0] sm:$0xff] %vm1732, %v1697
      %1764 = vst.msk [vmem:[#allocation4 + $0x2e8] sm:$0xff] %vm1732, %v1699
      %v1765 = vld [vmem:[#allocation4] sm:$0xff]
      %v1766 = vld [vmem:[#allocation4 + $0x18] sm:$0xff]
      %v1767 = vld [vmem:[#allocation4 + $0x30] sm:$0xff]
      %v1768 = vld [vmem:[#allocation4 + $0x48] sm:$0xff]
      %v1769 = vld [vmem:[#allocation4 + $0x60] sm:$0xff]
      %v1770 = vld [vmem:[#allocation4 + $0x78] sm:$0xff]
      %v1771 = vld [vmem:[#allocation4 + $0x90] sm:$0xff]
      %v1772 = vld [vmem:[#allocation4 + $0xa8] sm:$0xff]
      %v1773 = vld [vmem:[#allocation4 + $0xc0] sm:$0xff]
      %v1774 = vld [vmem:[#allocation4 + $0xd8] sm:$0xff]
      %v1775 = vld [vmem:[#allocation4 + $0xf0] sm:$0xff]
      %v1776 = vld [vmem:[#allocation4 + $0x108] sm:$0xff]
      %v1777 = vld [vmem:[#allocation4 + $0x120] sm:$0xff]
      %v1778 = vld [vmem:[#allocation4 + $0x138] sm:$0xff]
      %v1779 = vld [vmem:[#allocation4 + $0x150] sm:$0xff]
      %v1780 = vld [vmem:[#allocation4 + $0x168] sm:$0xff]
      %v1781 = vld [vmem:[#allocation4 + $0x180] sm:$0xff]
      %v1782 = vld [vmem:[#allocation4 + $0x198] sm:$0xff]
      %v1783 = vld [vmem:[#allocation4 + $0x1b0] sm:$0xff]
      %v1784 = vld [vmem:[#allocation4 + $0x1c8] sm:$0xff]
      %v1785 = vld [vmem:[#allocation4 + $0x1e0] sm:$0xff]
      %v1786 = vld [vmem:[#allocation4 + $0x1f8] sm:$0xff]
      %v1787 = vld [vmem:[#allocation4 + $0x210] sm:$0xff]
      %v1788 = vld [vmem:[#allocation4 + $0x228] sm:$0xff]
      %v1789 = vld [vmem:[#allocation4 + $0x240] sm:$0xff]
      %v1790 = vld [vmem:[#allocation4 + $0x258] sm:$0xff]
      %v1791 = vld [vmem:[#allocation4 + $0x270] sm:$0xff]
      %v1792 = vld [vmem:[#allocation4 + $0x288] sm:$0xff]
      %v1793 = vld [vmem:[#allocation4 + $0x2a0] sm:$0xff]
      %v1794 = vld [vmem:[#allocation4 + $0x2b8] sm:$0xff]
      %v1795 = vld [vmem:[#allocation4 + $0x2d0] sm:$0xff]
      %v1796 = vld [vmem:[#allocation4 + $0x2e8] sm:$0xff]
      %v1797 = vpack.c.bf16 %v1766, %v1765
      %v1798 = vpack.c.bf16 %v1768, %v1767
      %v1799 = vpack.c.bf16 %v1770, %v1769
      %v1800 = vpack.c.bf16 %v1772, %v1771
      %v1801 = vpack.c.bf16 %v1774, %v1773
      %v1802 = vpack.c.bf16 %v1776, %v1775
      %v1803 = vpack.c.bf16 %v1778, %v1777
      %v1804 = vpack.c.bf16 %v1780, %v1779
      %v1805 = vpack.c.bf16 %v1782, %v1781
      %v1806 = vpack.c.bf16 %v1784, %v1783
      %v1807 = vpack.c.bf16 %v1786, %v1785
      %v1808 = vpack.c.bf16 %v1788, %v1787
      %v1809 = vpack.c.bf16 %v1790, %v1789
      %v1810 = vpack.c.bf16 %v1792, %v1791
      %v1811 = vpack.c.bf16 %v1794, %v1793
      %v1812 = vpack.c.bf16 %v1796, %v1795
      %v1813 = vld [vmem:[%s1] sm:$0xf]
      %v1814 = vld [vmem:[%s1 + $0x4] sm:$0xf]
      %v1815 = vld [vmem:[%s1 + $0x8] sm:$0xf]
      %v1816 = vld [vmem:[%s1 + $0xc] sm:$0xf]
      %v1817 = vld [vmem:[%s1 + $0x10] sm:$0x3]
      %v1823 = vunpack.c.l.b16 %v1813
      %v1824 = vunpack.c.l.b16 %v1814
      %v1825 = vunpack.c.l.b16 %v1815
      %v1826 = vunpack.c.l.b16 %v1816
      %v1827 = vunpack.c.l.b16 %v1817
      %v1828 = vpack.c.b16 %v1824, %v1823
      %v1829 = vpack.c.b16 %v1826, %v1825
      %v1830 = vpack.c.b16 %v1827, %v1827
      %vm1833 = vcmask 293888
      %v1835 = vsel %vm1833, %v1797, 0
      %v1838 = vsel %vm1833, %v1798, 0
      %v1841 = vsel %vm1833, %v1799, 0
      %v1844 = vsel %vm1833, %v1800, 0
      %v1847 = vsel %vm1833, %v1801, 0
      %v1850 = vsel %vm1833, %v1802, 0
      %v1853 = vsel %vm1833, %v1803, 0
      %v1856 = vsel %vm1833, %v1804, 0
      %v1859 = vsel %vm1833, %v1805, 0
      %v1862 = vsel %vm1833, %v1806, 0
      %v1865 = vsel %vm1833, %v1807, 0
      %v1868 = vsel %vm1833, %v1808, 0
      %v1871 = vsel %vm1833, %v1809, 0
      %v1874 = vsel %vm1833, %v1810, 0
      %v1877 = vsel %vm1833, %v1811, 0
      %v1880 = vsel %vm1833, %v1812, 0
      %vm1882 = vcmask 1041408
      %v1884 = vsel %vm1882, %v1830, 0
      %1886 = vmatprep.subr.bf16.mxu0 0
      %1887 = vmatpush1.bf16.msra.mxu0 %v1828
      %1888 = vmatprep.subr.bf16.mxu0 0
      %1889 = vmatpush1.bf16.msra.mxu0 %v1829
      %1890 = vmatprep.subr.bf16.mxu0 0
      %1891 = vmatpush1.bf16.msra.mxu0 %v1884
      %1892 = vmatprep.subr.bf16.mxu0 0
      %1893 = vmatpush1.bf16.msra.mxu0 0
      %1894 = vmatprep.subr.bf16.mxu0 0
      %1895 = vmatpush1.bf16.msra.mxu0 0
      %1896 = vmatprep.subr.bf16.mxu0 0
      %1897 = vmatpush1.bf16.msra.mxu0 0
      %1898 = vmatprep.subr.bf16.mxu0 0
      %1899 = vmatpush1.bf16.msra.mxu0 0
      %1900 = vmatprep.subr.bf16.mxu0 0
      %1901 = vmatpush1.bf16.msra.mxu0 0
      %1902 = vmatprep.subr.bf16.mxu0 0
      %1903 = vmatpush1.bf16.msra.mxu0 0
      %1904 = vmatprep.subr.bf16.mxu0 0
      %1905 = vmatpush1.bf16.msra.mxu0 0
      %1906 = vmatprep.subr.bf16.mxu0 0
      %1907 = vmatpush1.bf16.msra.mxu0 0
      %1908 = vmatprep.subr.bf16.mxu0 0
      %1909 = vmatpush1.bf16.msra.mxu0 0
      %1910 = vmatprep.subr.bf16.mxu0 0
      %1911 = vmatpush1.bf16.msra.mxu0 0
      %1912 = vmatprep.subr.bf16.mxu0 0
      %1913 = vmatpush1.bf16.msra.mxu0 0
      %1914 = vmatprep.subr.bf16.mxu0 0
      %1915 = vmatpush1.bf16.msra.mxu0 0
      %1916 = vmatprep.subr.bf16.mxu0 0
      %1917 = vmatpush1.bf16.msra.mxu0 0
      %1918 = vmatprep.mubr.bf16.mxu0 0
      %1919 = vmatmul.mubr.bf16.gmra.mrb[0].mxu0 %v1835
      %v1920 = vpop.f32.mrb[0].mxu0
      %v1921 = vadd.f32 0.0, %v1920
      %v1922 = vpop.f32.mrb[0].mxu0
      %v1923 = vpop.f32.mrb[0].mxu0
      %v1924 = vadd.f32 0.0, %v1923
      %v1925 = vpop.f32.mrb[0].mxu0
      %1926 = vmatprep.mubr.bf16.mxu0 0
      %1927 = vmatmul.mubr.bf16.gmra.mrb[0].mxu0 %v1838
      %v1928 = vpop.f32.mrb[0].mxu0
      %v1929 = vadd.f32 0.0, %v1928
      %v1930 = vpop.f32.mrb[0].mxu0
      %v1931 = vpop.f32.mrb[0].mxu0
      %v1932 = vadd.f32 0.0, %v1931
      %v1933 = vpop.f32.mrb[0].mxu0
      %1934 = vmatprep.mubr.bf16.mxu0 0
      %1935 = vmatmul.mubr.bf16.gmra.mrb[0].mxu0 %v1841
      %v1936 = vpop.f32.mrb[0].mxu0
      %v1937 = vadd.f32 0.0, %v1936
      %v1938 = vpop.f32.mrb[0].mxu0
      %v1939 = vpop.f32.mrb[0].mxu0
      %v1940 = vadd.f32 0.0, %v1939
      %v1941 = vpop.f32.mrb[0].mxu0
      %1942 = vmatprep.mubr.bf16.mxu0 0
      %1943 = vmatmul.mubr.bf16.gmra.mrb[0].mxu0 %v1844
      %v1944 = vpop.f32.mrb[0].mxu0
      %v1945 = vadd.f32 0.0, %v1944
      %v1946 = vpop.f32.mrb[0].mxu0
      %v1947 = vpop.f32.mrb[0].mxu0
      %v1948 = vadd.f32 0.0, %v1947
      %v1949 = vpop.f32.mrb[0].mxu0
      %1950 = vmatprep.mubr.bf16.mxu0 0
      %1951 = vmatmul.mubr.bf16.gmra.mrb[0].mxu0 %v1847
      %v1952 = vpop.f32.mrb[0].mxu0
      %v1953 = vadd.f32 0.0, %v1952
      %v1954 = vpop.f32.mrb[0].mxu0
      %v1955 = vpop.f32.mrb[0].mxu0
      %v1956 = vadd.f32 0.0, %v1955
      %v1957 = vpop.f32.mrb[0].mxu0
      %1958 = vmatprep.mubr.bf16.mxu0 0
      %1959 = vmatmul.mubr.bf16.gmra.mrb[0].mxu0 %v1850
      %v1960 = vpop.f32.mrb[0].mxu0
      %v1961 = vadd.f32 0.0, %v1960
      %v1962 = vpop.f32.mrb[0].mxu0
      %v1963 = vpop.f32.mrb[0].mxu0
      %v1964 = vadd.f32 0.0, %v1963
      %v1965 = vpop.f32.mrb[0].mxu0
      %1966 = vmatprep.mubr.bf16.mxu0 0
      %1967 = vmatmul.mubr.bf16.gmra.mrb[0].mxu0 %v1853
      %v1968 = vpop.f32.mrb[0].mxu0
      %v1969 = vadd.f32 0.0, %v1968
      %v1970 = vpop.f32.mrb[0].mxu0
      %v1971 = vpop.f32.mrb[0].mxu0
      %v1972 = vadd.f32 0.0, %v1971
      %v1973 = vpop.f32.mrb[0].mxu0
      %1974 = vmatprep.mubr.bf16.mxu0 0
      %1975 = vmatmul.mubr.bf16.gmra.mrb[0].mxu0 %v1856
      %v1976 = vpop.f32.mrb[0].mxu0
      %v1977 = vadd.f32 0.0, %v1976
      %v1978 = vpop.f32.mrb[0].mxu0
      %v1979 = vpop.f32.mrb[0].mxu0
      %v1980 = vadd.f32 0.0, %v1979
      %v1981 = vpop.f32.mrb[0].mxu0
      %1982 = vmatprep.mubr.bf16.mxu0 0
      %1983 = vmatmul.mubr.bf16.gmra.mrb[0].mxu0 %v1859
      %v1984 = vpop.f32.mrb[0].mxu0
      %v1985 = vadd.f32 0.0, %v1984
      %v1986 = vpop.f32.mrb[0].mxu0
      %v1987 = vpop.f32.mrb[0].mxu0
      %v1988 = vadd.f32 0.0, %v1987
      %v1989 = vpop.f32.mrb[0].mxu0
      %1990 = vmatprep.mubr.bf16.mxu0 0
      %1991 = vmatmul.mubr.bf16.gmra.mrb[0].mxu0 %v1862
      %v1992 = vpop.f32.mrb[0].mxu0
      %v1993 = vadd.f32 0.0, %v1992
      %v1994 = vpop.f32.mrb[0].mxu0
      %v1995 = vpop.f32.mrb[0].mxu0
      %v1996 = vadd.f32 0.0, %v1995
      %v1997 = vpop.f32.mrb[0].mxu0
      %1998 = vmatprep.mubr.bf16.mxu0 0
      %1999 = vmatmul.mubr.bf16.gmra.mrb[0].mxu0 %v1865
      %v2000 = vpop.f32.mrb[0].mxu0
      %v2001 = vadd.f32 0.0, %v2000
      %v2002 = vpop.f32.mrb[0].mxu0
      %v2003 = vpop.f32.mrb[0].mxu0
      %v2004 = vadd.f32 0.0, %v2003
      %v2005 = vpop.f32.mrb[0].mxu0
      %2006 = vmatprep.mubr.bf16.mxu0 0
      %2007 = vmatmul.mubr.bf16.gmra.mrb[0].mxu0 %v1868
      %v2008 = vpop.f32.mrb[0].mxu0
      %v2009 = vadd.f32 0.0, %v2008
      %v2010 = vpop.f32.mrb[0].mxu0
      %v2011 = vpop.f32.mrb[0].mxu0
      %v2012 = vadd.f32 0.0, %v2011
      %v2013 = vpop.f32.mrb[0].mxu0
      %2014 = vmatprep.mubr.bf16.mxu0 0
      %2015 = vmatmul.mubr.bf16.gmra.mrb[0].mxu0 %v1871
      %v2016 = vpop.f32.mrb[0].mxu0
      %v2017 = vadd.f32 0.0, %v2016
      %v2018 = vpop.f32.mrb[0].mxu0
      %v2019 = vpop.f32.mrb[0].mxu0
      %v2020 = vadd.f32 0.0, %v2019
      %v2021 = vpop.f32.mrb[0].mxu0
      %2022 = vmatprep.mubr.bf16.mxu0 0
      %2023 = vmatmul.mubr.bf16.gmra.mrb[0].mxu0 %v1874
      %v2024 = vpop.f32.mrb[0].mxu0
      %v2025 = vadd.f32 0.0, %v2024
      %v2026 = vpop.f32.mrb[0].mxu0
      %v2027 = vpop.f32.mrb[0].mxu0
      %v2028 = vadd.f32 0.0, %v2027
      %v2029 = vpop.f32.mrb[0].mxu0
      %2030 = vmatprep.mubr.bf16.mxu0 0
      %2031 = vmatmul.mubr.bf16.gmra.mrb[0].mxu0 %v1877
      %v2032 = vpop.f32.mrb[0].mxu0
      %v2033 = vadd.f32 0.0, %v2032
      %v2034 = vpop.f32.mrb[0].mxu0
      %v2035 = vpop.f32.mrb[0].mxu0
      %v2036 = vadd.f32 0.0, %v2035
      %v2037 = vpop.f32.mrb[0].mxu0
      %2038 = vmatprep.mubr.bf16.mxu0 0
      %2039 = vmatmul.mubr.bf16.gmra.mrb[0].mxu0 %v1880
      %v2040 = vpop.f32.mrb[0].mxu0
      %v2041 = vadd.f32 0.0, %v2040
      %v2042 = vpop.f32.mrb[0].mxu0
      %v2043 = vpop.f32.mrb[0].mxu0
      %v2044 = vadd.f32 0.0, %v2043
      %v2045 = vpop.f32.mrb[0].mxu0
      %2046 = vdwg.mxu0
      %v2047 = vld [vmem:[%s4] sm:$0x1]
      %v2048 = vlaneseq
      %v2049 = vshrl.u32 %v2048, 7
      %v2050 = vsub.s32 0, %v2049
      %v2051 = vrot.slane %v2047, %v2050
      %v2052 = vmul.f32 %v1921, %v2051
      %v2053 = vmul.f32 %v1924, %v2051
      %v2054 = vmul.f32 %v1929, %v2051
      %v2055 = vmul.f32 %v1932, %v2051
      %v2056 = vmul.f32 %v1937, %v2051
      %v2057 = vmul.f32 %v1940, %v2051
      %v2058 = vmul.f32 %v1945, %v2051
      %v2059 = vmul.f32 %v1948, %v2051
      %v2060 = vmul.f32 %v1953, %v2051
      %v2061 = vmul.f32 %v1956, %v2051
      %v2062 = vmul.f32 %v1961, %v2051
      %v2063 = vmul.f32 %v1964, %v2051
      %v2064 = vmul.f32 %v1969, %v2051
      %v2065 = vmul.f32 %v1972, %v2051
      %v2066 = vmul.f32 %v1977, %v2051
      %v2067 = vmul.f32 %v1980, %v2051
      %v2068 = vmul.f32 %v1985, %v2051
      %v2069 = vmul.f32 %v1988, %v2051
      %v2070 = vmul.f32 %v1993, %v2051
      %v2071 = vmul.f32 %v1996, %v2051
      %v2072 = vmul.f32 %v2001, %v2051
      %v2073 = vmul.f32 %v2004, %v2051
      %v2074 = vmul.f32 %v2009, %v2051
      %v2075 = vmul.f32 %v2012, %v2051
      %v2076 = vmul.f32 %v2017, %v2051
      %v2077 = vmul.f32 %v2020, %v2051
      %v2078 = vmul.f32 %v2025, %v2051
      %v2079 = vmul.f32 %v2028, %v2051
      %v2080 = vmul.f32 %v2033, %v2051
      %v2081 = vmul.f32 %v2036, %v2051
      %v2082 = vmul.f32 %v2041, %v2051
      %v2083 = vmul.f32 %v2044, %v2051
      %v2084 = vld [vmem:[%s4 + $0x1] sm:$0x1]
      %v2085 = vlaneseq
      %v2086 = vshrl.u32 %v2085, 7
      %v2087 = vsub.s32 0, %v2086
      %v2088 = vrot.slane %v2084, %v2087
      %v2089 = vadd.f32 %v2052, %v2088
      %v2090 = vadd.f32 %v2053, %v2088
      %v2091 = vadd.f32 %v2054, %v2088
      %v2092 = vadd.f32 %v2055, %v2088
      %v2093 = vadd.f32 %v2056, %v2088
      %v2094 = vadd.f32 %v2057, %v2088
      %v2095 = vadd.f32 %v2058, %v2088
      %v2096 = vadd.f32 %v2059, %v2088
      %v2097 = vadd.f32 %v2060, %v2088
      %v2098 = vadd.f32 %v2061, %v2088
      %v2099 = vadd.f32 %v2062, %v2088
      %v2100 = vadd.f32 %v2063, %v2088
      %v2101 = vadd.f32 %v2064, %v2088
      %v2102 = vadd.f32 %v2065, %v2088
      %v2103 = vadd.f32 %v2066, %v2088
      %v2104 = vadd.f32 %v2067, %v2088
      %v2105 = vadd.f32 %v2068, %v2088
      %v2106 = vadd.f32 %v2069, %v2088
      %v2107 = vadd.f32 %v2070, %v2088
      %v2108 = vadd.f32 %v2071, %v2088
      %v2109 = vadd.f32 %v2072, %v2088
      %v2110 = vadd.f32 %v2073, %v2088
      %v2111 = vadd.f32 %v2074, %v2088
      %v2112 = vadd.f32 %v2075, %v2088
      %v2113 = vadd.f32 %v2076, %v2088
      %v2114 = vadd.f32 %v2077, %v2088
      %v2115 = vadd.f32 %v2078, %v2088
      %v2116 = vadd.f32 %v2079, %v2088
      %v2117 = vadd.f32 %v2080, %v2088
      %v2118 = vadd.f32 %v2081, %v2088
      %v2119 = vadd.f32 %v2082, %v2088
      %v2120 = vadd.f32 %v2083, %v2088
      %v2121 = vmax.f32 %v2089, 0.0
      %v2122 = vmax.f32 %v2090, 0.0
      %v2123 = vmax.f32 %v2091, 0.0
      %v2124 = vmax.f32 %v2092, 0.0
      %v2125 = vmax.f32 %v2093, 0.0
      %v2126 = vmax.f32 %v2094, 0.0
      %v2127 = vmax.f32 %v2095, 0.0
      %v2128 = vmax.f32 %v2096, 0.0
      %v2129 = vmax.f32 %v2097, 0.0
      %v2130 = vmax.f32 %v2098, 0.0
      %v2131 = vmax.f32 %v2099, 0.0
      %v2132 = vmax.f32 %v2100, 0.0
      %v2133 = vmax.f32 %v2101, 0.0
      %v2134 = vmax.f32 %v2102, 0.0
      %v2135 = vmax.f32 %v2103, 0.0
      %v2136 = vmax.f32 %v2104, 0.0
      %v2137 = vmax.f32 %v2105, 0.0
      %v2138 = vmax.f32 %v2106, 0.0
      %v2139 = vmax.f32 %v2107, 0.0
      %v2140 = vmax.f32 %v2108, 0.0
      %v2141 = vmax.f32 %v2109, 0.0
      %v2142 = vmax.f32 %v2110, 0.0
      %v2143 = vmax.f32 %v2111, 0.0
      %v2144 = vmax.f32 %v2112, 0.0
      %v2145 = vmax.f32 %v2113, 0.0
      %v2146 = vmax.f32 %v2114, 0.0
      %v2147 = vmax.f32 %v2115, 0.0
      %v2148 = vmax.f32 %v2116, 0.0
      %v2149 = vmax.f32 %v2117, 0.0
      %v2150 = vmax.f32 %v2118, 0.0
      %v2151 = vmax.f32 %v2119, 0.0
      %v2152 = vmax.f32 %v2120, 0.0
      %v2153 = vpack.c.bf16 %v523, %v521
      %v2154 = vpack.c.bf16 %v528, %v526
      %v2155 = vpack.c.bf16 %v533, %v531
      %v2156 = vpack.c.bf16 %v538, %v536
      %v2157 = vpack.c.bf16 %v543, %v541
      %v2158 = vpack.c.bf16 %v548, %v546
      %v2159 = vpack.c.bf16 %v553, %v551
      %v2160 = vpack.c.bf16 %v558, %v556
      %v2161 = vpack.c.bf16 %v563, %v561
      %v2162 = vpack.c.bf16 %v568, %v566
      %v2163 = vpack.c.bf16 %v573, %v571
      %v2164 = vpack.c.bf16 %v578, %v576
      %v2165 = vpack.c.bf16 %v583, %v581
      %v2166 = vpack.c.bf16 %v588, %v586
      %v2167 = vpack.c.bf16 %v593, %v591
      %v2168 = vpack.c.bf16 %v1069, %v1067
      %v2169 = vld [vmem:[%s3] sm:$0x3]
      %v2171 = vsel %vm226, %v2153, 0
      %v2174 = vsel %vm226, %v2154, 0
      %v2177 = vsel %vm226, %v2155, 0
      %v2180 = vsel %vm226, %v2156, 0
      %v2183 = vsel %vm226, %v2157, 0
      %v2186 = vsel %vm226, %v2158, 0
      %v2189 = vsel %vm226, %v2159, 0
      %v2192 = vsel %vm226, %v2160, 0
      %v2195 = vsel %vm226, %v2161, 0
      %v2198 = vsel %vm226, %v2162, 0
      %v2201 = vsel %vm226, %v2163, 0
      %v2204 = vsel %vm226, %v2164, 0
      %v2207 = vsel %vm226, %v2165, 0
      %v2210 = vsel %vm226, %v2166, 0
      %v2213 = vsel %vm226, %v2167, 0
      %v2216 = vsel %vm226, %v2168, 0
      %v2219 = vsel %vm1882, %v2169, 0
      %2221 = vmatprep.subr.bf16.mxu0 0
      %2222 = vmatpush1.bf16.msra.mxu0 %v2219
      %2223 = vmatprep.subr.bf16.mxu0 0
      %2224 = vmatpush1.bf16.msra.mxu0 0
      %2225 = vmatprep.subr.bf16.mxu0 0
      %2226 = vmatpush1.bf16.msra.mxu0 0
      %2227 = vmatprep.subr.bf16.mxu0 0
      %2228 = vmatpush1.bf16.msra.mxu0 0
      %2229 = vmatprep.subr.bf16.mxu0 0
      %2230 = vmatpush1.bf16.msra.mxu0 0
      %2231 = vmatprep.subr.bf16.mxu0 0
      %2232 = vmatpush1.bf16.msra.mxu0 0
      %2233 = vmatprep.subr.bf16.mxu0 0
      %2234 = vmatpush1.bf16.msra.mxu0 0
      %2235 = vmatprep.subr.bf16.mxu0 0
      %2236 = vmatpush1.bf16.msra.mxu0 0
      %2237 = vmatprep.subr.bf16.mxu0 0
      %2238 = vmatpush1.bf16.msra.mxu0 0
      %2239 = vmatprep.subr.bf16.mxu0 0
      %2240 = vmatpush1.bf16.msra.mxu0 0
      %2241 = vmatprep.subr.bf16.mxu0 0
      %2242 = vmatpush1.bf16.msra.mxu0 0
      %2243 = vmatprep.subr.bf16.mxu0 0
      %2244 = vmatpush1.bf16.msra.mxu0 0
      %2245 = vmatprep.subr.bf16.mxu0 0
      %2246 = vmatpush1.bf16.msra.mxu0 0
      %2247 = vmatprep.subr.bf16.mxu0 0
      %2248 = vmatpush1.bf16.msra.mxu0 0
      %2249 = vmatprep.subr.bf16.mxu0 0
      %2250 = vmatpush1.bf16.msra.mxu0 0
      %2251 = vmatprep.subr.bf16.mxu0 0
      %2252 = vmatpush1.bf16.msra.mxu0 0
      %2253 = vmatprep.mubr.bf16.mxu0 0
      %2254 = vmatmul.mubr.bf16.gmra.mrb[0].mxu0 %v2171
      %v2255 = vpop.f32.mrb[0].mxu0
      %v2256 = vadd.f32 0.0, %v2255
      %v2257 = vpop.f32.mrb[0].mxu0
      %v2258 = vpop.f32.mrb[0].mxu0
      %v2259 = vadd.f32 0.0, %v2258
      %v2260 = vpop.f32.mrb[0].mxu0
      %2261 = vmatprep.mubr.bf16.mxu0 0
      %2262 = vmatmul.mubr.bf16.gmra.mrb[0].mxu0 %v2174
      %v2263 = vpop.f32.mrb[0].mxu0
      %v2264 = vadd.f32 0.0, %v2263
      %v2265 = vpop.f32.mrb[0].mxu0
      %v2266 = vpop.f32.mrb[0].mxu0
      %v2267 = vadd.f32 0.0, %v2266
      %v2268 = vpop.f32.mrb[0].mxu0
      %2269 = vmatprep.mubr.bf16.mxu0 0
      %2270 = vmatmul.mubr.bf16.gmra.mrb[0].mxu0 %v2177
      %v2271 = vpop.f32.mrb[0].mxu0
      %v2272 = vadd.f32 0.0, %v2271
      %v2273 = vpop.f32.mrb[0].mxu0
      %v2274 = vpop.f32.mrb[0].mxu0
      %v2275 = vadd.f32 0.0, %v2274
      %v2276 = vpop.f32.mrb[0].mxu0
      %2277 = vmatprep.mubr.bf16.mxu0 0
      %2278 = vmatmul.mubr.bf16.gmra.mrb[0].mxu0 %v2180
      %v2279 = vpop.f32.mrb[0].mxu0
      %v2280 = vadd.f32 0.0, %v2279
      %v2281 = vpop.f32.mrb[0].mxu0
      %v2282 = vpop.f32.mrb[0].mxu0
      %v2283 = vadd.f32 0.0, %v2282
      %v2284 = vpop.f32.mrb[0].mxu0
      %2285 = vmatprep.mubr.bf16.mxu0 0
      %2286 = vmatmul.mubr.bf16.gmra.mrb[0].mxu0 %v2183
      %v2287 = vpop.f32.mrb[0].mxu0
      %v2288 = vadd.f32 0.0, %v2287
      %v2289 = vpop.f32.mrb[0].mxu0
      %v2290 = vpop.f32.mrb[0].mxu0
      %v2291 = vadd.f32 0.0, %v2290
      %v2292 = vpop.f32.mrb[0].mxu0
      %2293 = vmatprep.mubr.bf16.mxu0 0
      %2294 = vmatmul.mubr.bf16.gmra.mrb[0].mxu0 %v2186
      %v2295 = vpop.f32.mrb[0].mxu0
      %v2296 = vadd.f32 0.0, %v2295
      %v2297 = vpop.f32.mrb[0].mxu0
      %v2298 = vpop.f32.mrb[0].mxu0
      %v2299 = vadd.f32 0.0, %v2298
      %v2300 = vpop.f32.mrb[0].mxu0
      %2301 = vmatprep.mubr.bf16.mxu0 0
      %2302 = vmatmul.mubr.bf16.gmra.mrb[0].mxu0 %v2189
      %v2303 = vpop.f32.mrb[0].mxu0
      %v2304 = vadd.f32 0.0, %v2303
      %v2305 = vpop.f32.mrb[0].mxu0
      %v2306 = vpop.f32.mrb[0].mxu0
      %v2307 = vadd.f32 0.0, %v2306
      %v2308 = vpop.f32.mrb[0].mxu0
      %2309 = vmatprep.mubr.bf16.mxu0 0
      %2310 = vmatmul.mubr.bf16.gmra.mrb[0].mxu0 %v2192
      %v2311 = vpop.f32.mrb[0].mxu0
      %v2312 = vadd.f32 0.0, %v2311
      %v2313 = vpop.f32.mrb[0].mxu0
      %v2314 = vpop.f32.mrb[0].mxu0
      %v2315 = vadd.f32 0.0, %v2314
      %v2316 = vpop.f32.mrb[0].mxu0
      %2317 = vmatprep.mubr.bf16.mxu0 0
      %2318 = vmatmul.mubr.bf16.gmra.mrb[0].mxu0 %v2195
      %v2319 = vpop.f32.mrb[0].mxu0
      %v2320 = vadd.f32 0.0, %v2319
      %v2321 = vpop.f32.mrb[0].mxu0
      %v2322 = vpop.f32.mrb[0].mxu0
      %v2323 = vadd.f32 0.0, %v2322
      %v2324 = vpop.f32.mrb[0].mxu0
      %2325 = vmatprep.mubr.bf16.mxu0 0
      %2326 = vmatmul.mubr.bf16.gmra.mrb[0].mxu0 %v2198
      %v2327 = vpop.f32.mrb[0].mxu0
      %v2328 = vadd.f32 0.0, %v2327
      %v2329 = vpop.f32.mrb[0].mxu0
      %v2330 = vpop.f32.mrb[0].mxu0
      %v2331 = vadd.f32 0.0, %v2330
      %v2332 = vpop.f32.mrb[0].mxu0
      %2333 = vmatprep.mubr.bf16.mxu0 0
      %2334 = vmatmul.mubr.bf16.gmra.mrb[0].mxu0 %v2201
      %v2335 = vpop.f32.mrb[0].mxu0
      %v2336 = vadd.f32 0.0, %v2335
      %v2337 = vpop.f32.mrb[0].mxu0
      %v2338 = vpop.f32.mrb[0].mxu0
      %v2339 = vadd.f32 0.0, %v2338
      %v2340 = vpop.f32.mrb[0].mxu0
      %2341 = vmatprep.mubr.bf16.mxu0 0
      %2342 = vmatmul.mubr.bf16.gmra.mrb[0].mxu0 %v2204
      %v2343 = vpop.f32.mrb[0].mxu0
      %v2344 = vadd.f32 0.0, %v2343
      %v2345 = vpop.f32.mrb[0].mxu0
      %v2346 = vpop.f32.mrb[0].mxu0
      %v2347 = vadd.f32 0.0, %v2346
      %v2348 = vpop.f32.mrb[0].mxu0
      %2349 = vmatprep.mubr.bf16.mxu0 0
      %2350 = vmatmul.mubr.bf16.gmra.mrb[0].mxu0 %v2207
      %v2351 = vpop.f32.mrb[0].mxu0
      %v2352 = vadd.f32 0.0, %v2351
      %v2353 = vpop.f32.mrb[0].mxu0
      %v2354 = vpop.f32.mrb[0].mxu0
      %v2355 = vadd.f32 0.0, %v2354
      %v2356 = vpop.f32.mrb[0].mxu0
      %2357 = vmatprep.mubr.bf16.mxu0 0
      %2358 = vmatmul.mubr.bf16.gmra.mrb[0].mxu0 %v2210
      %v2359 = vpop.f32.mrb[0].mxu0
      %v2360 = vadd.f32 0.0, %v2359
      %v2361 = vpop.f32.mrb[0].mxu0
      %v2362 = vpop.f32.mrb[0].mxu0
      %v2363 = vadd.f32 0.0, %v2362
      %v2364 = vpop.f32.mrb[0].mxu0
      %2365 = vmatprep.mubr.bf16.mxu0 0
      %2366 = vmatmul.mubr.bf16.gmra.mrb[0].mxu0 %v2213
      %v2367 = vpop.f32.mrb[0].mxu0
      %v2368 = vadd.f32 0.0, %v2367
      %v2369 = vpop.f32.mrb[0].mxu0
      %v2370 = vpop.f32.mrb[0].mxu0
      %v2371 = vadd.f32 0.0, %v2370
      %v2372 = vpop.f32.mrb[0].mxu0
      %2373 = vmatprep.mubr.bf16.mxu0 0
      %2374 = vmatmul.mubr.bf16.gmra.mrb[0].mxu0 %v2216
      %v2375 = vpop.f32.mrb[0].mxu0
      %v2376 = vadd.f32 0.0, %v2375
      %v2377 = vpop.f32.mrb[0].mxu0
      %v2378 = vpop.f32.mrb[0].mxu0
      %v2379 = vadd.f32 0.0, %v2378
      %v2380 = vpop.f32.mrb[0].mxu0
      %2381 = vdwg.mxu0
      %v2382 = vld [vmem:[%s4 + $0x4] sm:$0x1]
      %v2383 = vlaneseq
      %v2384 = vshrl.u32 %v2383, 7
      %v2385 = vsub.s32 0, %v2384
      %v2386 = vrot.slane %v2382, %v2385
      %v2387 = vmul.f32 %v2256, %v2386
      %v2388 = vmul.f32 %v2259, %v2386
      %v2389 = vmul.f32 %v2264, %v2386
      %v2390 = vmul.f32 %v2267, %v2386
      %v2391 = vmul.f32 %v2272, %v2386
      %v2392 = vmul.f32 %v2275, %v2386
      %v2393 = vmul.f32 %v2280, %v2386
      %v2394 = vmul.f32 %v2283, %v2386
      %v2395 = vmul.f32 %v2288, %v2386
      %v2396 = vmul.f32 %v2291, %v2386
      %v2397 = vmul.f32 %v2296, %v2386
      %v2398 = vmul.f32 %v2299, %v2386
      %v2399 = vmul.f32 %v2304, %v2386
      %v2400 = vmul.f32 %v2307, %v2386
      %v2401 = vmul.f32 %v2312, %v2386
      %v2402 = vmul.f32 %v2315, %v2386
      %v2403 = vmul.f32 %v2320, %v2386
      %v2404 = vmul.f32 %v2323, %v2386
      %v2405 = vmul.f32 %v2328, %v2386
      %v2406 = vmul.f32 %v2331, %v2386
      %v2407 = vmul.f32 %v2336, %v2386
      %v2408 = vmul.f32 %v2339, %v2386
      %v2409 = vmul.f32 %v2344, %v2386
      %v2410 = vmul.f32 %v2347, %v2386
      %v2411 = vmul.f32 %v2352, %v2386
      %v2412 = vmul.f32 %v2355, %v2386
      %v2413 = vmul.f32 %v2360, %v2386
      %v2414 = vmul.f32 %v2363, %v2386
      %v2415 = vmul.f32 %v2368, %v2386
      %v2416 = vmul.f32 %v2371, %v2386
      %v2417 = vmul.f32 %v2376, %v2386
      %v2418 = vmul.f32 %v2379, %v2386
      %v2419 = vld [vmem:[%s4 + $0x5] sm:$0x1]
      %v2420 = vlaneseq
      %v2421 = vshrl.u32 %v2420, 7
      %v2422 = vsub.s32 0, %v2421
      %v2423 = vrot.slane %v2419, %v2422
      %v2424 = vadd.f32 %v2387, %v2423
      %v2425 = vadd.f32 %v2388, %v2423
      %v2426 = vadd.f32 %v2389, %v2423
      %v2427 = vadd.f32 %v2390, %v2423
      %v2428 = vadd.f32 %v2391, %v2423
      %v2429 = vadd.f32 %v2392, %v2423
      %v2430 = vadd.f32 %v2393, %v2423
      %v2431 = vadd.f32 %v2394, %v2423
      %v2432 = vadd.f32 %v2395, %v2423
      %v2433 = vadd.f32 %v2396, %v2423
      %v2434 = vadd.f32 %v2397, %v2423
      %v2435 = vadd.f32 %v2398, %v2423
      %v2436 = vadd.f32 %v2399, %v2423
      %v2437 = vadd.f32 %v2400, %v2423
      %v2438 = vadd.f32 %v2401, %v2423
      %v2439 = vadd.f32 %v2402, %v2423
      %v2440 = vadd.f32 %v2403, %v2423
      %v2441 = vadd.f32 %v2404, %v2423
      %v2442 = vadd.f32 %v2405, %v2423
      %v2443 = vadd.f32 %v2406, %v2423
      %v2444 = vadd.f32 %v2407, %v2423
      %v2445 = vadd.f32 %v2408, %v2423
      %v2446 = vadd.f32 %v2409, %v2423
      %v2447 = vadd.f32 %v2410, %v2423
      %v2448 = vadd.f32 %v2411, %v2423
      %v2449 = vadd.f32 %v2412, %v2423
      %v2450 = vadd.f32 %v2413, %v2423
      %v2451 = vadd.f32 %v2414, %v2423
      %v2452 = vadd.f32 %v2415, %v2423
      %v2453 = vadd.f32 %v2416, %v2423
      %v2454 = vadd.f32 %v2417, %v2423
      %v2455 = vadd.f32 %v2418, %v2423
      %v2456 = vmax.f32 %v2424, 0.0
      %v2457 = vmax.f32 %v2425, 0.0
      %v2458 = vmax.f32 %v2426, 0.0
      %v2459 = vmax.f32 %v2427, 0.0
      %v2460 = vmax.f32 %v2428, 0.0
      %v2461 = vmax.f32 %v2429, 0.0
      %v2462 = vmax.f32 %v2430, 0.0
      %v2463 = vmax.f32 %v2431, 0.0
      %v2464 = vmax.f32 %v2432, 0.0
      %v2465 = vmax.f32 %v2433, 0.0
      %v2466 = vmax.f32 %v2434, 0.0
      %v2467 = vmax.f32 %v2435, 0.0
      %v2468 = vmax.f32 %v2436, 0.0
      %v2469 = vmax.f32 %v2437, 0.0
      %v2470 = vmax.f32 %v2438, 0.0
      %v2471 = vmax.f32 %v2439, 0.0
      %v2472 = vmax.f32 %v2440, 0.0
      %v2473 = vmax.f32 %v2441, 0.0
      %v2474 = vmax.f32 %v2442, 0.0
      %v2475 = vmax.f32 %v2443, 0.0
      %v2476 = vmax.f32 %v2444, 0.0
      %v2477 = vmax.f32 %v2445, 0.0
      %v2478 = vmax.f32 %v2446, 0.0
      %v2479 = vmax.f32 %v2447, 0.0
      %v2480 = vmax.f32 %v2448, 0.0
      %v2481 = vmax.f32 %v2449, 0.0
      %v2482 = vmax.f32 %v2450, 0.0
      %v2483 = vmax.f32 %v2451, 0.0
      %v2484 = vmax.f32 %v2452, 0.0
      %v2485 = vmax.f32 %v2453, 0.0
      %v2486 = vmax.f32 %v2454, 0.0
      %v2487 = vmax.f32 %v2455, 0.0
      %vm2488 = vcmask 261120
      %2489 = vst.msk [vmem:[#allocation3] sm:$0xff] %vm2488, 0.0
      %2490 = vst.msk [vmem:[#allocation3 + $0x8] sm:$0xff] %vm2488, 0.0
      %vm2491 = vcmask 254976
      %2492 = vst.msk [vmem:[#allocation3 + $0x10] sm:$0x3] %vm2491, 0.0
      %2493 = vst.msk [vmem:[#allocation3 + $0x18] sm:$0xff] %vm2488, 0.0
      %2494 = vst.msk [vmem:[#allocation3 + $0x20] sm:$0xff] %vm2488, 0.0
      %2495 = vst.msk [vmem:[#allocation3 + $0x28] sm:$0x3] %vm2491, 0.0
      %2496 = vst.msk [vmem:[#allocation3 + $0x30] sm:$0xff] %vm2488, 0.0
      %2497 = vst.msk [vmem:[#allocation3 + $0x38] sm:$0xff] %vm2488, 0.0
      %2498 = vst.msk [vmem:[#allocation3 + $0x40] sm:$0x3] %vm2491, 0.0
      %2499 = vst.msk [vmem:[#allocation3 + $0x48] sm:$0xff] %vm2488, 0.0
      %2500 = vst.msk [vmem:[#allocation3 + $0x50] sm:$0xff] %vm2488, 0.0
      %2501 = vst.msk [vmem:[#allocation3 + $0x58] sm:$0x3] %vm2491, 0.0
      %2502 = vst.msk [vmem:[#allocation3 + $0x60] sm:$0xff] %vm2488, 0.0
      %2503 = vst.msk [vmem:[#allocation3 + $0x68] sm:$0xff] %vm2488, 0.0
      %2504 = vst.msk [vmem:[#allocation3 + $0x70] sm:$0x3] %vm2491, 0.0
      %2505 = vst.msk [vmem:[#allocation3 + $0x78] sm:$0xff] %vm2488, 0.0
      %2506 = vst.msk [vmem:[#allocation3 + $0x80] sm:$0xff] %vm2488, 0.0
      %2507 = vst.msk [vmem:[#allocation3 + $0x88] sm:$0x3] %vm2491, 0.0
      %2508 = vst.msk [vmem:[#allocation3 + $0x90] sm:$0xff] %vm2488, 0.0
      %2509 = vst.msk [vmem:[#allocation3 + $0x98] sm:$0xff] %vm2488, 0.0
      %2510 = vst.msk [vmem:[#allocation3 + $0xa0] sm:$0x3] %vm2491, 0.0
      %2511 = vst.msk [vmem:[#allocation3 + $0xa8] sm:$0xff] %vm2488, 0.0
      %2512 = vst.msk [vmem:[#allocation3 + $0xb0] sm:$0xff] %vm2488, 0.0
      %2513 = vst.msk [vmem:[#allocation3 + $0xb8] sm:$0x3] %vm2491, 0.0
      %2514 = vst.msk [vmem:[#allocation3 + $0xc0] sm:$0xff] %vm2488, 0.0
      %2515 = vst.msk [vmem:[#allocation3 + $0xc8] sm:$0xff] %vm2488, 0.0
      %2516 = vst.msk [vmem:[#allocation3 + $0xd0] sm:$0x3] %vm2491, 0.0
      %2517 = vst.msk [vmem:[#allocation3 + $0xd8] sm:$0xff] %vm2488, 0.0
      %2518 = vst.msk [vmem:[#allocation3 + $0xe0] sm:$0xff] %vm2488, 0.0
      %2519 = vst.msk [vmem:[#allocation3 + $0xe8] sm:$0x3] %vm2491, 0.0
      %2520 = vst.msk [vmem:[#allocation3 + $0xf0] sm:$0xff] %vm2488, 0.0
      %2521 = vst.msk [vmem:[#allocation3 + $0xf8] sm:$0xff] %vm2488, 0.0
      %2522 = vst.msk [vmem:[#allocation3 + $0x100] sm:$0x3] %vm2491, 0.0
      %2523 = vst.msk [vmem:[#allocation3 + $0x108] sm:$0xff] %vm2488, 0.0
      %2524 = vst.msk [vmem:[#allocation3 + $0x110] sm:$0xff] %vm2488, 0.0
      %2525 = vst.msk [vmem:[#allocation3 + $0x118] sm:$0x3] %vm2491, 0.0
      %2526 = vst.msk [vmem:[#allocation3 + $0x120] sm:$0xff] %vm2488, 0.0
      %2527 = vst.msk [vmem:[#allocation3 + $0x128] sm:$0xff] %vm2488, 0.0
      %2528 = vst.msk [vmem:[#allocation3 + $0x130] sm:$0x3] %vm2491, 0.0
      %2529 = vst.msk [vmem:[#allocation3 + $0x138] sm:$0xff] %vm2488, 0.0
      %2530 = vst.msk [vmem:[#allocation3 + $0x140] sm:$0xff] %vm2488, 0.0
      %2531 = vst.msk [vmem:[#allocation3 + $0x148] sm:$0x3] %vm2491, 0.0
      %2532 = vst.msk [vmem:[#allocation3 + $0x150] sm:$0xff] %vm2488, 0.0
      %2533 = vst.msk [vmem:[#allocation3 + $0x158] sm:$0xff] %vm2488, 0.0
      %2534 = vst.msk [vmem:[#allocation3 + $0x160] sm:$0x3] %vm2491, 0.0
      %2535 = vst.msk [vmem:[#allocation3 + $0x168] sm:$0xff] %vm2488, 0.0
      %2536 = vst.msk [vmem:[#allocation3 + $0x170] sm:$0xff] %vm2488, 0.0
      %2537 = vst.msk [vmem:[#allocation3 + $0x178] sm:$0x3] %vm2491, 0.0
      %2538 = vst.msk [vmem:[#allocation3 + $0x180] sm:$0xff] %vm2488, 0.0
      %2539 = vst.msk [vmem:[#allocation3 + $0x188] sm:$0xff] %vm2488, 0.0
      %2540 = vst.msk [vmem:[#allocation3 + $0x190] sm:$0x3] %vm2491, 0.0
      %2541 = vst.msk [vmem:[#allocation3 + $0x198] sm:$0xff] %vm2488, 0.0
      %2542 = vst.msk [vmem:[#allocation3 + $0x1a0] sm:$0xff] %vm2488, 0.0
      %2543 = vst.msk [vmem:[#allocation3 + $0x1a8] sm:$0x3] %vm2491, 0.0
      %s2544 = scalar_lea.vmem [#allocation3], 24
      %2545 = vst.msk [vmem:[%s2544 + $0x1] sm:$0xff] %vm2488, %v2121
      %2546 = vst.msk [vmem:[%s2544 + $0x9] sm:$0xff] %vm2488, %v2122
      %2547 = vst.msk [vmem:[%s2544 + $0x19] sm:$0xff] %vm2488, %v2123
      %2548 = vst.msk [vmem:[%s2544 + $0x21] sm:$0xff] %vm2488, %v2124
      %2549 = vst.msk [vmem:[%s2544 + $0x31] sm:$0xff] %vm2488, %v2125
      %2550 = vst.msk [vmem:[%s2544 + $0x39] sm:$0xff] %vm2488, %v2126
      %2551 = vst.msk [vmem:[%s2544 + $0x49] sm:$0xff] %vm2488, %v2127
      %2552 = vst.msk [vmem:[%s2544 + $0x51] sm:$0xff] %vm2488, %v2128
      %2553 = vst.msk [vmem:[%s2544 + $0x61] sm:$0xff] %vm2488, %v2129
      %2554 = vst.msk [vmem:[%s2544 + $0x69] sm:$0xff] %vm2488, %v2130
      %2555 = vst.msk [vmem:[%s2544 + $0x79] sm:$0xff] %vm2488, %v2131
      %2556 = vst.msk [vmem:[%s2544 + $0x81] sm:$0xff] %vm2488, %v2132
      %2557 = vst.msk [vmem:[%s2544 + $0x91] sm:$0xff] %vm2488, %v2133
      %2558 = vst.msk [vmem:[%s2544 + $0x99] sm:$0xff] %vm2488, %v2134
      %2559 = vst.msk [vmem:[%s2544 + $0xa9] sm:$0xff] %vm2488, %v2135
      %2560 = vst.msk [vmem:[%s2544 + $0xb1] sm:$0xff] %vm2488, %v2136
      %2561 = vst.msk [vmem:[%s2544 + $0xc1] sm:$0xff] %vm2488, %v2137
      %2562 = vst.msk [vmem:[%s2544 + $0xc9] sm:$0xff] %vm2488, %v2138
      %2563 = vst.msk [vmem:[%s2544 + $0xd9] sm:$0xff] %vm2488, %v2139
      %2564 = vst.msk [vmem:[%s2544 + $0xe1] sm:$0xff] %vm2488, %v2140
      %2565 = vst.msk [vmem:[%s2544 + $0xf1] sm:$0xff] %vm2488, %v2141
      %2566 = vst.msk [vmem:[%s2544 + $0xf9] sm:$0xff] %vm2488, %v2142
      %2567 = vst.msk [vmem:[%s2544 + $0x109] sm:$0xff] %vm2488, %v2143
      %2568 = vst.msk [vmem:[%s2544 + $0x111] sm:$0xff] %vm2488, %v2144
      %2569 = vst.msk [vmem:[%s2544 + $0x121] sm:$0xff] %vm2488, %v2145
      %2570 = vst.msk [vmem:[%s2544 + $0x129] sm:$0xff] %vm2488, %v2146
      %2571 = vst.msk [vmem:[%s2544 + $0x139] sm:$0xff] %vm2488, %v2147
      %2572 = vst.msk [vmem:[%s2544 + $0x141] sm:$0xff] %vm2488, %v2148
      %2573 = vst.msk [vmem:[%s2544 + $0x151] sm:$0xff] %vm2488, %v2149
      %2574 = vst.msk [vmem:[%s2544 + $0x159] sm:$0xff] %vm2488, %v2150
      %2575 = vst.msk [vmem:[%s2544 + $0x169] sm:$0xff] %vm2488, %v2151
      %2576 = vst.msk [vmem:[%s2544 + $0x171] sm:$0xff] %vm2488, %v2152
      %v2577 = vld [vmem:[#allocation3] sm:$0xff]
      %v2578 = vld [vmem:[#allocation3 + $0x8] sm:$0xff]
      %v2579 = vld [vmem:[#allocation3 + $0x10] sm:$0x3]
      %v2580 = vld [vmem:[#allocation3 + $0x18] sm:$0xff]
      %v2581 = vld [vmem:[#allocation3 + $0x20] sm:$0xff]
      %v2582 = vld [vmem:[#allocation3 + $0x28] sm:$0x3]
      %v2583 = vld [vmem:[#allocation3 + $0x30] sm:$0xff]
      %v2584 = vld [vmem:[#allocation3 + $0x38] sm:$0xff]
      %v2585 = vld [vmem:[#allocation3 + $0x40] sm:$0x3]
      %v2586 = vld [vmem:[#allocation3 + $0x48] sm:$0xff]
      %v2587 = vld [vmem:[#allocation3 + $0x50] sm:$0xff]
      %v2588 = vld [vmem:[#allocation3 + $0x58] sm:$0x3]
      %v2589 = vld [vmem:[#allocation3 + $0x60] sm:$0xff]
      %v2590 = vld [vmem:[#allocation3 + $0x68] sm:$0xff]
      %v2591 = vld [vmem:[#allocation3 + $0x70] sm:$0x3]
      %v2592 = vld [vmem:[#allocation3 + $0x78] sm:$0xff]
      %v2593 = vld [vmem:[#allocation3 + $0x80] sm:$0xff]
      %v2594 = vld [vmem:[#allocation3 + $0x88] sm:$0x3]
      %v2595 = vld [vmem:[#allocation3 + $0x90] sm:$0xff]
      %v2596 = vld [vmem:[#allocation3 + $0x98] sm:$0xff]
      %v2597 = vld [vmem:[#allocation3 + $0xa0] sm:$0x3]
      %v2598 = vld [vmem:[#allocation3 + $0xa8] sm:$0xff]
      %v2599 = vld [vmem:[#allocation3 + $0xb0] sm:$0xff]
      %v2600 = vld [vmem:[#allocation3 + $0xb8] sm:$0x3]
      %v2601 = vld [vmem:[#allocation3 + $0xc0] sm:$0xff]
      %v2602 = vld [vmem:[#allocation3 + $0xc8] sm:$0xff]
      %v2603 = vld [vmem:[#allocation3 + $0xd0] sm:$0x3]
      %v2604 = vld [vmem:[#allocation3 + $0xd8] sm:$0xff]
      %v2605 = vld [vmem:[#allocation3 + $0xe0] sm:$0xff]
      %v2606 = vld [vmem:[#allocation3 + $0xe8] sm:$0x3]
      %v2607 = vld [vmem:[#allocation3 + $0xf0] sm:$0xff]
      %v2608 = vld [vmem:[#allocation3 + $0xf8] sm:$0xff]
      %v2609 = vld [vmem:[#allocation3 + $0x100] sm:$0x3]
      %v2610 = vld [vmem:[#allocation3 + $0x108] sm:$0xff]
      %v2611 = vld [vmem:[#allocation3 + $0x110] sm:$0xff]
      %v2612 = vld [vmem:[#allocation3 + $0x118] sm:$0x3]
      %v2613 = vld [vmem:[#allocation3 + $0x120] sm:$0xff]
      %v2614 = vld [vmem:[#allocation3 + $0x128] sm:$0xff]
      %v2615 = vld [vmem:[#allocation3 + $0x130] sm:$0x3]
      %v2616 = vld [vmem:[#allocation3 + $0x138] sm:$0xff]
      %v2617 = vld [vmem:[#allocation3 + $0x140] sm:$0xff]
      %v2618 = vld [vmem:[#allocation3 + $0x148] sm:$0x3]
      %v2619 = vld [vmem:[#allocation3 + $0x150] sm:$0xff]
      %v2620 = vld [vmem:[#allocation3 + $0x158] sm:$0xff]
      %v2621 = vld [vmem:[#allocation3 + $0x160] sm:$0x3]
      %v2622 = vld [vmem:[#allocation3 + $0x168] sm:$0xff]
      %v2623 = vld [vmem:[#allocation3 + $0x170] sm:$0xff]
      %v2624 = vld [vmem:[#allocation3 + $0x178] sm:$0x3]
      %v2625 = vld [vmem:[#allocation3 + $0x180] sm:$0xff]
      %v2626 = vld [vmem:[#allocation3 + $0x188] sm:$0xff]
      %v2627 = vld [vmem:[#allocation3 + $0x190] sm:$0x3]
      %v2628 = vld [vmem:[#allocation3 + $0x198] sm:$0xff]
      %v2629 = vld [vmem:[#allocation3 + $0x1a0] sm:$0xff]
      %v2630 = vld [vmem:[#allocation3 + $0x1a8] sm:$0x3]
      %2631 = vst.msk [vmem:[#allocation4] sm:$0xff] %vm2488, %v2577
      %2632 = vst.msk [vmem:[#allocation4 + $0x18] sm:$0xff] %vm2488, %v2578
      %2633 = vst.msk [vmem:[#allocation4 + $0x30] sm:$0xff] %vm2488, %v2580
      %2634 = vst.msk [vmem:[#allocation4 + $0x48] sm:$0xff] %vm2488, %v2581
      %2635 = vst.msk [vmem:[#allocation4 + $0x60] sm:$0xff] %vm2488, %v2583
      %2636 = vst.msk [vmem:[#allocation4 + $0x78] sm:$0xff] %vm2488, %v2584
      %2637 = vst.msk [vmem:[#allocation4 + $0x90] sm:$0xff] %vm2488, %v2586
      %2638 = vst.msk [vmem:[#allocation4 + $0xa8] sm:$0xff] %vm2488, %v2587
      %2639 = vst.msk [vmem:[#allocation4 + $0xc0] sm:$0xff] %vm2488, %v2589
      %2640 = vst.msk [vmem:[#allocation4 + $0xd8] sm:$0xff] %vm2488, %v2590
      %2641 = vst.msk [vmem:[#allocation4 + $0xf0] sm:$0xff] %vm2488, %v2592
      %2642 = vst.msk [vmem:[#allocation4 + $0x108] sm:$0xff] %vm2488, %v2593
      %2643 = vst.msk [vmem:[#allocation4 + $0x120] sm:$0xff] %vm2488, %v2595
      %2644 = vst.msk [vmem:[#allocation4 + $0x138] sm:$0xff] %vm2488, %v2596
      %2645 = vst.msk [vmem:[#allocation4 + $0x150] sm:$0xff] %vm2488, %v2598
      %2646 = vst.msk [vmem:[#allocation4 + $0x168] sm:$0xff] %vm2488, %v2599
      %2647 = vst.msk [vmem:[#allocation4 + $0x180] sm:$0xff] %vm2488, %v2601
      %2648 = vst.msk [vmem:[#allocation4 + $0x198] sm:$0xff] %vm2488, %v2602
      %2649 = vst.msk [vmem:[#allocation4 + $0x1b0] sm:$0xff] %vm2488, %v2604
      %2650 = vst.msk [vmem:[#allocation4 + $0x1c8] sm:$0xff] %vm2488, %v2605
      %2651 = vst.msk [vmem:[#allocation4 + $0x1e0] sm:$0xff] %vm2488, %v2607
      %2652 = vst.msk [vmem:[#allocation4 + $0x1f8] sm:$0xff] %vm2488, %v2608
      %2653 = vst.msk [vmem:[#allocation4 + $0x210] sm:$0xff] %vm2488, %v2610
      %2654 = vst.msk [vmem:[#allocation4 + $0x228] sm:$0xff] %vm2488, %v2611
      %2655 = vst.msk [vmem:[#allocation4 + $0x240] sm:$0xff] %vm2488, %v2613
      %2656 = vst.msk [vmem:[#allocation4 + $0x258] sm:$0xff] %vm2488, %v2614
      %2657 = vst.msk [vmem:[#allocation4 + $0x270] sm:$0xff] %vm2488, %v2616
      %2658 = vst.msk [vmem:[#allocation4 + $0x288] sm:$0xff] %vm2488, %v2617
      %2659 = vst.msk [vmem:[#allocation4 + $0x2a0] sm:$0xff] %vm2488, %v2619
      %2660 = vst.msk [vmem:[#allocation4 + $0x2b8] sm:$0xff] %vm2488, %v2620
      %2661 = vst.msk [vmem:[#allocation4 + $0x2d0] sm:$0xff] %vm2488, %v2622
      %2662 = vst.msk [vmem:[#allocation4 + $0x2e8] sm:$0xff] %vm2488, %v2623
      %v2711 = vrot.slane %v2577, 1
      %v2712 = vrot.slane %v2578, 1
      %v2713 = vsel %vm513, %v2711, %v2712
      %v2714 = vrot.slane %v2579, 1
      %v2715 = vsel %vm513, %v2712, %v2714
      %v2716 = vrot.slane %v2580, 1
      %v2717 = vrot.slane %v2581, 1
      %v2718 = vsel %vm513, %v2716, %v2717
      %v2719 = vrot.slane %v2582, 1
      %v2720 = vsel %vm513, %v2717, %v2719
      %v2721 = vrot.slane %v2583, 1
      %v2722 = vrot.slane %v2584, 1
      %v2723 = vsel %vm513, %v2721, %v2722
      %v2724 = vrot.slane %v2585, 1
      %v2725 = vsel %vm513, %v2722, %v2724
      %v2726 = vrot.slane %v2586, 1
      %v2727 = vrot.slane %v2587, 1
      %v2728 = vsel %vm513, %v2726, %v2727
      %v2729 = vrot.slane %v2588, 1
      %v2730 = vsel %vm513, %v2727, %v2729
      %v2731 = vrot.slane %v2589, 1
      %v2732 = vrot.slane %v2590, 1
      %v2733 = vsel %vm513, %v2731, %v2732
      %v2734 = vrot.slane %v2591, 1
      %v2735 = vsel %vm513, %v2732, %v2734
      %v2736 = vrot.slane %v2592, 1
      %v2737 = vrot.slane %v2593, 1
      %v2738 = vsel %vm513, %v2736, %v2737
      %v2739 = vrot.slane %v2594, 1
      %v2740 = vsel %vm513, %v2737, %v2739
      %v2741 = vrot.slane %v2595, 1
      %v2742 = vrot.slane %v2596, 1
      %v2743 = vsel %vm513, %v2741, %v2742
      %v2744 = vrot.slane %v2597, 1
      %v2745 = vsel %vm513, %v2742, %v2744
      %v2746 = vrot.slane %v2598, 1
      %v2747 = vrot.slane %v2599, 1
      %v2748 = vsel %vm513, %v2746, %v2747
      %v2749 = vrot.slane %v2600, 1
      %v2750 = vsel %vm513, %v2747, %v2749
      %v2751 = vrot.slane %v2601, 1
      %v2752 = vrot.slane %v2602, 1
      %v2753 = vsel %vm513, %v2751, %v2752
      %v2754 = vrot.slane %v2603, 1
      %v2755 = vsel %vm513, %v2752, %v2754
      %v2756 = vrot.slane %v2604, 1
      %v2757 = vrot.slane %v2605, 1
      %v2758 = vsel %vm513, %v2756, %v2757
      %v2759 = vrot.slane %v2606, 1
      %v2760 = vsel %vm513, %v2757, %v2759
      %v2761 = vrot.slane %v2607, 1
      %v2762 = vrot.slane %v2608, 1
      %v2763 = vsel %vm513, %v2761, %v2762
      %v2764 = vrot.slane %v2609, 1
      %v2765 = vsel %vm513, %v2762, %v2764
      %v2766 = vrot.slane %v2610, 1
      %v2767 = vrot.slane %v2611, 1
      %v2768 = vsel %vm513, %v2766, %v2767
      %v2769 = vrot.slane %v2612, 1
      %v2770 = vsel %vm513, %v2767, %v2769
      %v2771 = vrot.slane %v2613, 1
      %v2772 = vrot.slane %v2614, 1
      %v2773 = vsel %vm513, %v2771, %v2772
      %v2774 = vrot.slane %v2615, 1
      %v2775 = vsel %vm513, %v2772, %v2774
      %v2776 = vrot.slane %v2616, 1
      %v2777 = vrot.slane %v2617, 1
      %v2778 = vsel %vm513, %v2776, %v2777
      %v2779 = vrot.slane %v2618, 1
      %v2780 = vsel %vm513, %v2777, %v2779
      %v2781 = vrot.slane %v2619, 1
      %v2782 = vrot.slane %v2620, 1
      %v2783 = vsel %vm513, %v2781, %v2782
      %v2784 = vrot.slane %v2621, 1
      %v2785 = vsel %vm513, %v2782, %v2784
      %v2786 = vrot.slane %v2622, 1
      %v2787 = vrot.slane %v2623, 1
      %v2788 = vsel %vm513, %v2786, %v2787
      %v2789 = vrot.slane %v2624, 1
      %v2790 = vsel %vm513, %v2787, %v2789
      %2791 = vrot.lane.b32.xlu0 %v2713, 32
      %v2792 = vpop.permute.xlu0 %2791
      %2793 = vrot.lane.b32.xlu0 %v2715, 32
      %v2794 = vpop.permute.xlu0 %2793
      %2795 = vrot.lane.b32.xlu0 %v2718, 32
      %v2796 = vpop.permute.xlu0 %2795
      %2797 = vrot.lane.b32.xlu0 %v2720, 32
      %v2798 = vpop.permute.xlu0 %2797
      %2799 = vrot.lane.b32.xlu0 %v2723, 32
      %v2800 = vpop.permute.xlu0 %2799
      %2801 = vrot.lane.b32.xlu0 %v2725, 32
      %v2802 = vpop.permute.xlu0 %2801
      %2803 = vrot.lane.b32.xlu0 %v2728, 32
      %v2804 = vpop.permute.xlu0 %2803
      %2805 = vrot.lane.b32.xlu0 %v2730, 32
      %v2806 = vpop.permute.xlu0 %2805
      %2807 = vrot.lane.b32.xlu0 %v2733, 32
      %v2808 = vpop.permute.xlu0 %2807
      %2809 = vrot.lane.b32.xlu0 %v2735, 32
      %v2810 = vpop.permute.xlu0 %2809
      %2811 = vrot.lane.b32.xlu0 %v2738, 32
      %v2812 = vpop.permute.xlu0 %2811
      %2813 = vrot.lane.b32.xlu0 %v2740, 32
      %v2814 = vpop.permute.xlu0 %2813
      %2815 = vrot.lane.b32.xlu0 %v2743, 32
      %v2816 = vpop.permute.xlu0 %2815
      %2817 = vrot.lane.b32.xlu0 %v2745, 32
      %v2818 = vpop.permute.xlu0 %2817
      %2819 = vrot.lane.b32.xlu0 %v2748, 32
      %v2820 = vpop.permute.xlu0 %2819
      %2821 = vrot.lane.b32.xlu0 %v2750, 32
      %v2822 = vpop.permute.xlu0 %2821
      %2823 = vrot.lane.b32.xlu0 %v2753, 32
      %v2824 = vpop.permute.xlu0 %2823
      %2825 = vrot.lane.b32.xlu0 %v2755, 32
      %v2826 = vpop.permute.xlu0 %2825
      %2827 = vrot.lane.b32.xlu0 %v2758, 32
      %v2828 = vpop.permute.xlu0 %2827
      %2829 = vrot.lane.b32.xlu0 %v2760, 32
      %v2830 = vpop.permute.xlu0 %2829
      %2831 = vrot.lane.b32.xlu0 %v2763, 32
      %v2832 = vpop.permute.xlu0 %2831
      %2833 = vrot.lane.b32.xlu0 %v2765, 32
      %v2834 = vpop.permute.xlu0 %2833
      %2835 = vrot.lane.b32.xlu0 %v2768, 32
      %v2836 = vpop.permute.xlu0 %2835
      %2837 = vrot.lane.b32.xlu0 %v2770, 32
      %v2838 = vpop.permute.xlu0 %2837
      %2839 = vrot.lane.b32.xlu0 %v2773, 32
      %v2840 = vpop.permute.xlu0 %2839
      %2841 = vrot.lane.b32.xlu0 %v2775, 32
      %v2842 = vpop.permute.xlu0 %2841
      %2843 = vrot.lane.b32.xlu0 %v2778, 32
      %v2844 = vpop.permute.xlu0 %2843
      %2845 = vrot.lane.b32.xlu0 %v2780, 32
      %v2846 = vpop.permute.xlu0 %2845
      %2847 = vrot.lane.b32.xlu0 %v2783, 32
      %v2848 = vpop.permute.xlu0 %2847
      %2849 = vrot.lane.b32.xlu0 %v2785, 32
      %v2850 = vpop.permute.xlu0 %2849
      %2851 = vrot.lane.b32.xlu0 %v2788, 32
      %v2852 = vpop.permute.xlu0 %2851
      %2853 = vrot.lane.b32.xlu0 %v2790, 32
      %v2854 = vpop.permute.xlu0 %2853
      %vm2887 = vcmask 523520
      %2888 = vst.msk [vmem:[#allocation4] sm:$0xff] %vm2887, %v2792
      %2889 = vst.msk [vmem:[#allocation4 + $0x18] sm:$0xff] %vm2887, %v2794
      %2890 = vst.msk [vmem:[#allocation4 + $0x30] sm:$0xff] %vm2887, %v2796
      %2891 = vst.msk [vmem:[#allocation4 + $0x48] sm:$0xff] %vm2887, %v2798
      %2892 = vst.msk [vmem:[#allocation4 + $0x60] sm:$0xff] %vm2887, %v2800
      %2893 = vst.msk [vmem:[#allocation4 + $0x78] sm:$0xff] %vm2887, %v2802
      %2894 = vst.msk [vmem:[#allocation4 + $0x90] sm:$0xff] %vm2887, %v2804
      %2895 = vst.msk [vmem:[#allocation4 + $0xa8] sm:$0xff] %vm2887, %v2806
      %2896 = vst.msk [vmem:[#allocation4 + $0xc0] sm:$0xff] %vm2887, %v2808
      %2897 = vst.msk [vmem:[#allocation4 + $0xd8] sm:$0xff] %vm2887, %v2810
      %2898 = vst.msk [vmem:[#allocation4 + $0xf0] sm:$0xff] %vm2887, %v2812
      %2899 = vst.msk [vmem:[#allocation4 + $0x108] sm:$0xff] %vm2887, %v2814
      %2900 = vst.msk [vmem:[#allocation4 + $0x120] sm:$0xff] %vm2887, %v2816
      %2901 = vst.msk [vmem:[#allocation4 + $0x138] sm:$0xff] %vm2887, %v2818
      %2902 = vst.msk [vmem:[#allocation4 + $0x150] sm:$0xff] %vm2887, %v2820
      %2903 = vst.msk [vmem:[#allocation4 + $0x168] sm:$0xff] %vm2887, %v2822
      %2904 = vst.msk [vmem:[#allocation4 + $0x180] sm:$0xff] %vm2887, %v2824
      %2905 = vst.msk [vmem:[#allocation4 + $0x198] sm:$0xff] %vm2887, %v2826
      %2906 = vst.msk [vmem:[#allocation4 + $0x1b0] sm:$0xff] %vm2887, %v2828
      %2907 = vst.msk [vmem:[#allocation4 + $0x1c8] sm:$0xff] %vm2887, %v2830
      %2908 = vst.msk [vmem:[#allocation4 + $0x1e0] sm:$0xff] %vm2887, %v2832
      %2909 = vst.msk [vmem:[#allocation4 + $0x1f8] sm:$0xff] %vm2887, %v2834
      %2910 = vst.msk [vmem:[#allocation4 + $0x210] sm:$0xff] %vm2887, %v2836
      %2911 = vst.msk [vmem:[#allocation4 + $0x228] sm:$0xff] %vm2887, %v2838
      %2912 = vst.msk [vmem:[#allocation4 + $0x240] sm:$0xff] %vm2887, %v2840
      %2913 = vst.msk [vmem:[#allocation4 + $0x258] sm:$0xff] %vm2887, %v2842
      %2914 = vst.msk [vmem:[#allocation4 + $0x270] sm:$0xff] %vm2887, %v2844
      %2915 = vst.msk [vmem:[#allocation4 + $0x288] sm:$0xff] %vm2887, %v2846
      %2916 = vst.msk [vmem:[#allocation4 + $0x2a0] sm:$0xff] %vm2887, %v2848
      %2917 = vst.msk [vmem:[#allocation4 + $0x2b8] sm:$0xff] %vm2887, %v2850
      %2918 = vst.msk [vmem:[#allocation4 + $0x2d0] sm:$0xff] %vm2887, %v2852
      %2919 = vst.msk [vmem:[#allocation4 + $0x2e8] sm:$0xff] %vm2887, %v2854
      %v2920 = vrot.slane %v2577, 2
      %v2921 = vrot.slane %v2578, 2
      %v2922 = vsel %vm723, %v2920, %v2921
      %v2923 = vrot.slane %v2579, 2
      %v2924 = vsel %vm723, %v2921, %v2923
      %v2925 = vrot.slane %v2580, 2
      %v2926 = vrot.slane %v2581, 2
      %v2927 = vsel %vm723, %v2925, %v2926
      %v2928 = vrot.slane %v2582, 2
      %v2929 = vsel %vm723, %v2926, %v2928
      %v2930 = vrot.slane %v2583, 2
      %v2931 = vrot.slane %v2584, 2
      %v2932 = vsel %vm723, %v2930, %v2931
      %v2933 = vrot.slane %v2585, 2
      %v2934 = vsel %vm723, %v2931, %v2933
      %v2935 = vrot.slane %v2586, 2
      %v2936 = vrot.slane %v2587, 2
      %v2937 = vsel %vm723, %v2935, %v2936
      %v2938 = vrot.slane %v2588, 2
      %v2939 = vsel %vm723, %v2936, %v2938
      %v2940 = vrot.slane %v2589, 2
      %v2941 = vrot.slane %v2590, 2
      %v2942 = vsel %vm723, %v2940, %v2941
      %v2943 = vrot.slane %v2591, 2
      %v2944 = vsel %vm723, %v2941, %v2943
      %v2945 = vrot.slane %v2592, 2
      %v2946 = vrot.slane %v2593, 2
      %v2947 = vsel %vm723, %v2945, %v2946
      %v2948 = vrot.slane %v2594, 2
      %v2949 = vsel %vm723, %v2946, %v2948
      %v2950 = vrot.slane %v2595, 2
      %v2951 = vrot.slane %v2596, 2
      %v2952 = vsel %vm723, %v2950, %v2951
      %v2953 = vrot.slane %v2597, 2
      %v2954 = vsel %vm723, %v2951, %v2953
      %v2955 = vrot.slane %v2598, 2
      %v2956 = vrot.slane %v2599, 2
      %v2957 = vsel %vm723, %v2955, %v2956
      %v2958 = vrot.slane %v2600, 2
      %v2959 = vsel %vm723, %v2956, %v2958
      %v2960 = vrot.slane %v2601, 2
      %v2961 = vrot.slane %v2602, 2
      %v2962 = vsel %vm723, %v2960, %v2961
      %v2963 = vrot.slane %v2603, 2
      %v2964 = vsel %vm723, %v2961, %v2963
      %v2965 = vrot.slane %v2604, 2
      %v2966 = vrot.slane %v2605, 2
      %v2967 = vsel %vm723, %v2965, %v2966
      %v2968 = vrot.slane %v2606, 2
      %v2969 = vsel %vm723, %v2966, %v2968
      %v2970 = vrot.slane %v2607, 2
      %v2971 = vrot.slane %v2608, 2
      %v2972 = vsel %vm723, %v2970, %v2971
      %v2973 = vrot.slane %v2609, 2
      %v2974 = vsel %vm723, %v2971, %v2973
      %v2975 = vrot.slane %v2610, 2
      %v2976 = vrot.slane %v2611, 2
      %v2977 = vsel %vm723, %v2975, %v2976
      %v2978 = vrot.slane %v2612, 2
      %v2979 = vsel %vm723, %v2976, %v2978
      %v2980 = vrot.slane %v2613, 2
      %v2981 = vrot.slane %v2614, 2
      %v2982 = vsel %vm723, %v2980, %v2981
      %v2983 = vrot.slane %v2615, 2
      %v2984 = vsel %vm723, %v2981, %v2983
      %v2985 = vrot.slane %v2616, 2
      %v2986 = vrot.slane %v2617, 2
      %v2987 = vsel %vm723, %v2985, %v2986
      %v2988 = vrot.slane %v2618, 2
      %v2989 = vsel %vm723, %v2986, %v2988
      %v2990 = vrot.slane %v2619, 2
      %v2991 = vrot.slane %v2620, 2
      %v2992 = vsel %vm723, %v2990, %v2991
      %v2993 = vrot.slane %v2621, 2
      %v2994 = vsel %vm723, %v2991, %v2993
      %v2995 = vrot.slane %v2622, 2
      %v2996 = vrot.slane %v2623, 2
      %v2997 = vsel %vm723, %v2995, %v2996
      %v2998 = vrot.slane %v2624, 2
      %v2999 = vsel %vm723, %v2996, %v2998
      %3000 = vrot.lane.b32.xlu0 %v2922, 64
      %v3001 = vpop.permute.xlu0 %3000
      %3002 = vrot.lane.b32.xlu0 %v2924, 64
      %v3003 = vpop.permute.xlu0 %3002
      %3004 = vrot.lane.b32.xlu0 %v2927, 64
      %v3005 = vpop.permute.xlu0 %3004
      %3006 = vrot.lane.b32.xlu0 %v2929, 64
      %v3007 = vpop.permute.xlu0 %3006
      %3008 = vrot.lane.b32.xlu0 %v2932, 64
      %v3009 = vpop.permute.xlu0 %3008
      %3010 = vrot.lane.b32.xlu0 %v2934, 64
      %v3011 = vpop.permute.xlu0 %3010
      %3012 = vrot.lane.b32.xlu0 %v2937, 64
      %v3013 = vpop.permute.xlu0 %3012
      %3014 = vrot.lane.b32.xlu0 %v2939, 64
      %v3015 = vpop.permute.xlu0 %3014
      %3016 = vrot.lane.b32.xlu0 %v2942, 64
      %v3017 = vpop.permute.xlu0 %3016
      %3018 = vrot.lane.b32.xlu0 %v2944, 64
      %v3019 = vpop.permute.xlu0 %3018
      %3020 = vrot.lane.b32.xlu0 %v2947, 64
      %v3021 = vpop.permute.xlu0 %3020
      %3022 = vrot.lane.b32.xlu0 %v2949, 64
      %v3023 = vpop.permute.xlu0 %3022
      %3024 = vrot.lane.b32.xlu0 %v2952, 64
      %v3025 = vpop.permute.xlu0 %3024
      %3026 = vrot.lane.b32.xlu0 %v2954, 64
      %v3027 = vpop.permute.xlu0 %3026
      %3028 = vrot.lane.b32.xlu0 %v2957, 64
      %v3029 = vpop.permute.xlu0 %3028
      %3030 = vrot.lane.b32.xlu0 %v2959, 64
      %v3031 = vpop.permute.xlu0 %3030
      %3032 = vrot.lane.b32.xlu0 %v2962, 64
      %v3033 = vpop.permute.xlu0 %3032
      %3034 = vrot.lane.b32.xlu0 %v2964, 64
      %v3035 = vpop.permute.xlu0 %3034
      %3036 = vrot.lane.b32.xlu0 %v2967, 64
      %v3037 = vpop.permute.xlu0 %3036
      %3038 = vrot.lane.b32.xlu0 %v2969, 64
      %v3039 = vpop.permute.xlu0 %3038
      %3040 = vrot.lane.b32.xlu0 %v2972, 64
      %v3041 = vpop.permute.xlu0 %3040
      %3042 = vrot.lane.b32.xlu0 %v2974, 64
      %v3043 = vpop.permute.xlu0 %3042
      %3044 = vrot.lane.b32.xlu0 %v2977, 64
      %v3045 = vpop.permute.xlu0 %3044
      %3046 = vrot.lane.b32.xlu0 %v2979, 64
      %v3047 = vpop.permute.xlu0 %3046
      %3048 = vrot.lane.b32.xlu0 %v2982, 64
      %v3049 = vpop.permute.xlu0 %3048
      %3050 = vrot.lane.b32.xlu0 %v2984, 64
      %v3051 = vpop.permute.xlu0 %3050
      %3052 = vrot.lane.b32.xlu0 %v2987, 64
      %v3053 = vpop.permute.xlu0 %3052
      %3054 = vrot.lane.b32.xlu0 %v2989, 64
      %v3055 = vpop.permute.xlu0 %3054
      %3056 = vrot.lane.b32.xlu0 %v2992, 64
      %v3057 = vpop.permute.xlu0 %3056
      %3058 = vrot.lane.b32.xlu0 %v2994, 64
      %v3059 = vpop.permute.xlu0 %3058
      %3060 = vrot.lane.b32.xlu0 %v2997, 64
      %v3061 = vpop.permute.xlu0 %3060
      %3062 = vrot.lane.b32.xlu0 %v2999, 64
      %v3063 = vpop.permute.xlu0 %3062
      %vm3096 = vcmask 785920
      %3097 = vst.msk [vmem:[#allocation4] sm:$0xff] %vm3096, %v3001
      %3098 = vst.msk [vmem:[#allocation4 + $0x18] sm:$0xff] %vm3096, %v3003
      %3099 = vst.msk [vmem:[#allocation4 + $0x30] sm:$0xff] %vm3096, %v3005
      %3100 = vst.msk [vmem:[#allocation4 + $0x48] sm:$0xff] %vm3096, %v3007
      %3101 = vst.msk [vmem:[#allocation4 + $0x60] sm:$0xff] %vm3096, %v3009
      %3102 = vst.msk [vmem:[#allocation4 + $0x78] sm:$0xff] %vm3096, %v3011
      %3103 = vst.msk [vmem:[#allocation4 + $0x90] sm:$0xff] %vm3096, %v3013
      %3104 = vst.msk [vmem:[#allocation4 + $0xa8] sm:$0xff] %vm3096, %v3015
      %3105 = vst.msk [vmem:[#allocation4 + $0xc0] sm:$0xff] %vm3096, %v3017
      %3106 = vst.msk [vmem:[#allocation4 + $0xd8] sm:$0xff] %vm3096, %v3019
      %3107 = vst.msk [vmem:[#allocation4 + $0xf0] sm:$0xff] %vm3096, %v3021
      %3108 = vst.msk [vmem:[#allocation4 + $0x108] sm:$0xff] %vm3096, %v3023
      %3109 = vst.msk [vmem:[#allocation4 + $0x120] sm:$0xff] %vm3096, %v3025
      %3110 = vst.msk [vmem:[#allocation4 + $0x138] sm:$0xff] %vm3096, %v3027
      %3111 = vst.msk [vmem:[#allocation4 + $0x150] sm:$0xff] %vm3096, %v3029
      %3112 = vst.msk [vmem:[#allocation4 + $0x168] sm:$0xff] %vm3096, %v3031
      %3113 = vst.msk [vmem:[#allocation4 + $0x180] sm:$0xff] %vm3096, %v3033
      %3114 = vst.msk [vmem:[#allocation4 + $0x198] sm:$0xff] %vm3096, %v3035
      %3115 = vst.msk [vmem:[#allocation4 + $0x1b0] sm:$0xff] %vm3096, %v3037
      %3116 = vst.msk [vmem:[#allocation4 + $0x1c8] sm:$0xff] %vm3096, %v3039
      %3117 = vst.msk [vmem:[#allocation4 + $0x1e0] sm:$0xff] %vm3096, %v3041
      %3118 = vst.msk [vmem:[#allocation4 + $0x1f8] sm:$0xff] %vm3096, %v3043
      %3119 = vst.msk [vmem:[#allocation4 + $0x210] sm:$0xff] %vm3096, %v3045
      %3120 = vst.msk [vmem:[#allocation4 + $0x228] sm:$0xff] %vm3096, %v3047
      %3121 = vst.msk [vmem:[#allocation4 + $0x240] sm:$0xff] %vm3096, %v3049
      %3122 = vst.msk [vmem:[#allocation4 + $0x258] sm:$0xff] %vm3096, %v3051
      %3123 = vst.msk [vmem:[#allocation4 + $0x270] sm:$0xff] %vm3096, %v3053
      %3124 = vst.msk [vmem:[#allocation4 + $0x288] sm:$0xff] %vm3096, %v3055
      %3125 = vst.msk [vmem:[#allocation4 + $0x2a0] sm:$0xff] %vm3096, %v3057
      %3126 = vst.msk [vmem:[#allocation4 + $0x2b8] sm:$0xff] %vm3096, %v3059
      %3127 = vst.msk [vmem:[#allocation4 + $0x2d0] sm:$0xff] %vm3096, %v3061
      %3128 = vst.msk [vmem:[#allocation4 + $0x2e8] sm:$0xff] %vm3096, %v3063
      %3131 = vrot.lane.b32.xlu0 %v2580, 96
      %v3132 = vpop.permute.xlu0 %3131
      %3133 = vrot.lane.b32.xlu0 %v2581, 96
      %v3134 = vpop.permute.xlu0 %3133
      %3135 = vrot.lane.b32.xlu0 %v2583, 96
      %v3136 = vpop.permute.xlu0 %3135
      %3137 = vrot.lane.b32.xlu0 %v2584, 96
      %v3138 = vpop.permute.xlu0 %3137
      %3139 = vrot.lane.b32.xlu0 %v2586, 96
      %v3140 = vpop.permute.xlu0 %3139
      %3141 = vrot.lane.b32.xlu0 %v2587, 96
      %v3142 = vpop.permute.xlu0 %3141
      %3143 = vrot.lane.b32.xlu0 %v2589, 96
      %v3144 = vpop.permute.xlu0 %3143
      %3145 = vrot.lane.b32.xlu0 %v2590, 96
      %v3146 = vpop.permute.xlu0 %3145
      %3147 = vrot.lane.b32.xlu0 %v2592, 96
      %v3148 = vpop.permute.xlu0 %3147
      %3149 = vrot.lane.b32.xlu0 %v2593, 96
      %v3150 = vpop.permute.xlu0 %3149
      %3151 = vrot.lane.b32.xlu0 %v2595, 96
      %v3152 = vpop.permute.xlu0 %3151
      %3153 = vrot.lane.b32.xlu0 %v2596, 96
      %v3154 = vpop.permute.xlu0 %3153
      %3155 = vrot.lane.b32.xlu0 %v2598, 96
      %v3156 = vpop.permute.xlu0 %3155
      %3157 = vrot.lane.b32.xlu0 %v2599, 96
      %v3158 = vpop.permute.xlu0 %3157
      %3159 = vrot.lane.b32.xlu0 %v2601, 96
      %v3160 = vpop.permute.xlu0 %3159
      %3161 = vrot.lane.b32.xlu0 %v2602, 96
      %v3162 = vpop.permute.xlu0 %3161
      %3163 = vrot.lane.b32.xlu0 %v2604, 96
      %v3164 = vpop.permute.xlu0 %3163
      %3165 = vrot.lane.b32.xlu0 %v2605, 96
      %v3166 = vpop.permute.xlu0 %3165
      %3167 = vrot.lane.b32.xlu0 %v2607, 96
      %v3168 = vpop.permute.xlu0 %3167
      %3169 = vrot.lane.b32.xlu0 %v2608, 96
      %v3170 = vpop.permute.xlu0 %3169
      %3171 = vrot.lane.b32.xlu0 %v2610, 96
      %v3172 = vpop.permute.xlu0 %3171
      %3173 = vrot.lane.b32.xlu0 %v2611, 96
      %v3174 = vpop.permute.xlu0 %3173
      %3175 = vrot.lane.b32.xlu0 %v2613, 96
      %v3176 = vpop.permute.xlu0 %3175
      %3177 = vrot.lane.b32.xlu0 %v2614, 96
      %v3178 = vpop.permute.xlu0 %3177
      %3179 = vrot.lane.b32.xlu0 %v2616, 96
      %v3180 = vpop.permute.xlu0 %3179
      %3181 = vrot.lane.b32.xlu0 %v2617, 96
      %v3182 = vpop.permute.xlu0 %3181
      %3183 = vrot.lane.b32.xlu0 %v2619, 96
      %v3184 = vpop.permute.xlu0 %3183
      %3185 = vrot.lane.b32.xlu0 %v2620, 96
      %v3186 = vpop.permute.xlu0 %3185
      %3187 = vrot.lane.b32.xlu0 %v2622, 96
      %v3188 = vpop.permute.xlu0 %3187
      %3189 = vrot.lane.b32.xlu0 %v2623, 96
      %v3190 = vpop.permute.xlu0 %3189
      %3191 = vrot.lane.b32.xlu0 %v2625, 96
      %v3192 = vpop.permute.xlu0 %3191
      %3193 = vrot.lane.b32.xlu0 %v2626, 96
      %v3194 = vpop.permute.xlu0 %3193
      %vm3227 = vcmask 1048320
      %3228 = vst.msk [vmem:[#allocation4] sm:$0xff] %vm3227, %v3132
      %3229 = vst.msk [vmem:[#allocation4 + $0x18] sm:$0xff] %vm3227, %v3134
      %3230 = vst.msk [vmem:[#allocation4 + $0x30] sm:$0xff] %vm3227, %v3136
      %3231 = vst.msk [vmem:[#allocation4 + $0x48] sm:$0xff] %vm3227, %v3138
      %3232 = vst.msk [vmem:[#allocation4 + $0x60] sm:$0xff] %vm3227, %v3140
      %3233 = vst.msk [vmem:[#allocation4 + $0x78] sm:$0xff] %vm3227, %v3142
      %3234 = vst.msk [vmem:[#allocation4 + $0x90] sm:$0xff] %vm3227, %v3144
      %3235 = vst.msk [vmem:[#allocation4 + $0xa8] sm:$0xff] %vm3227, %v3146
      %3236 = vst.msk [vmem:[#allocation4 + $0xc0] sm:$0xff] %vm3227, %v3148
      %3237 = vst.msk [vmem:[#allocation4 + $0xd8] sm:$0xff] %vm3227, %v3150
      %3238 = vst.msk [vmem:[#allocation4 + $0xf0] sm:$0xff] %vm3227, %v3152
      %3239 = vst.msk [vmem:[#allocation4 + $0x108] sm:$0xff] %vm3227, %v3154
      %3240 = vst.msk [vmem:[#allocation4 + $0x120] sm:$0xff] %vm3227, %v3156
      %3241 = vst.msk [vmem:[#allocation4 + $0x138] sm:$0xff] %vm3227, %v3158
      %3242 = vst.msk [vmem:[#allocation4 + $0x150] sm:$0xff] %vm3227, %v3160
      %3243 = vst.msk [vmem:[#allocation4 + $0x168] sm:$0xff] %vm3227, %v3162
      %3244 = vst.msk [vmem:[#allocation4 + $0x180] sm:$0xff] %vm3227, %v3164
      %3245 = vst.msk [vmem:[#allocation4 + $0x198] sm:$0xff] %vm3227, %v3166
      %3246 = vst.msk [vmem:[#allocation4 + $0x1b0] sm:$0xff] %vm3227, %v3168
      %3247 = vst.msk [vmem:[#allocation4 + $0x1c8] sm:$0xff] %vm3227, %v3170
      %3248 = vst.msk [vmem:[#allocation4 + $0x1e0] sm:$0xff] %vm3227, %v3172
      %3249 = vst.msk [vmem:[#allocation4 + $0x1f8] sm:$0xff] %vm3227, %v3174
      %3250 = vst.msk [vmem:[#allocation4 + $0x210] sm:$0xff] %vm3227, %v3176
      %3251 = vst.msk [vmem:[#allocation4 + $0x228] sm:$0xff] %vm3227, %v3178
      %3252 = vst.msk [vmem:[#allocation4 + $0x240] sm:$0xff] %vm3227, %v3180
      %3253 = vst.msk [vmem:[#allocation4 + $0x258] sm:$0xff] %vm3227, %v3182
      %3254 = vst.msk [vmem:[#allocation4 + $0x270] sm:$0xff] %vm3227, %v3184
      %3255 = vst.msk [vmem:[#allocation4 + $0x288] sm:$0xff] %vm3227, %v3186
      %3256 = vst.msk [vmem:[#allocation4 + $0x2a0] sm:$0xff] %vm3227, %v3188
      %3257 = vst.msk [vmem:[#allocation4 + $0x2b8] sm:$0xff] %vm3227, %v3190
      %3258 = vst.msk [vmem:[#allocation4 + $0x2d0] sm:$0xff] %vm3227, %v3192
      %3259 = vst.msk [vmem:[#allocation4 + $0x2e8] sm:$0xff] %vm3227, %v3194
      %v3261 = vrot.slane %v2625, 1
      %v3262 = vrot.slane %v2626, 1
      %v3263 = vsel %vm513, %v3261, %v3262
      %v3264 = vrot.slane %v2627, 1
      %v3265 = vsel %vm513, %v3262, %v3264
      %3298 = vst.msk [vmem:[#allocation4 + $0x8] sm:$0xff] %vm2488, %v2718
      %3299 = vst.msk [vmem:[#allocation4 + $0x20] sm:$0xff] %vm2488, %v2720
      %3300 = vst.msk [vmem:[#allocation4 + $0x38] sm:$0xff] %vm2488, %v2723
      %3301 = vst.msk [vmem:[#allocation4 + $0x50] sm:$0xff] %vm2488, %v2725
      %3302 = vst.msk [vmem:[#allocation4 + $0x68] sm:$0xff] %vm2488, %v2728
      %3303 = vst.msk [vmem:[#allocation4 + $0x80] sm:$0xff] %vm2488, %v2730
      %3304 = vst.msk [vmem:[#allocation4 + $0x98] sm:$0xff] %vm2488, %v2733
      %3305 = vst.msk [vmem:[#allocation4 + $0xb0] sm:$0xff] %vm2488, %v2735
      %3306 = vst.msk [vmem:[#allocation4 + $0xc8] sm:$0xff] %vm2488, %v2738
      %3307 = vst.msk [vmem:[#allocation4 + $0xe0] sm:$0xff] %vm2488, %v2740
      %3308 = vst.msk [vmem:[#allocation4 + $0xf8] sm:$0xff] %vm2488, %v2743
      %3309 = vst.msk [vmem:[#allocation4 + $0x110] sm:$0xff] %vm2488, %v2745
      %3310 = vst.msk [vmem:[#allocation4 + $0x128] sm:$0xff] %vm2488, %v2748
      %3311 = vst.msk [vmem:[#allocation4 + $0x140] sm:$0xff] %vm2488, %v2750
      %3312 = vst.msk [vmem:[#allocation4 + $0x158] sm:$0xff] %vm2488, %v2753
      %3313 = vst.msk [vmem:[#allocation4 + $0x170] sm:$0xff] %vm2488, %v2755
      %3314 = vst.msk [vmem:[#allocation4 + $0x188] sm:$0xff] %vm2488, %v2758
      %3315 = vst.msk [vmem:[#allocation4 + $0x1a0] sm:$0xff] %vm2488, %v2760
      %3316 = vst.msk [vmem:[#allocation4 + $0x1b8] sm:$0xff] %vm2488, %v2763
      %3317 = vst.msk [vmem:[#allocation4 + $0x1d0] sm:$0xff] %vm2488, %v2765
      %3318 = vst.msk [vmem:[#allocation4 + $0x1e8] sm:$0xff] %vm2488, %v2768
      %3319 = vst.msk [vmem:[#allocation4 + $0x200] sm:$0xff] %vm2488, %v2770
      %3320 = vst.msk [vmem:[#allocation4 + $0x218] sm:$0xff] %vm2488, %v2773
      %3321 = vst.msk [vmem:[#allocation4 + $0x230] sm:$0xff] %vm2488, %v2775
      %3322 = vst.msk [vmem:[#allocation4 + $0x248] sm:$0xff] %vm2488, %v2778
      %3323 = vst.msk [vmem:[#allocation4 + $0x260] sm:$0xff] %vm2488, %v2780
      %3324 = vst.msk [vmem:[#allocation4 + $0x278] sm:$0xff] %vm2488, %v2783
      %3325 = vst.msk [vmem:[#allocation4 + $0x290] sm:$0xff] %vm2488, %v2785
      %3326 = vst.msk [vmem:[#allocation4 + $0x2a8] sm:$0xff] %vm2488, %v2788
      %3327 = vst.msk [vmem:[#allocation4 + $0x2c0] sm:$0xff] %vm2488, %v2790
      %3328 = vst.msk [vmem:[#allocation4 + $0x2d8] sm:$0xff] %vm2488, %v3263
      %3329 = vst.msk [vmem:[#allocation4 + $0x2f0] sm:$0xff] %vm2488, %v3265
      %v3330 = vrot.slane %v2625, 2
      %v3331 = vrot.slane %v2626, 2
      %v3332 = vsel %vm723, %v3330, %v3331
      %v3333 = vrot.slane %v2627, 2
      %v3334 = vsel %vm723, %v3331, %v3333
      %3335 = vrot.lane.b32.xlu0 %v2927, 32
      %v3336 = vpop.permute.xlu0 %3335
      %3337 = vrot.lane.b32.xlu0 %v2929, 32
      %v3338 = vpop.permute.xlu0 %3337
      %3339 = vrot.lane.b32.xlu0 %v2932, 32
      %v3340 = vpop.permute.xlu0 %3339
      %3341 = vrot.lane.b32.xlu0 %v2934, 32
      %v3342 = vpop.permute.xlu0 %3341
      %3343 = vrot.lane.b32.xlu0 %v2937, 32
      %v3344 = vpop.permute.xlu0 %3343
      %3345 = vrot.lane.b32.xlu0 %v2939, 32
      %v3346 = vpop.permute.xlu0 %3345
      %3347 = vrot.lane.b32.xlu0 %v2942, 32
      %v3348 = vpop.permute.xlu0 %3347
      %3349 = vrot.lane.b32.xlu0 %v2944, 32
      %v3350 = vpop.permute.xlu0 %3349
      %3351 = vrot.lane.b32.xlu0 %v2947, 32
      %v3352 = vpop.permute.xlu0 %3351
      %3353 = vrot.lane.b32.xlu0 %v2949, 32
      %v3354 = vpop.permute.xlu0 %3353
      %3355 = vrot.lane.b32.xlu0 %v2952, 32
      %v3356 = vpop.permute.xlu0 %3355
      %3357 = vrot.lane.b32.xlu0 %v2954, 32
      %v3358 = vpop.permute.xlu0 %3357
      %3359 = vrot.lane.b32.xlu0 %v2957, 32
      %v3360 = vpop.permute.xlu0 %3359
      %3361 = vrot.lane.b32.xlu0 %v2959, 32
      %v3362 = vpop.permute.xlu0 %3361
      %3363 = vrot.lane.b32.xlu0 %v2962, 32
      %v3364 = vpop.permute.xlu0 %3363
      %3365 = vrot.lane.b32.xlu0 %v2964, 32
      %v3366 = vpop.permute.xlu0 %3365
      %3367 = vrot.lane.b32.xlu0 %v2967, 32
      %v3368 = vpop.permute.xlu0 %3367
      %3369 = vrot.lane.b32.xlu0 %v2969, 32
      %v3370 = vpop.permute.xlu0 %3369
      %3371 = vrot.lane.b32.xlu0 %v2972, 32
      %v3372 = vpop.permute.xlu0 %3371
      %3373 = vrot.lane.b32.xlu0 %v2974, 32
      %v3374 = vpop.permute.xlu0 %3373
      %3375 = vrot.lane.b32.xlu0 %v2977, 32
      %v3376 = vpop.permute.xlu0 %3375
      %3377 = vrot.lane.b32.xlu0 %v2979, 32
      %v3378 = vpop.permute.xlu0 %3377
      %3379 = vrot.lane.b32.xlu0 %v2982, 32
      %v3380 = vpop.permute.xlu0 %3379
      %3381 = vrot.lane.b32.xlu0 %v2984, 32
      %v3382 = vpop.permute.xlu0 %3381
      %3383 = vrot.lane.b32.xlu0 %v2987, 32
      %v3384 = vpop.permute.xlu0 %3383
      %3385 = vrot.lane.b32.xlu0 %v2989, 32
      %v3386 = vpop.permute.xlu0 %3385
      %3387 = vrot.lane.b32.xlu0 %v2992, 32
      %v3388 = vpop.permute.xlu0 %3387
      %3389 = vrot.lane.b32.xlu0 %v2994, 32
      %v3390 = vpop.permute.xlu0 %3389
      %3391 = vrot.lane.b32.xlu0 %v2997, 32
      %v3392 = vpop.permute.xlu0 %3391
      %3393 = vrot.lane.b32.xlu0 %v2999, 32
      %v3394 = vpop.permute.xlu0 %3393
      %3395 = vrot.lane.b32.xlu0 %v3332, 32
      %v3396 = vpop.permute.xlu0 %3395
      %3397 = vrot.lane.b32.xlu0 %v3334, 32
      %v3398 = vpop.permute.xlu0 %3397
      %3431 = vst.msk [vmem:[#allocation4 + $0x8] sm:$0xff] %vm2887, %v3336
      %3432 = vst.msk [vmem:[#allocation4 + $0x20] sm:$0xff] %vm2887, %v3338
      %3433 = vst.msk [vmem:[#allocation4 + $0x38] sm:$0xff] %vm2887, %v3340
      %3434 = vst.msk [vmem:[#allocation4 + $0x50] sm:$0xff] %vm2887, %v3342
      %3435 = vst.msk [vmem:[#allocation4 + $0x68] sm:$0xff] %vm2887, %v3344
      %3436 = vst.msk [vmem:[#allocation4 + $0x80] sm:$0xff] %vm2887, %v3346
      %3437 = vst.msk [vmem:[#allocation4 + $0x98] sm:$0xff] %vm2887, %v3348
      %3438 = vst.msk [vmem:[#allocation4 + $0xb0] sm:$0xff] %vm2887, %v3350
      %3439 = vst.msk [vmem:[#allocation4 + $0xc8] sm:$0xff] %vm2887, %v3352
      %3440 = vst.msk [vmem:[#allocation4 + $0xe0] sm:$0xff] %vm2887, %v3354
      %3441 = vst.msk [vmem:[#allocation4 + $0xf8] sm:$0xff] %vm2887, %v3356
      %3442 = vst.msk [vmem:[#allocation4 + $0x110] sm:$0xff] %vm2887, %v3358
      %3443 = vst.msk [vmem:[#allocation4 + $0x128] sm:$0xff] %vm2887, %v3360
      %3444 = vst.msk [vmem:[#allocation4 + $0x140] sm:$0xff] %vm2887, %v3362
      %3445 = vst.msk [vmem:[#allocation4 + $0x158] sm:$0xff] %vm2887, %v3364
      %3446 = vst.msk [vmem:[#allocation4 + $0x170] sm:$0xff] %vm2887, %v3366
      %3447 = vst.msk [vmem:[#allocation4 + $0x188] sm:$0xff] %vm2887, %v3368
      %3448 = vst.msk [vmem:[#allocation4 + $0x1a0] sm:$0xff] %vm2887, %v3370
      %3449 = vst.msk [vmem:[#allocation4 + $0x1b8] sm:$0xff] %vm2887, %v3372
      %3450 = vst.msk [vmem:[#allocation4 + $0x1d0] sm:$0xff] %vm2887, %v3374
      %3451 = vst.msk [vmem:[#allocation4 + $0x1e8] sm:$0xff] %vm2887, %v3376
      %3452 = vst.msk [vmem:[#allocation4 + $0x200] sm:$0xff] %vm2887, %v3378
      %3453 = vst.msk [vmem:[#allocation4 + $0x218] sm:$0xff] %vm2887, %v3380
      %3454 = vst.msk [vmem:[#allocation4 + $0x230] sm:$0xff] %vm2887, %v3382
      %3455 = vst.msk [vmem:[#allocation4 + $0x248] sm:$0xff] %vm2887, %v3384
      %3456 = vst.msk [vmem:[#allocation4 + $0x260] sm:$0xff] %vm2887, %v3386
      %3457 = vst.msk [vmem:[#allocation4 + $0x278] sm:$0xff] %vm2887, %v3388
      %3458 = vst.msk [vmem:[#allocation4 + $0x290] sm:$0xff] %vm2887, %v3390
      %3459 = vst.msk [vmem:[#allocation4 + $0x2a8] sm:$0xff] %vm2887, %v3392
      %3460 = vst.msk [vmem:[#allocation4 + $0x2c0] sm:$0xff] %vm2887, %v3394
      %3461 = vst.msk [vmem:[#allocation4 + $0x2d8] sm:$0xff] %vm2887, %v3396
      %3462 = vst.msk [vmem:[#allocation4 + $0x2f0] sm:$0xff] %vm2887, %v3398
      %3465 = vrot.lane.b32.xlu0 %v2583, 64
      %v3466 = vpop.permute.xlu0 %3465
      %3467 = vrot.lane.b32.xlu0 %v2584, 64
      %v3468 = vpop.permute.xlu0 %3467
      %3469 = vrot.lane.b32.xlu0 %v2586, 64
      %v3470 = vpop.permute.xlu0 %3469
      %3471 = vrot.lane.b32.xlu0 %v2587, 64
      %v3472 = vpop.permute.xlu0 %3471
      %3473 = vrot.lane.b32.xlu0 %v2589, 64
      %v3474 = vpop.permute.xlu0 %3473
      %3475 = vrot.lane.b32.xlu0 %v2590, 64
      %v3476 = vpop.permute.xlu0 %3475
      %3477 = vrot.lane.b32.xlu0 %v2592, 64
      %v3478 = vpop.permute.xlu0 %3477
      %3479 = vrot.lane.b32.xlu0 %v2593, 64
      %v3480 = vpop.permute.xlu0 %3479
      %3481 = vrot.lane.b32.xlu0 %v2595, 64
      %v3482 = vpop.permute.xlu0 %3481
      %3483 = vrot.lane.b32.xlu0 %v2596, 64
      %v3484 = vpop.permute.xlu0 %3483
      %3485 = vrot.lane.b32.xlu0 %v2598, 64
      %v3486 = vpop.permute.xlu0 %3485
      %3487 = vrot.lane.b32.xlu0 %v2599, 64
      %v3488 = vpop.permute.xlu0 %3487
      %3489 = vrot.lane.b32.xlu0 %v2601, 64
      %v3490 = vpop.permute.xlu0 %3489
      %3491 = vrot.lane.b32.xlu0 %v2602, 64
      %v3492 = vpop.permute.xlu0 %3491
      %3493 = vrot.lane.b32.xlu0 %v2604, 64
      %v3494 = vpop.permute.xlu0 %3493
      %3495 = vrot.lane.b32.xlu0 %v2605, 64
      %v3496 = vpop.permute.xlu0 %3495
      %3497 = vrot.lane.b32.xlu0 %v2607, 64
      %v3498 = vpop.permute.xlu0 %3497
      %3499 = vrot.lane.b32.xlu0 %v2608, 64
      %v3500 = vpop.permute.xlu0 %3499
      %3501 = vrot.lane.b32.xlu0 %v2610, 64
      %v3502 = vpop.permute.xlu0 %3501
      %3503 = vrot.lane.b32.xlu0 %v2611, 64
      %v3504 = vpop.permute.xlu0 %3503
      %3505 = vrot.lane.b32.xlu0 %v2613, 64
      %v3506 = vpop.permute.xlu0 %3505
      %3507 = vrot.lane.b32.xlu0 %v2614, 64
      %v3508 = vpop.permute.xlu0 %3507
      %3509 = vrot.lane.b32.xlu0 %v2616, 64
      %v3510 = vpop.permute.xlu0 %3509
      %3511 = vrot.lane.b32.xlu0 %v2617, 64
      %v3512 = vpop.permute.xlu0 %3511
      %3513 = vrot.lane.b32.xlu0 %v2619, 64
      %v3514 = vpop.permute.xlu0 %3513
      %3515 = vrot.lane.b32.xlu0 %v2620, 64
      %v3516 = vpop.permute.xlu0 %3515
      %3517 = vrot.lane.b32.xlu0 %v2622, 64
      %v3518 = vpop.permute.xlu0 %3517
      %3519 = vrot.lane.b32.xlu0 %v2623, 64
      %v3520 = vpop.permute.xlu0 %3519
      %3521 = vrot.lane.b32.xlu0 %v2625, 64
      %v3522 = vpop.permute.xlu0 %3521
      %3523 = vrot.lane.b32.xlu0 %v2626, 64
      %v3524 = vpop.permute.xlu0 %3523
      %3525 = vrot.lane.b32.xlu0 %v2628, 64
      %v3526 = vpop.permute.xlu0 %3525
      %3527 = vrot.lane.b32.xlu0 %v2629, 64
      %v3528 = vpop.permute.xlu0 %3527
      %3561 = vst.msk [vmem:[#allocation4 + $0x8] sm:$0xff] %vm3096, %v3466
      %3562 = vst.msk [vmem:[#allocation4 + $0x20] sm:$0xff] %vm3096, %v3468
      %3563 = vst.msk [vmem:[#allocation4 + $0x38] sm:$0xff] %vm3096, %v3470
      %3564 = vst.msk [vmem:[#allocation4 + $0x50] sm:$0xff] %vm3096, %v3472
      %3565 = vst.msk [vmem:[#allocation4 + $0x68] sm:$0xff] %vm3096, %v3474
      %3566 = vst.msk [vmem:[#allocation4 + $0x80] sm:$0xff] %vm3096, %v3476
      %3567 = vst.msk [vmem:[#allocation4 + $0x98] sm:$0xff] %vm3096, %v3478
      %3568 = vst.msk [vmem:[#allocation4 + $0xb0] sm:$0xff] %vm3096, %v3480
      %3569 = vst.msk [vmem:[#allocation4 + $0xc8] sm:$0xff] %vm3096, %v3482
      %3570 = vst.msk [vmem:[#allocation4 + $0xe0] sm:$0xff] %vm3096, %v3484
      %3571 = vst.msk [vmem:[#allocation4 + $0xf8] sm:$0xff] %vm3096, %v3486
      %3572 = vst.msk [vmem:[#allocation4 + $0x110] sm:$0xff] %vm3096, %v3488
      %3573 = vst.msk [vmem:[#allocation4 + $0x128] sm:$0xff] %vm3096, %v3490
      %3574 = vst.msk [vmem:[#allocation4 + $0x140] sm:$0xff] %vm3096, %v3492
      %3575 = vst.msk [vmem:[#allocation4 + $0x158] sm:$0xff] %vm3096, %v3494
      %3576 = vst.msk [vmem:[#allocation4 + $0x170] sm:$0xff] %vm3096, %v3496
      %3577 = vst.msk [vmem:[#allocation4 + $0x188] sm:$0xff] %vm3096, %v3498
      %3578 = vst.msk [vmem:[#allocation4 + $0x1a0] sm:$0xff] %vm3096, %v3500
      %3579 = vst.msk [vmem:[#allocation4 + $0x1b8] sm:$0xff] %vm3096, %v3502
      %3580 = vst.msk [vmem:[#allocation4 + $0x1d0] sm:$0xff] %vm3096, %v3504
      %3581 = vst.msk [vmem:[#allocation4 + $0x1e8] sm:$0xff] %vm3096, %v3506
      %3582 = vst.msk [vmem:[#allocation4 + $0x200] sm:$0xff] %vm3096, %v3508
      %3583 = vst.msk [vmem:[#allocation4 + $0x218] sm:$0xff] %vm3096, %v3510
      %3584 = vst.msk [vmem:[#allocation4 + $0x230] sm:$0xff] %vm3096, %v3512
      %3585 = vst.msk [vmem:[#allocation4 + $0x248] sm:$0xff] %vm3096, %v3514
      %3586 = vst.msk [vmem:[#allocation4 + $0x260] sm:$0xff] %vm3096, %v3516
      %3587 = vst.msk [vmem:[#allocation4 + $0x278] sm:$0xff] %vm3096, %v3518
      %3588 = vst.msk [vmem:[#allocation4 + $0x290] sm:$0xff] %vm3096, %v3520
      %3589 = vst.msk [vmem:[#allocation4 + $0x2a8] sm:$0xff] %vm3096, %v3522
      %3590 = vst.msk [vmem:[#allocation4 + $0x2c0] sm:$0xff] %vm3096, %v3524
      %3591 = vst.msk [vmem:[#allocation4 + $0x2d8] sm:$0xff] %vm3096, %v3526
      %3592 = vst.msk [vmem:[#allocation4 + $0x2f0] sm:$0xff] %vm3096, %v3528
      %v3594 = vrot.slane %v2628, 1
      %v3595 = vrot.slane %v2629, 1
      %v3596 = vsel %vm513, %v3594, %v3595
      %v3597 = vrot.slane %v2630, 1
      %v3598 = vsel %vm513, %v3595, %v3597
      %3599 = vrot.lane.b32.xlu0 %v2723, 96
      %v3600 = vpop.permute.xlu0 %3599
      %3601 = vrot.lane.b32.xlu0 %v2725, 96
      %v3602 = vpop.permute.xlu0 %3601
      %3603 = vrot.lane.b32.xlu0 %v2728, 96
      %v3604 = vpop.permute.xlu0 %3603
      %3605 = vrot.lane.b32.xlu0 %v2730, 96
      %v3606 = vpop.permute.xlu0 %3605
      %3607 = vrot.lane.b32.xlu0 %v2733, 96
      %v3608 = vpop.permute.xlu0 %3607
      %3609 = vrot.lane.b32.xlu0 %v2735, 96
      %v3610 = vpop.permute.xlu0 %3609
      %3611 = vrot.lane.b32.xlu0 %v2738, 96
      %v3612 = vpop.permute.xlu0 %3611
      %3613 = vrot.lane.b32.xlu0 %v2740, 96
      %v3614 = vpop.permute.xlu0 %3613
      %3615 = vrot.lane.b32.xlu0 %v2743, 96
      %v3616 = vpop.permute.xlu0 %3615
      %3617 = vrot.lane.b32.xlu0 %v2745, 96
      %v3618 = vpop.permute.xlu0 %3617
      %3619 = vrot.lane.b32.xlu0 %v2748, 96
      %v3620 = vpop.permute.xlu0 %3619
      %3621 = vrot.lane.b32.xlu0 %v2750, 96
      %v3622 = vpop.permute.xlu0 %3621
      %3623 = vrot.lane.b32.xlu0 %v2753, 96
      %v3624 = vpop.permute.xlu0 %3623
      %3625 = vrot.lane.b32.xlu0 %v2755, 96
      %v3626 = vpop.permute.xlu0 %3625
      %3627 = vrot.lane.b32.xlu0 %v2758, 96
      %v3628 = vpop.permute.xlu0 %3627
      %3629 = vrot.lane.b32.xlu0 %v2760, 96
      %v3630 = vpop.permute.xlu0 %3629
      %3631 = vrot.lane.b32.xlu0 %v2763, 96
      %v3632 = vpop.permute.xlu0 %3631
      %3633 = vrot.lane.b32.xlu0 %v2765, 96
      %v3634 = vpop.permute.xlu0 %3633
      %3635 = vrot.lane.b32.xlu0 %v2768, 96
      %v3636 = vpop.permute.xlu0 %3635
      %3637 = vrot.lane.b32.xlu0 %v2770, 96
      %v3638 = vpop.permute.xlu0 %3637
      %3639 = vrot.lane.b32.xlu0 %v2773, 96
      %v3640 = vpop.permute.xlu0 %3639
      %3641 = vrot.lane.b32.xlu0 %v2775, 96
      %v3642 = vpop.permute.xlu0 %3641
      %3643 = vrot.lane.b32.xlu0 %v2778, 96
      %v3644 = vpop.permute.xlu0 %3643
      %3645 = vrot.lane.b32.xlu0 %v2780, 96
      %v3646 = vpop.permute.xlu0 %3645
      %3647 = vrot.lane.b32.xlu0 %v2783, 96
      %v3648 = vpop.permute.xlu0 %3647
      %3649 = vrot.lane.b32.xlu0 %v2785, 96
      %v3650 = vpop.permute.xlu0 %3649
      %3651 = vrot.lane.b32.xlu0 %v2788, 96
      %v3652 = vpop.permute.xlu0 %3651
      %3653 = vrot.lane.b32.xlu0 %v2790, 96
      %v3654 = vpop.permute.xlu0 %3653
      %3655 = vrot.lane.b32.xlu0 %v3263, 96
      %v3656 = vpop.permute.xlu0 %3655
      %3657 = vrot.lane.b32.xlu0 %v3265, 96
      %v3658 = vpop.permute.xlu0 %3657
      %3659 = vrot.lane.b32.xlu0 %v3596, 96
      %v3660 = vpop.permute.xlu0 %3659
      %3661 = vrot.lane.b32.xlu0 %v3598, 96
      %v3662 = vpop.permute.xlu0 %3661
      %3695 = vst.msk [vmem:[#allocation4 + $0x8] sm:$0xff] %vm3227, %v3600
      %3696 = vst.msk [vmem:[#allocation4 + $0x20] sm:$0xff] %vm3227, %v3602
      %3697 = vst.msk [vmem:[#allocation4 + $0x38] sm:$0xff] %vm3227, %v3604
      %3698 = vst.msk [vmem:[#allocation4 + $0x50] sm:$0xff] %vm3227, %v3606
      %3699 = vst.msk [vmem:[#allocation4 + $0x68] sm:$0xff] %vm3227, %v3608
      %3700 = vst.msk [vmem:[#allocation4 + $0x80] sm:$0xff] %vm3227, %v3610
      %3701 = vst.msk [vmem:[#allocation4 + $0x98] sm:$0xff] %vm3227, %v3612
      %3702 = vst.msk [vmem:[#allocation4 + $0xb0] sm:$0xff] %vm3227, %v3614
      %3703 = vst.msk [vmem:[#allocation4 + $0xc8] sm:$0xff] %vm3227, %v3616
      %3704 = vst.msk [vmem:[#allocation4 + $0xe0] sm:$0xff] %vm3227, %v3618
      %3705 = vst.msk [vmem:[#allocation4 + $0xf8] sm:$0xff] %vm3227, %v3620
      %3706 = vst.msk [vmem:[#allocation4 + $0x110] sm:$0xff] %vm3227, %v3622
      %3707 = vst.msk [vmem:[#allocation4 + $0x128] sm:$0xff] %vm3227, %v3624
      %3708 = vst.msk [vmem:[#allocation4 + $0x140] sm:$0xff] %vm3227, %v3626
      %3709 = vst.msk [vmem:[#allocation4 + $0x158] sm:$0xff] %vm3227, %v3628
      %3710 = vst.msk [vmem:[#allocation4 + $0x170] sm:$0xff] %vm3227, %v3630
      %3711 = vst.msk [vmem:[#allocation4 + $0x188] sm:$0xff] %vm3227, %v3632
      %3712 = vst.msk [vmem:[#allocation4 + $0x1a0] sm:$0xff] %vm3227, %v3634
      %3713 = vst.msk [vmem:[#allocation4 + $0x1b8] sm:$0xff] %vm3227, %v3636
      %3714 = vst.msk [vmem:[#allocation4 + $0x1d0] sm:$0xff] %vm3227, %v3638
      %3715 = vst.msk [vmem:[#allocation4 + $0x1e8] sm:$0xff] %vm3227, %v3640
      %3716 = vst.msk [vmem:[#allocation4 + $0x200] sm:$0xff] %vm3227, %v3642
      %3717 = vst.msk [vmem:[#allocation4 + $0x218] sm:$0xff] %vm3227, %v3644
      %3718 = vst.msk [vmem:[#allocation4 + $0x230] sm:$0xff] %vm3227, %v3646
      %3719 = vst.msk [vmem:[#allocation4 + $0x248] sm:$0xff] %vm3227, %v3648
      %3720 = vst.msk [vmem:[#allocation4 + $0x260] sm:$0xff] %vm3227, %v3650
      %3721 = vst.msk [vmem:[#allocation4 + $0x278] sm:$0xff] %vm3227, %v3652
      %3722 = vst.msk [vmem:[#allocation4 + $0x290] sm:$0xff] %vm3227, %v3654
      %3723 = vst.msk [vmem:[#allocation4 + $0x2a8] sm:$0xff] %vm3227, %v3656
      %3724 = vst.msk [vmem:[#allocation4 + $0x2c0] sm:$0xff] %vm3227, %v3658
      %3725 = vst.msk [vmem:[#allocation4 + $0x2d8] sm:$0xff] %vm3227, %v3660
      %3726 = vst.msk [vmem:[#allocation4 + $0x2f0] sm:$0xff] %vm3227, %v3662
      %v3727 = vrot.slane %v2628, 2
      %v3728 = vrot.slane %v2629, 2
      %v3729 = vsel %vm723, %v3727, %v3728
      %v3730 = vrot.slane %v2630, 2
      %v3731 = vsel %vm723, %v3728, %v3730
      %3764 = vst.msk [vmem:[#allocation4 + $0x10] sm:$0xff] %vm2488, %v2932
      %3765 = vst.msk [vmem:[#allocation4 + $0x28] sm:$0xff] %vm2488, %v2934
      %3766 = vst.msk [vmem:[#allocation4 + $0x40] sm:$0xff] %vm2488, %v2937
      %3767 = vst.msk [vmem:[#allocation4 + $0x58] sm:$0xff] %vm2488, %v2939
      %3768 = vst.msk [vmem:[#allocation4 + $0x70] sm:$0xff] %vm2488, %v2942
      %3769 = vst.msk [vmem:[#allocation4 + $0x88] sm:$0xff] %vm2488, %v2944
      %3770 = vst.msk [vmem:[#allocation4 + $0xa0] sm:$0xff] %vm2488, %v2947
      %3771 = vst.msk [vmem:[#allocation4 + $0xb8] sm:$0xff] %vm2488, %v2949
      %3772 = vst.msk [vmem:[#allocation4 + $0xd0] sm:$0xff] %vm2488, %v2952
      %3773 = vst.msk [vmem:[#allocation4 + $0xe8] sm:$0xff] %vm2488, %v2954
      %3774 = vst.msk [vmem:[#allocation4 + $0x100] sm:$0xff] %vm2488, %v2957
      %3775 = vst.msk [vmem:[#allocation4 + $0x118] sm:$0xff] %vm2488, %v2959
      %3776 = vst.msk [vmem:[#allocation4 + $0x130] sm:$0xff] %vm2488, %v2962
      %3777 = vst.msk [vmem:[#allocation4 + $0x148] sm:$0xff] %vm2488, %v2964
      %3778 = vst.msk [vmem:[#allocation4 + $0x160] sm:$0xff] %vm2488, %v2967
      %3779 = vst.msk [vmem:[#allocation4 + $0x178] sm:$0xff] %vm2488, %v2969
      %3780 = vst.msk [vmem:[#allocation4 + $0x190] sm:$0xff] %vm2488, %v2972
      %3781 = vst.msk [vmem:[#allocation4 + $0x1a8] sm:$0xff] %vm2488, %v2974
      %3782 = vst.msk [vmem:[#allocation4 + $0x1c0] sm:$0xff] %vm2488, %v2977
      %3783 = vst.msk [vmem:[#allocation4 + $0x1d8] sm:$0xff] %vm2488, %v2979
      %3784 = vst.msk [vmem:[#allocation4 + $0x1f0] sm:$0xff] %vm2488, %v2982
      %3785 = vst.msk [vmem:[#allocation4 + $0x208] sm:$0xff] %vm2488, %v2984
      %3786 = vst.msk [vmem:[#allocation4 + $0x220] sm:$0xff] %vm2488, %v2987
      %3787 = vst.msk [vmem:[#allocation4 + $0x238] sm:$0xff] %vm2488, %v2989
      %3788 = vst.msk [vmem:[#allocation4 + $0x250] sm:$0xff] %vm2488, %v2992
      %3789 = vst.msk [vmem:[#allocation4 + $0x268] sm:$0xff] %vm2488, %v2994
      %3790 = vst.msk [vmem:[#allocation4 + $0x280] sm:$0xff] %vm2488, %v2997
      %3791 = vst.msk [vmem:[#allocation4 + $0x298] sm:$0xff] %vm2488, %v2999
      %3792 = vst.msk [vmem:[#allocation4 + $0x2b0] sm:$0xff] %vm2488, %v3332
      %3793 = vst.msk [vmem:[#allocation4 + $0x2c8] sm:$0xff] %vm2488, %v3334
      %3794 = vst.msk [vmem:[#allocation4 + $0x2e0] sm:$0xff] %vm2488, %v3729
      %3795 = vst.msk [vmem:[#allocation4 + $0x2f8] sm:$0xff] %vm2488, %v3731
      %v3796 = vld [vmem:[#allocation4] sm:$0xff]
      %v3797 = vld [vmem:[#allocation4 + $0x8] sm:$0xff]
      %v3798 = vld [vmem:[#allocation4 + $0x10] sm:$0xff]
      %v3799 = vld [vmem:[#allocation4 + $0x18] sm:$0xff]
      %v3800 = vld [vmem:[#allocation4 + $0x20] sm:$0xff]
      %v3801 = vld [vmem:[#allocation4 + $0x28] sm:$0xff]
      %v3802 = vld [vmem:[#allocation4 + $0x30] sm:$0xff]
      %v3803 = vld [vmem:[#allocation4 + $0x38] sm:$0xff]
      %v3804 = vld [vmem:[#allocation4 + $0x40] sm:$0xff]
      %v3805 = vld [vmem:[#allocation4 + $0x48] sm:$0xff]
      %v3806 = vld [vmem:[#allocation4 + $0x50] sm:$0xff]
      %v3807 = vld [vmem:[#allocation4 + $0x58] sm:$0xff]
      %v3808 = vld [vmem:[#allocation4 + $0x60] sm:$0xff]
      %v3809 = vld [vmem:[#allocation4 + $0x68] sm:$0xff]
      %v3810 = vld [vmem:[#allocation4 + $0x70] sm:$0xff]
      %v3811 = vld [vmem:[#allocation4 + $0x78] sm:$0xff]
      %v3812 = vld [vmem:[#allocation4 + $0x80] sm:$0xff]
      %v3813 = vld [vmem:[#allocation4 + $0x88] sm:$0xff]
      %v3814 = vld [vmem:[#allocation4 + $0x90] sm:$0xff]
      %v3815 = vld [vmem:[#allocation4 + $0x98] sm:$0xff]
      %v3816 = vld [vmem:[#allocation4 + $0xa0] sm:$0xff]
      %v3817 = vld [vmem:[#allocation4 + $0xa8] sm:$0xff]
      %v3818 = vld [vmem:[#allocation4 + $0xb0] sm:$0xff]
      %v3819 = vld [vmem:[#allocation4 + $0xb8] sm:$0xff]
      %v3820 = vld [vmem:[#allocation4 + $0xc0] sm:$0xff]
      %v3821 = vld [vmem:[#allocation4 + $0xc8] sm:$0xff]
      %v3822 = vld [vmem:[#allocation4 + $0xd0] sm:$0xff]
      %v3823 = vld [vmem:[#allocation4 + $0xd8] sm:$0xff]
      %v3824 = vld [vmem:[#allocation4 + $0xe0] sm:$0xff]
      %v3825 = vld [vmem:[#allocation4 + $0xe8] sm:$0xff]
      %v3826 = vld [vmem:[#allocation4 + $0xf0] sm:$0xff]
      %v3827 = vld [vmem:[#allocation4 + $0xf8] sm:$0xff]
      %v3828 = vld [vmem:[#allocation4 + $0x100] sm:$0xff]
      %v3829 = vld [vmem:[#allocation4 + $0x108] sm:$0xff]
      %v3830 = vld [vmem:[#allocation4 + $0x110] sm:$0xff]
      %v3831 = vld [vmem:[#allocation4 + $0x118] sm:$0xff]
      %v3832 = vld [vmem:[#allocation4 + $0x120] sm:$0xff]
      %v3833 = vld [vmem:[#allocation4 + $0x128] sm:$0xff]
      %v3834 = vld [vmem:[#allocation4 + $0x130] sm:$0xff]
      %v3835 = vld [vmem:[#allocation4 + $0x138] sm:$0xff]
      %v3836 = vld [vmem:[#allocation4 + $0x140] sm:$0xff]
      %v3837 = vld [vmem:[#allocation4 + $0x148] sm:$0xff]
      %v3838 = vld [vmem:[#allocation4 + $0x150] sm:$0xff]
      %v3839 = vld [vmem:[#allocation4 + $0x158] sm:$0xff]
      %v3840 = vld [vmem:[#allocation4 + $0x160] sm:$0xff]
      %v3841 = vld [vmem:[#allocation4 + $0x168] sm:$0xff]
      %v3842 = vld [vmem:[#allocation4 + $0x170] sm:$0xff]
      %v3843 = vld [vmem:[#allocation4 + $0x178] sm:$0xff]
      %v3844 = vld [vmem:[#allocation4 + $0x180] sm:$0xff]
      %v3845 = vld [vmem:[#allocation4 + $0x188] sm:$0xff]
      %v3846 = vld [vmem:[#allocation4 + $0x190] sm:$0xff]
      %v3847 = vld [vmem:[#allocation4 + $0x198] sm:$0xff]
      %v3848 = vld [vmem:[#allocation4 + $0x1a0] sm:$0xff]
      %v3849 = vld [vmem:[#allocation4 + $0x1a8] sm:$0xff]
      %v3850 = vld [vmem:[#allocation4 + $0x1b0] sm:$0xff]
      %v3851 = vld [vmem:[#allocation4 + $0x1b8] sm:$0xff]
      %v3852 = vld [vmem:[#allocation4 + $0x1c0] sm:$0xff]
      %v3853 = vld [vmem:[#allocation4 + $0x1c8] sm:$0xff]
      %v3854 = vld [vmem:[#allocation4 + $0x1d0] sm:$0xff]
      %v3855 = vld [vmem:[#allocation4 + $0x1d8] sm:$0xff]
      %v3856 = vld [vmem:[#allocation4 + $0x1e0] sm:$0xff]
      %v3857 = vld [vmem:[#allocation4 + $0x1e8] sm:$0xff]
      %v3858 = vld [vmem:[#allocation4 + $0x1f0] sm:$0xff]
      %v3859 = vld [vmem:[#allocation4 + $0x1f8] sm:$0xff]
      %v3860 = vld [vmem:[#allocation4 + $0x200] sm:$0xff]
      %v3861 = vld [vmem:[#allocation4 + $0x208] sm:$0xff]
      %v3862 = vld [vmem:[#allocation4 + $0x210] sm:$0xff]
      %v3863 = vld [vmem:[#allocation4 + $0x218] sm:$0xff]
      %v3864 = vld [vmem:[#allocation4 + $0x220] sm:$0xff]
      %v3865 = vld [vmem:[#allocation4 + $0x228] sm:$0xff]
      %v3866 = vld [vmem:[#allocation4 + $0x230] sm:$0xff]
      %v3867 = vld [vmem:[#allocation4 + $0x238] sm:$0xff]
      %v3868 = vld [vmem:[#allocation4 + $0x240] sm:$0xff]
      %v3869 = vld [vmem:[#allocation4 + $0x248] sm:$0xff]
      %v3870 = vld [vmem:[#allocation4 + $0x250] sm:$0xff]
      %v3871 = vld [vmem:[#allocation4 + $0x258] sm:$0xff]
      %v3872 = vld [vmem:[#allocation4 + $0x260] sm:$0xff]
      %v3873 = vld [vmem:[#allocation4 + $0x268] sm:$0xff]
      %v3874 = vld [vmem:[#allocation4 + $0x270] sm:$0xff]
      %v3875 = vld [vmem:[#allocation4 + $0x278] sm:$0xff]
      %v3876 = vld [vmem:[#allocation4 + $0x280] sm:$0xff]
      %v3877 = vld [vmem:[#allocation4 + $0x288] sm:$0xff]
      %v3878 = vld [vmem:[#allocation4 + $0x290] sm:$0xff]
      %v3879 = vld [vmem:[#allocation4 + $0x298] sm:$0xff]
      %v3880 = vld [vmem:[#allocation4 + $0x2a0] sm:$0xff]
      %v3881 = vld [vmem:[#allocation4 + $0x2a8] sm:$0xff]
      %v3882 = vld [vmem:[#allocation4 + $0x2b0] sm:$0xff]
      %v3883 = vld [vmem:[#allocation4 + $0x2b8] sm:$0xff]
      %v3884 = vld [vmem:[#allocation4 + $0x2c0] sm:$0xff]
      %v3885 = vld [vmem:[#allocation4 + $0x2c8] sm:$0xff]
      %v3886 = vld [vmem:[#allocation4 + $0x2d0] sm:$0xff]
      %v3887 = vld [vmem:[#allocation4 + $0x2d8] sm:$0xff]
      %v3888 = vld [vmem:[#allocation4 + $0x2e0] sm:$0xff]
      %v3889 = vld [vmem:[#allocation4 + $0x2e8] sm:$0xff]
      %v3890 = vld [vmem:[#allocation4 + $0x2f0] sm:$0xff]
      %v3891 = vld [vmem:[#allocation4 + $0x2f8] sm:$0xff]
      %v3892 = vpack.c.bf16 %v3799, %v3796
      %v3893 = vpack.c.bf16 %v3800, %v3797
      %v3894 = vpack.c.bf16 %v3801, %v3798
      %v3895 = vpack.c.bf16 %v3805, %v3802
      %v3896 = vpack.c.bf16 %v3806, %v3803
      %v3897 = vpack.c.bf16 %v3807, %v3804
      %v3898 = vpack.c.bf16 %v3811, %v3808
      %v3899 = vpack.c.bf16 %v3812, %v3809
      %v3900 = vpack.c.bf16 %v3813, %v3810
      %v3901 = vpack.c.bf16 %v3817, %v3814
      %v3902 = vpack.c.bf16 %v3818, %v3815
      %v3903 = vpack.c.bf16 %v3819, %v3816
      %v3904 = vpack.c.bf16 %v3823, %v3820
      %v3905 = vpack.c.bf16 %v3824, %v3821
      %v3906 = vpack.c.bf16 %v3825, %v3822
      %v3907 = vpack.c.bf16 %v3829, %v3826
      %v3908 = vpack.c.bf16 %v3830, %v3827
      %v3909 = vpack.c.bf16 %v3831, %v3828
      %v3910 = vpack.c.bf16 %v3835, %v3832
      %v3911 = vpack.c.bf16 %v3836, %v3833
      %v3912 = vpack.c.bf16 %v3837, %v3834
      %v3913 = vpack.c.bf16 %v3841, %v3838
      %v3914 = vpack.c.bf16 %v3842, %v3839
      %v3915 = vpack.c.bf16 %v3843, %v3840
      %v3916 = vpack.c.bf16 %v3847, %v3844
      %v3917 = vpack.c.bf16 %v3848, %v3845
      %v3918 = vpack.c.bf16 %v3849, %v3846
      %v3919 = vpack.c.bf16 %v3853, %v3850
      %v3920 = vpack.c.bf16 %v3854, %v3851
      %v3921 = vpack.c.bf16 %v3855, %v3852
      %v3922 = vpack.c.bf16 %v3859, %v3856
      %v3923 = vpack.c.bf16 %v3860, %v3857
      %v3924 = vpack.c.bf16 %v3861, %v3858
      %v3925 = vpack.c.bf16 %v3865, %v3862
      %v3926 = vpack.c.bf16 %v3866, %v3863
      %v3927 = vpack.c.bf16 %v3867, %v3864
      %v3928 = vpack.c.bf16 %v3871, %v3868
      %v3929 = vpack.c.bf16 %v3872, %v3869
      %v3930 = vpack.c.bf16 %v3873, %v3870
      %v3931 = vpack.c.bf16 %v3877, %v3874
      %v3932 = vpack.c.bf16 %v3878, %v3875
      %v3933 = vpack.c.bf16 %v3879, %v3876
      %v3934 = vpack.c.bf16 %v3883, %v3880
      %v3935 = vpack.c.bf16 %v3884, %v3881
      %v3936 = vpack.c.bf16 %v3885, %v3882
      %v3937 = vpack.c.bf16 %v3889, %v3886
      %v3938 = vpack.c.bf16 %v3890, %v3887
      %v3939 = vpack.c.bf16 %v3891, %v3888
      %v3940 = vld [vmem:[%s2] sm:$0xf]
      %v3941 = vld [vmem:[%s2 + $0x4] sm:$0xf]
      %v3942 = vld [vmem:[%s2 + $0x8] sm:$0xf]
      %v3943 = vld [vmem:[%s2 + $0xc] sm:$0xf]
      %v3944 = vld [vmem:[%s2 + $0x10] sm:$0xf]
      %v3945 = vld [vmem:[%s2 + $0x14] sm:$0xf]
      %v3946 = vld [vmem:[%s2 + $0x18] sm:$0xf]
      %v3947 = vld [vmem:[%s2 + $0x1c] sm:$0xf]
      %v3948 = vld [vmem:[%s2 + $0x20] sm:$0xf]
      %v3949 = vld [vmem:[%s2 + $0x24] sm:$0xf]
      %v3950 = vld [vmem:[%s2 + $0x28] sm:$0xf]
      %v3951 = vld [vmem:[%s2 + $0x2c] sm:$0xf]
      %v3952 = vld [vmem:[%s2 + $0x30] sm:$0xf]
      %v3953 = vld [vmem:[%s2 + $0x34] sm:$0xf]
      %v3954 = vld [vmem:[%s2 + $0x38] sm:$0xf]
      %v3955 = vld [vmem:[%s2 + $0x3c] sm:$0xf]
      %v3956 = vld [vmem:[%s2 + $0x40] sm:$0xf]
      %v3957 = vld [vmem:[%s2 + $0x44] sm:$0xf]
      %v3958 = vld [vmem:[%s2 + $0x48] sm:$0xf]
      %v3959 = vld [vmem:[%s2 + $0x4c] sm:$0xf]
      %v3960 = vld [vmem:[%s2 + $0x50] sm:$0xf]
      %v3961 = vld [vmem:[%s2 + $0x54] sm:$0xf]
      %v3962 = vld [vmem:[%s2 + $0x58] sm:$0xf]
      %v3963 = vld [vmem:[%s2 + $0x5c] sm:$0xf]
      %v3964 = vld [vmem:[%s2 + $0x60] sm:$0xf]
      %v3965 = vld [vmem:[%s2 + $0x64] sm:$0xf]
      %v3966 = vld [vmem:[%s2 + $0x68] sm:$0xf]
      %v3967 = vld [vmem:[%s2 + $0x6c] sm:$0xf]
      %v3968 = vld [vmem:[%s2 + $0x70] sm:$0xf]
      %v3969 = vld [vmem:[%s2 + $0x74] sm:$0xf]
      %v3970 = vld [vmem:[%s2 + $0x78] sm:$0xf]
      %v3971 = vld [vmem:[%s2 + $0x7c] sm:$0xf]
      %v3972 = vld [vmem:[%s2 + $0x80] sm:$0xf]
      %v3973 = vld [vmem:[%s2 + $0x84] sm:$0xf]
      %v3974 = vld [vmem:[%s2 + $0x88] sm:$0xf]
      %v3975 = vld [vmem:[%s2 + $0x8c] sm:$0xf]
      %v4012 = vunpack.c.l.b16 %v3940
      %v4013 = vunpack.c.l.b16 %v3941
      %v4014 = vunpack.c.l.b16 %v3942
      %v4015 = vunpack.c.l.b16 %v3943
      %v4016 = vunpack.c.l.b16 %v3944
      %v4017 = vunpack.c.l.b16 %v3945
      %v4018 = vunpack.c.l.b16 %v3946
      %v4019 = vunpack.c.l.b16 %v3947
      %v4020 = vunpack.c.l.b16 %v3948
      %v4021 = vunpack.c.l.b16 %v3949
      %v4022 = vunpack.c.l.b16 %v3950
      %v4023 = vunpack.c.l.b16 %v3951
      %v4024 = vunpack.c.l.b16 %v3952
      %v4025 = vunpack.c.l.b16 %v3953
      %v4026 = vunpack.c.l.b16 %v3954
      %v4027 = vunpack.c.l.b16 %v3955
      %v4028 = vunpack.c.l.b16 %v3956
      %v4029 = vunpack.c.l.b16 %v3957
      %v4030 = vunpack.c.l.b16 %v3958
      %v4031 = vunpack.c.l.b16 %v3959
      %v4032 = vunpack.c.l.b16 %v3960
      %v4033 = vunpack.c.l.b16 %v3961
      %v4034 = vunpack.c.l.b16 %v3962
      %v4035 = vunpack.c.l.b16 %v3963
      %v4036 = vunpack.c.l.b16 %v3964
      %v4037 = vunpack.c.l.b16 %v3965
      %v4038 = vunpack.c.l.b16 %v3966
      %v4039 = vunpack.c.l.b16 %v3967
      %v4040 = vunpack.c.l.b16 %v3968
      %v4041 = vunpack.c.l.b16 %v3969
      %v4042 = vunpack.c.l.b16 %v3970
      %v4043 = vunpack.c.l.b16 %v3971
      %v4044 = vunpack.c.l.b16 %v3972
      %v4045 = vunpack.c.l.b16 %v3973
      %v4046 = vunpack.c.l.b16 %v3974
      %v4047 = vunpack.c.l.b16 %v3975
      %v4048 = vpack.c.b16 %v4013, %v4012
      %v4049 = vpack.c.b16 %v4015, %v4014
      %v4050 = vpack.c.b16 %v4017, %v4016
      %v4051 = vpack.c.b16 %v4019, %v4018
      %v4052 = vpack.c.b16 %v4021, %v4020
      %v4053 = vpack.c.b16 %v4023, %v4022
      %v4054 = vpack.c.b16 %v4025, %v4024
      %v4055 = vpack.c.b16 %v4027, %v4026
      %v4056 = vpack.c.b16 %v4029, %v4028
      %v4057 = vpack.c.b16 %v4031, %v4030
      %v4058 = vpack.c.b16 %v4033, %v4032
      %v4059 = vpack.c.b16 %v4035, %v4034
      %v4060 = vpack.c.b16 %v4037, %v4036
      %v4061 = vpack.c.b16 %v4039, %v4038
      %v4062 = vpack.c.b16 %v4041, %v4040
      %v4063 = vpack.c.b16 %v4043, %v4042
      %v4064 = vpack.c.b16 %v4045, %v4044
      %v4065 = vpack.c.b16 %v4047, %v4046
      %v4085 = vsel %vm2488, %v3894, 0
      %v4088 = vsel %vm2488, %v3897, 0
      %v4091 = vsel %vm2488, %v3900, 0
      %v4094 = vsel %vm2488, %v3903, 0
      %v4097 = vsel %vm2488, %v3906, 0
      %v4100 = vsel %vm2488, %v3909, 0
      %v4103 = vsel %vm2488, %v3912, 0
      %v4106 = vsel %vm2488, %v3915, 0
      %v4109 = vsel %vm2488, %v3918, 0
      %v4112 = vsel %vm2488, %v3921, 0
      %v4115 = vsel %vm2488, %v3924, 0
      %v4118 = vsel %vm2488, %v3927, 0
      %v4121 = vsel %vm2488, %v3930, 0
      %v4124 = vsel %vm2488, %v3933, 0
      %v4127 = vsel %vm2488, %v3936, 0
      %v4130 = vsel %vm2488, %v3939, 0
      %4132 = vmatprep.subr.bf16.mxu0 0
      %4133 = vmatpush1.bf16.msra.mxu0 %v4048
      %4134 = vmatprep.subr.bf16.mxu0 0
      %4135 = vmatpush1.bf16.msra.mxu0 %v4049
      %4136 = vmatprep.subr.bf16.mxu0 0
      %4137 = vmatpush1.bf16.msra.mxu0 %v4050
      %4138 = vmatprep.subr.bf16.mxu0 0
      %4139 = vmatpush1.bf16.msra.mxu0 %v4051
      %4140 = vmatprep.subr.bf16.mxu0 0
      %4141 = vmatpush1.bf16.msra.mxu0 %v4052
      %4142 = vmatprep.subr.bf16.mxu0 0
      %4143 = vmatpush1.bf16.msra.mxu0 %v4053
      %4144 = vmatprep.subr.bf16.mxu0 0
      %4145 = vmatpush1.bf16.msra.mxu0 %v4054
      %4146 = vmatprep.subr.bf16.mxu0 0
      %4147 = vmatpush1.bf16.msra.mxu0 %v4055
      %4148 = vmatprep.subr.bf16.mxu0 0
      %4149 = vmatpush1.bf16.msra.mxu0 %v4056
      %4150 = vmatprep.subr.bf16.mxu0 0
      %4151 = vmatpush1.bf16.msra.mxu0 %v4057
      %4152 = vmatprep.subr.bf16.mxu0 0
      %4153 = vmatpush1.bf16.msra.mxu0 %v4058
      %4154 = vmatprep.subr.bf16.mxu0 0
      %4155 = vmatpush1.bf16.msra.mxu0 %v4059
      %4156 = vmatprep.subr.bf16.mxu0 0
      %4157 = vmatpush1.bf16.msra.mxu0 %v4060
      %4158 = vmatprep.subr.bf16.mxu0 0
      %4159 = vmatpush1.bf16.msra.mxu0 %v4061
      %4160 = vmatprep.subr.bf16.mxu0 0
      %4161 = vmatpush1.bf16.msra.mxu0 %v4062
      %4162 = vmatprep.subr.bf16.mxu0 0
      %4163 = vmatpush1.bf16.msra.mxu0 %v4063
      %4164 = vmatprep.mubr.bf16.mxu0 %v3893
      %4165 = vmatmul.mubr.bf16.gmra.mrb[0].mxu0 %v3892
      %v4166 = vpop.f32.mrb[0].mxu0
      %v4167 = vadd.f32 0.0, %v4166
      %v4168 = vpop.f32.mrb[0].mxu0
      %v4169 = vpop.f32.mrb[0].mxu0
      %v4170 = vadd.f32 0.0, %v4169
      %v4171 = vpop.f32.mrb[0].mxu0
      %4172 = vmatprep.mubr.bf16.mxu0 %v3896
      %4173 = vmatmul.mubr.bf16.gmra.mrb[0].mxu0 %v3895
      %v4174 = vpop.f32.mrb[0].mxu0
      %v4175 = vadd.f32 0.0, %v4174
      %v4176 = vpop.f32.mrb[0].mxu0
      %v4177 = vpop.f32.mrb[0].mxu0
      %v4178 = vadd.f32 0.0, %v4177
      %v4179 = vpop.f32.mrb[0].mxu0
      %4180 = vmatprep.mubr.bf16.mxu0 %v3899
      %4181 = vmatmul.mubr.bf16.gmra.mrb[0].mxu0 %v3898
      %v4182 = vpop.f32.mrb[0].mxu0
      %v4183 = vadd.f32 0.0, %v4182
      %v4184 = vpop.f32.mrb[0].mxu0
      %v4185 = vpop.f32.mrb[0].mxu0
      %v4186 = vadd.f32 0.0, %v4185
      %v4187 = vpop.f32.mrb[0].mxu0
      %4188 = vmatprep.mubr.bf16.mxu0 %v3902
      %4189 = vmatmul.mubr.bf16.gmra.mrb[0].mxu0 %v3901
      %v4190 = vpop.f32.mrb[0].mxu0
      %v4191 = vadd.f32 0.0, %v4190
      %v4192 = vpop.f32.mrb[0].mxu0
      %v4193 = vpop.f32.mrb[0].mxu0
      %v4194 = vadd.f32 0.0, %v4193
      %v4195 = vpop.f32.mrb[0].mxu0
      %4196 = vmatprep.mubr.bf16.mxu0 %v3905
      %4197 = vmatmul.mubr.bf16.gmra.mrb[0].mxu0 %v3904
      %v4198 = vpop.f32.mrb[0].mxu0
      %v4199 = vadd.f32 0.0, %v4198
      %v4200 = vpop.f32.mrb[0].mxu0
      %v4201 = vpop.f32.mrb[0].mxu0
      %v4202 = vadd.f32 0.0, %v4201
      %v4203 = vpop.f32.mrb[0].mxu0
      %4204 = vmatprep.mubr.bf16.mxu0 %v3908
      %4205 = vmatmul.mubr.bf16.gmra.mrb[0].mxu0 %v3907
      %v4206 = vpop.f32.mrb[0].mxu0
      %v4207 = vadd.f32 0.0, %v4206
      %v4208 = vpop.f32.mrb[0].mxu0
      %v4209 = vpop.f32.mrb[0].mxu0
      %v4210 = vadd.f32 0.0, %v4209
      %v4211 = vpop.f32.mrb[0].mxu0
      %4212 = vmatprep.mubr.bf16.mxu0 %v3911
      %4213 = vmatmul.mubr.bf16.gmra.mrb[0].mxu0 %v3910
      %v4214 = vpop.f32.mrb[0].mxu0
      %v4215 = vadd.f32 0.0, %v4214
      %v4216 = vpop.f32.mrb[0].mxu0
      %v4217 = vpop.f32.mrb[0].mxu0
      %v4218 = vadd.f32 0.0, %v4217
      %v4219 = vpop.f32.mrb[0].mxu0
      %4220 = vmatprep.mubr.bf16.mxu0 %v3914
      %4221 = vmatmul.mubr.bf16.gmra.mrb[0].mxu0 %v3913
      %v4222 = vpop.f32.mrb[0].mxu0
      %v4223 = vadd.f32 0.0, %v4222
      %v4224 = vpop.f32.mrb[0].mxu0
      %v4225 = vpop.f32.mrb[0].mxu0
      %v4226 = vadd.f32 0.0, %v4225
      %v4227 = vpop.f32.mrb[0].mxu0
      %4228 = vmatprep.mubr.bf16.mxu0 %v3917
      %4229 = vmatmul.mubr.bf16.gmra.mrb[0].mxu0 %v3916
      %v4230 = vpop.f32.mrb[0].mxu0
      %v4231 = vadd.f32 0.0, %v4230
      %v4232 = vpop.f32.mrb[0].mxu0
      %v4233 = vpop.f32.mrb[0].mxu0
      %v4234 = vadd.f32 0.0, %v4233
      %v4235 = vpop.f32.mrb[0].mxu0
      %4236 = vmatprep.mubr.bf16.mxu0 %v3920
      %4237 = vmatmul.mubr.bf16.gmra.mrb[0].mxu0 %v3919
      %v4238 = vpop.f32.mrb[0].mxu0
      %v4239 = vadd.f32 0.0, %v4238
      %v4240 = vpop.f32.mrb[0].mxu0
      %v4241 = vpop.f32.mrb[0].mxu0
      %v4242 = vadd.f32 0.0, %v4241
      %v4243 = vpop.f32.mrb[0].mxu0
      %4244 = vmatprep.mubr.bf16.mxu0 %v3923
      %4245 = vmatmul.mubr.bf16.gmra.mrb[0].mxu0 %v3922
      %v4246 = vpop.f32.mrb[0].mxu0
      %v4247 = vadd.f32 0.0, %v4246
      %v4248 = vpop.f32.mrb[0].mxu0
      %v4249 = vpop.f32.mrb[0].mxu0
      %v4250 = vadd.f32 0.0, %v4249
      %v4251 = vpop.f32.mrb[0].mxu0
      %4252 = vmatprep.mubr.bf16.mxu0 %v3926
      %4253 = vmatmul.mubr.bf16.gmra.mrb[0].mxu0 %v3925
      %v4254 = vpop.f32.mrb[0].mxu0
      %v4255 = vadd.f32 0.0, %v4254
      %v4256 = vpop.f32.mrb[0].mxu0
      %v4257 = vpop.f32.mrb[0].mxu0
      %v4258 = vadd.f32 0.0, %v4257
      %v4259 = vpop.f32.mrb[0].mxu0
      %4260 = vmatprep.mubr.bf16.mxu0 %v3929
      %4261 = vmatmul.mubr.bf16.gmra.mrb[0].mxu0 %v3928
      %v4262 = vpop.f32.mrb[0].mxu0
      %v4263 = vadd.f32 0.0, %v4262
      %v4264 = vpop.f32.mrb[0].mxu0
      %v4265 = vpop.f32.mrb[0].mxu0
      %v4266 = vadd.f32 0.0, %v4265
      %v4267 = vpop.f32.mrb[0].mxu0
      %4268 = vmatprep.mubr.bf16.mxu0 %v3932
      %4269 = vmatmul.mubr.bf16.gmra.mrb[0].mxu0 %v3931
      %v4270 = vpop.f32.mrb[0].mxu0
      %v4271 = vadd.f32 0.0, %v4270
      %v4272 = vpop.f32.mrb[0].mxu0
      %v4273 = vpop.f32.mrb[0].mxu0
      %v4274 = vadd.f32 0.0, %v4273
      %v4275 = vpop.f32.mrb[0].mxu0
      %4276 = vmatprep.mubr.bf16.mxu0 %v3935
      %4277 = vmatmul.mubr.bf16.gmra.mrb[0].mxu0 %v3934
      %v4278 = vpop.f32.mrb[0].mxu0
      %v4279 = vadd.f32 0.0, %v4278
      %v4280 = vpop.f32.mrb[0].mxu0
      %v4281 = vpop.f32.mrb[0].mxu0
      %v4282 = vadd.f32 0.0, %v4281
      %v4283 = vpop.f32.mrb[0].mxu0
      %4284 = vmatprep.mubr.bf16.mxu0 %v3938
      %4285 = vmatmul.mubr.bf16.gmra.mrb[0].mxu0 %v3937
      %v4286 = vpop.f32.mrb[0].mxu0
      %v4287 = vadd.f32 0.0, %v4286
      %v4288 = vpop.f32.mrb[0].mxu0
      %v4289 = vpop.f32.mrb[0].mxu0
      %v4290 = vadd.f32 0.0, %v4289
      %v4291 = vpop.f32.mrb[0].mxu0
      %4292 = vdwg.mxu0
      %4293 = vmatprep.subr.bf16.mxu0 0
      %4294 = vmatpush1.bf16.msra.mxu0 %v4064
      %4295 = vmatprep.subr.bf16.mxu0 0
      %4296 = vmatpush1.bf16.msra.mxu0 %v4065
      %4297 = vmatprep.subr.bf16.mxu0 0
      %4298 = vmatpush1.bf16.msra.mxu0 0
      %4299 = vmatprep.subr.bf16.mxu0 0
      %4300 = vmatpush1.bf16.msra.mxu0 0
      %4301 = vmatprep.subr.bf16.mxu0 0
      %4302 = vmatpush1.bf16.msra.mxu0 0
      %4303 = vmatprep.subr.bf16.mxu0 0
      %4304 = vmatpush1.bf16.msra.mxu0 0
      %4305 = vmatprep.subr.bf16.mxu0 0
      %4306 = vmatpush1.bf16.msra.mxu0 0
      %4307 = vmatprep.subr.bf16.mxu0 0
      %4308 = vmatpush1.bf16.msra.mxu0 0
      %4309 = vmatprep.subr.bf16.mxu0 0
      %4310 = vmatpush1.bf16.msra.mxu0 0
      %4311 = vmatprep.subr.bf16.mxu0 0
      %4312 = vmatpush1.bf16.msra.mxu0 0
      %4313 = vmatprep.subr.bf16.mxu0 0
      %4314 = vmatpush1.bf16.msra.mxu0 0
      %4315 = vmatprep.subr.bf16.mxu0 0
      %4316 = vmatpush1.bf16.msra.mxu0 0
      %4317 = vmatprep.subr.bf16.mxu0 0
      %4318 = vmatpush1.bf16.msra.mxu0 0
      %4319 = vmatprep.subr.bf16.mxu0 0
      %4320 = vmatpush1.bf16.msra.mxu0 0
      %4321 = vmatprep.subr.bf16.mxu0 0
      %4322 = vmatpush1.bf16.msra.mxu0 0
      %4323 = vmatprep.subr.bf16.mxu0 0
      %4324 = vmatpush1.bf16.msra.mxu0 0
      %4325 = vmatprep.mubr.bf16.mxu0 0
      %4326 = vmatmul.mubr.bf16.gmra.mrb[0].mxu0 %v4085
      %v4327 = vpop.f32.mrb[0].mxu0
      %v4328 = vadd.f32 %v4167, %v4327
      %v4329 = vpop.f32.mrb[0].mxu0
      %v4330 = vpop.f32.mrb[0].mxu0
      %v4331 = vadd.f32 %v4170, %v4330
      %v4332 = vpop.f32.mrb[0].mxu0
      %4333 = vmatprep.mubr.bf16.mxu0 0
      %4334 = vmatmul.mubr.bf16.gmra.mrb[0].mxu0 %v4088
      %v4335 = vpop.f32.mrb[0].mxu0
      %v4336 = vadd.f32 %v4175, %v4335
      %v4337 = vpop.f32.mrb[0].mxu0
      %v4338 = vpop.f32.mrb[0].mxu0
      %v4339 = vadd.f32 %v4178, %v4338
      %v4340 = vpop.f32.mrb[0].mxu0
      %4341 = vmatprep.mubr.bf16.mxu0 0
      %4342 = vmatmul.mubr.bf16.gmra.mrb[0].mxu0 %v4091
      %v4343 = vpop.f32.mrb[0].mxu0
      %v4344 = vadd.f32 %v4183, %v4343
      %v4345 = vpop.f32.mrb[0].mxu0
      %v4346 = vpop.f32.mrb[0].mxu0
      %v4347 = vadd.f32 %v4186, %v4346
      %v4348 = vpop.f32.mrb[0].mxu0
      %4349 = vmatprep.mubr.bf16.mxu0 0
      %4350 = vmatmul.mubr.bf16.gmra.mrb[0].mxu0 %v4094
      %v4351 = vpop.f32.mrb[0].mxu0
      %v4352 = vadd.f32 %v4191, %v4351
      %v4353 = vpop.f32.mrb[0].mxu0
      %v4354 = vpop.f32.mrb[0].mxu0
      %v4355 = vadd.f32 %v4194, %v4354
      %v4356 = vpop.f32.mrb[0].mxu0
      %4357 = vmatprep.mubr.bf16.mxu0 0
      %4358 = vmatmul.mubr.bf16.gmra.mrb[0].mxu0 %v4097
      %v4359 = vpop.f32.mrb[0].mxu0
      %v4360 = vadd.f32 %v4199, %v4359
      %v4361 = vpop.f32.mrb[0].mxu0
      %v4362 = vpop.f32.mrb[0].mxu0
      %v4363 = vadd.f32 %v4202, %v4362
      %v4364 = vpop.f32.mrb[0].mxu0
      %4365 = vmatprep.mubr.bf16.mxu0 0
      %4366 = vmatmul.mubr.bf16.gmra.mrb[0].mxu0 %v4100
      %v4367 = vpop.f32.mrb[0].mxu0
      %v4368 = vadd.f32 %v4207, %v4367
      %v4369 = vpop.f32.mrb[0].mxu0
      %v4370 = vpop.f32.mrb[0].mxu0
      %v4371 = vadd.f32 %v4210, %v4370
      %v4372 = vpop.f32.mrb[0].mxu0
      %4373 = vmatprep.mubr.bf16.mxu0 0
      %4374 = vmatmul.mubr.bf16.gmra.mrb[0].mxu0 %v4103
      %v4375 = vpop.f32.mrb[0].mxu0
      %v4376 = vadd.f32 %v4215, %v4375
      %v4377 = vpop.f32.mrb[0].mxu0
      %v4378 = vpop.f32.mrb[0].mxu0
      %v4379 = vadd.f32 %v4218, %v4378
      %v4380 = vpop.f32.mrb[0].mxu0
      %4381 = vmatprep.mubr.bf16.mxu0 0
      %4382 = vmatmul.mubr.bf16.gmra.mrb[0].mxu0 %v4106
      %v4383 = vpop.f32.mrb[0].mxu0
      %v4384 = vadd.f32 %v4223, %v4383
      %v4385 = vpop.f32.mrb[0].mxu0
      %v4386 = vpop.f32.mrb[0].mxu0
      %v4387 = vadd.f32 %v4226, %v4386
      %v4388 = vpop.f32.mrb[0].mxu0
      %4389 = vmatprep.mubr.bf16.mxu0 0
      %4390 = vmatmul.mubr.bf16.gmra.mrb[0].mxu0 %v4109
      %v4391 = vpop.f32.mrb[0].mxu0
      %v4392 = vadd.f32 %v4231, %v4391
      %v4393 = vpop.f32.mrb[0].mxu0
      %v4394 = vpop.f32.mrb[0].mxu0
      %v4395 = vadd.f32 %v4234, %v4394
      %v4396 = vpop.f32.mrb[0].mxu0
      %4397 = vmatprep.mubr.bf16.mxu0 0
      %4398 = vmatmul.mubr.bf16.gmra.mrb[0].mxu0 %v4112
      %v4399 = vpop.f32.mrb[0].mxu0
      %v4400 = vadd.f32 %v4239, %v4399
      %v4401 = vpop.f32.mrb[0].mxu0
      %v4402 = vpop.f32.mrb[0].mxu0
      %v4403 = vadd.f32 %v4242, %v4402
      %v4404 = vpop.f32.mrb[0].mxu0
      %4405 = vmatprep.mubr.bf16.mxu0 0
      %4406 = vmatmul.mubr.bf16.gmra.mrb[0].mxu0 %v4115
      %v4407 = vpop.f32.mrb[0].mxu0
      %v4408 = vadd.f32 %v4247, %v4407
      %v4409 = vpop.f32.mrb[0].mxu0
      %v4410 = vpop.f32.mrb[0].mxu0
      %v4411 = vadd.f32 %v4250, %v4410
      %v4412 = vpop.f32.mrb[0].mxu0
      %4413 = vmatprep.mubr.bf16.mxu0 0
      %4414 = vmatmul.mubr.bf16.gmra.mrb[0].mxu0 %v4118
      %v4415 = vpop.f32.mrb[0].mxu0
      %v4416 = vadd.f32 %v4255, %v4415
      %v4417 = vpop.f32.mrb[0].mxu0
      %v4418 = vpop.f32.mrb[0].mxu0
      %v4419 = vadd.f32 %v4258, %v4418
      %v4420 = vpop.f32.mrb[0].mxu0
      %4421 = vmatprep.mubr.bf16.mxu0 0
      %4422 = vmatmul.mubr.bf16.gmra.mrb[0].mxu0 %v4121
      %v4423 = vpop.f32.mrb[0].mxu0
      %v4424 = vadd.f32 %v4263, %v4423
      %v4425 = vpop.f32.mrb[0].mxu0
      %v4426 = vpop.f32.mrb[0].mxu0
      %v4427 = vadd.f32 %v4266, %v4426
      %v4428 = vpop.f32.mrb[0].mxu0
      %4429 = vmatprep.mubr.bf16.mxu0 0
      %4430 = vmatmul.mubr.bf16.gmra.mrb[0].mxu0 %v4124
      %v4431 = vpop.f32.mrb[0].mxu0
      %v4432 = vadd.f32 %v4271, %v4431
      %v4433 = vpop.f32.mrb[0].mxu0
      %v4434 = vpop.f32.mrb[0].mxu0
      %v4435 = vadd.f32 %v4274, %v4434
      %v4436 = vpop.f32.mrb[0].mxu0
      %4437 = vmatprep.mubr.bf16.mxu0 0
      %4438 = vmatmul.mubr.bf16.gmra.mrb[0].mxu0 %v4127
      %v4439 = vpop.f32.mrb[0].mxu0
      %v4440 = vadd.f32 %v4279, %v4439
      %v4441 = vpop.f32.mrb[0].mxu0
      %v4442 = vpop.f32.mrb[0].mxu0
      %v4443 = vadd.f32 %v4282, %v4442
      %v4444 = vpop.f32.mrb[0].mxu0
      %4445 = vmatprep.mubr.bf16.mxu0 0
      %4446 = vmatmul.mubr.bf16.gmra.mrb[0].mxu0 %v4130
      %v4447 = vpop.f32.mrb[0].mxu0
      %v4448 = vadd.f32 %v4287, %v4447
      %v4449 = vpop.f32.mrb[0].mxu0
      %v4450 = vpop.f32.mrb[0].mxu0
      %v4451 = vadd.f32 %v4290, %v4450
      %v4452 = vpop.f32.mrb[0].mxu0
      %4453 = vdwg.mxu0
      %v4454 = vld [vmem:[%s4 + $0x2] sm:$0x1]
      %v4455 = vlaneseq
      %v4456 = vshrl.u32 %v4455, 7
      %v4457 = vsub.s32 0, %v4456
      %v4458 = vrot.slane %v4454, %v4457
      %v4459 = vmul.f32 %v4328, %v4458
      %v4460 = vmul.f32 %v4331, %v4458
      %v4461 = vmul.f32 %v4336, %v4458
      %v4462 = vmul.f32 %v4339, %v4458
      %v4463 = vmul.f32 %v4344, %v4458
      %v4464 = vmul.f32 %v4347, %v4458
      %v4465 = vmul.f32 %v4352, %v4458
      %v4466 = vmul.f32 %v4355, %v4458
      %v4467 = vmul.f32 %v4360, %v4458
      %v4468 = vmul.f32 %v4363, %v4458
      %v4469 = vmul.f32 %v4368, %v4458
      %v4470 = vmul.f32 %v4371, %v4458
      %v4471 = vmul.f32 %v4376, %v4458
      %v4472 = vmul.f32 %v4379, %v4458
      %v4473 = vmul.f32 %v4384, %v4458
      %v4474 = vmul.f32 %v4387, %v4458
      %v4475 = vmul.f32 %v4392, %v4458
      %v4476 = vmul.f32 %v4395, %v4458
      %v4477 = vmul.f32 %v4400, %v4458
      %v4478 = vmul.f32 %v4403, %v4458
      %v4479 = vmul.f32 %v4408, %v4458
      %v4480 = vmul.f32 %v4411, %v4458
      %v4481 = vmul.f32 %v4416, %v4458
      %v4482 = vmul.f32 %v4419, %v4458
      %v4483 = vmul.f32 %v4424, %v4458
      %v4484 = vmul.f32 %v4427, %v4458
      %v4485 = vmul.f32 %v4432, %v4458
      %v4486 = vmul.f32 %v4435, %v4458
      %v4487 = vmul.f32 %v4440, %v4458
      %v4488 = vmul.f32 %v4443, %v4458
      %v4489 = vmul.f32 %v4448, %v4458
      %v4490 = vmul.f32 %v4451, %v4458
      %v4491 = vld [vmem:[%s4 + $0x3] sm:$0x1]
      %v4492 = vlaneseq
      %v4493 = vshrl.u32 %v4492, 7
      %v4494 = vsub.s32 0, %v4493
      %v4495 = vrot.slane %v4491, %v4494
      %v4496 = vadd.f32 %v4459, %v4495
      %v4497 = vadd.f32 %v4460, %v4495
      %v4498 = vadd.f32 %v4461, %v4495
      %v4499 = vadd.f32 %v4462, %v4495
      %v4500 = vadd.f32 %v4463, %v4495
      %v4501 = vadd.f32 %v4464, %v4495
      %v4502 = vadd.f32 %v4465, %v4495
      %v4503 = vadd.f32 %v4466, %v4495
      %v4504 = vadd.f32 %v4467, %v4495
      %v4505 = vadd.f32 %v4468, %v4495
      %v4506 = vadd.f32 %v4469, %v4495
      %v4507 = vadd.f32 %v4470, %v4495
      %v4508 = vadd.f32 %v4471, %v4495
      %v4509 = vadd.f32 %v4472, %v4495
      %v4510 = vadd.f32 %v4473, %v4495
      %v4511 = vadd.f32 %v4474, %v4495
      %v4512 = vadd.f32 %v4475, %v4495
      %v4513 = vadd.f32 %v4476, %v4495
      %v4514 = vadd.f32 %v4477, %v4495
      %v4515 = vadd.f32 %v4478, %v4495
      %v4516 = vadd.f32 %v4479, %v4495
      %v4517 = vadd.f32 %v4480, %v4495
      %v4518 = vadd.f32 %v4481, %v4495
      %v4519 = vadd.f32 %v4482, %v4495
      %v4520 = vadd.f32 %v4483, %v4495
      %v4521 = vadd.f32 %v4484, %v4495
      %v4522 = vadd.f32 %v4485, %v4495
      %v4523 = vadd.f32 %v4486, %v4495
      %v4524 = vadd.f32 %v4487, %v4495
      %v4525 = vadd.f32 %v4488, %v4495
      %v4526 = vadd.f32 %v4489, %v4495
      %v4527 = vadd.f32 %v4490, %v4495
      %v4528 = vmax.f32 %v4496, 0.0
      %v4529 = vmax.f32 %v4497, 0.0
      %v4530 = vmax.f32 %v4498, 0.0
      %v4531 = vmax.f32 %v4499, 0.0
      %v4532 = vmax.f32 %v4500, 0.0
      %v4533 = vmax.f32 %v4501, 0.0
      %v4534 = vmax.f32 %v4502, 0.0
      %v4535 = vmax.f32 %v4503, 0.0
      %v4536 = vmax.f32 %v4504, 0.0
      %v4537 = vmax.f32 %v4505, 0.0
      %v4538 = vmax.f32 %v4506, 0.0
      %v4539 = vmax.f32 %v4507, 0.0
      %v4540 = vmax.f32 %v4508, 0.0
      %v4541 = vmax.f32 %v4509, 0.0
      %v4542 = vmax.f32 %v4510, 0.0
      %v4543 = vmax.f32 %v4511, 0.0
      %v4544 = vmax.f32 %v4512, 0.0
      %v4545 = vmax.f32 %v4513, 0.0
      %v4546 = vmax.f32 %v4514, 0.0
      %v4547 = vmax.f32 %v4515, 0.0
      %v4548 = vmax.f32 %v4516, 0.0
      %v4549 = vmax.f32 %v4517, 0.0
      %v4550 = vmax.f32 %v4518, 0.0
      %v4551 = vmax.f32 %v4519, 0.0
      %v4552 = vmax.f32 %v4520, 0.0
      %v4553 = vmax.f32 %v4521, 0.0
      %v4554 = vmax.f32 %v4522, 0.0
      %v4555 = vmax.f32 %v4523, 0.0
      %v4556 = vmax.f32 %v4524, 0.0
      %v4557 = vmax.f32 %v4525, 0.0
      %v4558 = vmax.f32 %v4526, 0.0
      %v4559 = vmax.f32 %v4527, 0.0
      %v4560 = vadd.f32 %v4528, %v2456
      %v4561 = vadd.f32 %v4529, %v2457
      %v4562 = vadd.f32 %v4530, %v2458
      %v4563 = vadd.f32 %v4531, %v2459
      %v4564 = vadd.f32 %v4532, %v2460
      %v4565 = vadd.f32 %v4533, %v2461
      %v4566 = vadd.f32 %v4534, %v2462
      %v4567 = vadd.f32 %v4535, %v2463
      %v4568 = vadd.f32 %v4536, %v2464
      %v4569 = vadd.f32 %v4537, %v2465
      %v4570 = vadd.f32 %v4538, %v2466
      %v4571 = vadd.f32 %v4539, %v2467
      %v4572 = vadd.f32 %v4540, %v2468
      %v4573 = vadd.f32 %v4541, %v2469
      %v4574 = vadd.f32 %v4542, %v2470
      %v4575 = vadd.f32 %v4543, %v2471
      %v4576 = vadd.f32 %v4544, %v2472
      %v4577 = vadd.f32 %v4545, %v2473
      %v4578 = vadd.f32 %v4546, %v2474
      %v4579 = vadd.f32 %v4547, %v2475
      %v4580 = vadd.f32 %v4548, %v2476
      %v4581 = vadd.f32 %v4549, %v2477
      %v4582 = vadd.f32 %v4550, %v2478
      %v4583 = vadd.f32 %v4551, %v2479
      %v4584 = vadd.f32 %v4552, %v2480
      %v4585 = vadd.f32 %v4553, %v2481
      %v4586 = vadd.f32 %v4554, %v2482
      %v4587 = vadd.f32 %v4555, %v2483
      %v4588 = vadd.f32 %v4556, %v2484
      %v4589 = vadd.f32 %v4557, %v2485
      %v4590 = vadd.f32 %v4558, %v2486
      %v4591 = vadd.f32 %v4559, %v2487
      %4592 = vst.msk [vmem:[%s224] sm:$0xff] %vm2488, %v4560
      %4593 = vst.msk [vmem:[%s224 + $0x8] sm:$0xff] %vm2488, %v4561
      %4594 = vst.msk [vmem:[%s224 + $0x10] sm:$0xff] %vm2488, %v4562
      %4595 = vst.msk [vmem:[%s224 + $0x18] sm:$0xff] %vm2488, %v4563
      %4596 = vst.msk [vmem:[%s224 + $0x20] sm:$0xff] %vm2488, %v4564
      %4597 = vst.msk [vmem:[%s224 + $0x28] sm:$0xff] %vm2488, %v4565
      %4598 = vst.msk [vmem:[%s224 + $0x30] sm:$0xff] %vm2488, %v4566
      %4599 = vst.msk [vmem:[%s224 + $0x38] sm:$0xff] %vm2488, %v4567
      %4600 = vst.msk [vmem:[%s224 + $0x40] sm:$0xff] %vm2488, %v4568
      %4601 = vst.msk [vmem:[%s224 + $0x48] sm:$0xff] %vm2488, %v4569
      %4602 = vst.msk [vmem:[%s224 + $0x50] sm:$0xff] %vm2488, %v4570
      %4603 = vst.msk [vmem:[%s224 + $0x58] sm:$0xff] %vm2488, %v4571
      %4604 = vst.msk [vmem:[%s224 + $0x60] sm:$0xff] %vm2488, %v4572
      %4605 = vst.msk [vmem:[%s224 + $0x68] sm:$0xff] %vm2488, %v4573
      %4606 = vst.msk [vmem:[%s224 + $0x70] sm:$0xff] %vm2488, %v4574
      %4607 = vst.msk [vmem:[%s224 + $0x78] sm:$0xff] %vm2488, %v4575
      %4608 = vst.msk [vmem:[%s224 + $0x80] sm:$0xff] %vm2488, %v4576
      %4609 = vst.msk [vmem:[%s224 + $0x88] sm:$0xff] %vm2488, %v4577
      %4610 = vst.msk [vmem:[%s224 + $0x90] sm:$0xff] %vm2488, %v4578
      %4611 = vst.msk [vmem:[%s224 + $0x98] sm:$0xff] %vm2488, %v4579
      %4612 = vst.msk [vmem:[%s224 + $0xa0] sm:$0xff] %vm2488, %v4580
      %4613 = vst.msk [vmem:[%s224 + $0xa8] sm:$0xff] %vm2488, %v4581
      %4614 = vst.msk [vmem:[%s224 + $0xb0] sm:$0xff] %vm2488, %v4582
      %4615 = vst.msk [vmem:[%s224 + $0xb8] sm:$0xff] %vm2488, %v4583
      %4616 = vst.msk [vmem:[%s224 + $0xc0] sm:$0xff] %vm2488, %v4584
      %4617 = vst.msk [vmem:[%s224 + $0xc8] sm:$0xff] %vm2488, %v4585
      %4618 = vst.msk [vmem:[%s224 + $0xd0] sm:$0xff] %vm2488, %v4586
      %4619 = vst.msk [vmem:[%s224 + $0xd8] sm:$0xff] %vm2488, %v4587
      %4620 = vst.msk [vmem:[%s224 + $0xe0] sm:$0xff] %vm2488, %v4588
      %4621 = vst.msk [vmem:[%s224 + $0xe8] sm:$0xff] %vm2488, %v4589
      %4622 = vst.msk [vmem:[%s224 + $0xf0] sm:$0xff] %vm2488, %v4590
      %4623 = vst.msk [vmem:[%s224 + $0xf8] sm:$0xff] %vm2488, %v4591
      %p4624 = scmp.lt.s32.totalorder %s16, 1
      %s4625 = scalar_select %p4624, %s16, 1
      %s4626 = smul.addr %s4625, 32
      %s4627 = smul.addr %s4626, 8
      %s4628 = scalar_lea.vmem %s5, %s4627
      // Predicated region
      $region41: #{tpu_custom_call.1} parent=39 // pred_check
        %p4629 = pneg %p144
      $region42: #{tpu_custom_call.1} parent=39 // pred_check_branch
        %4631 = sbr.rel (%p4629) target = $region44
      $region43: #{tpu_custom_call.1} parent=39 // pred_region
        _
      $region44: #{tpu_custom_call.1} parent=39 // pred_fallthru
        _
    $region40: #{tpu_custom_call.1} parent=5 // pred_fallthru
      _
    %p4632 = scmp.le.s32.totalorder 2, %s11
    // Predicated region
    $region45: #{tpu_custom_call.1} parent=5 // pred_check
      %p4633 = pneg %p4632
    $region46: #{tpu_custom_call.1} parent=5 // pred_check_branch
      %4635 = sbr.rel (%p4633) target = $region48
    $region47: #{tpu_custom_call.1} parent=5 // pred_region
      %s4636 = ssub.s32 %s11, 2
      // Predicated region
      $region49: #{tpu_custom_call.1} parent=47 // pred_check
        %p4637 = pneg %p150
      $region50: #{tpu_custom_call.1} parent=47 // pred_check_branch
        %4639 = sbr.rel (%p4637) target = $region52
      $region51: #{tpu_custom_call.1} parent=47 // pred_region
        %p4640 = scmp.lt.s32.totalorder %s17, 1
        %s4641 = scalar_select %p4640, %s17, 1
        %s4642 = smul.addr %s4641, 32
        %s4643 = smul.addr %s4642, 8
        %s4644 = scalar_lea.vmem %s5, %s4643
      $region52: #{tpu_custom_call.1} parent=47 // pred_fallthru
        _
    $region48: #{tpu_custom_call.1} parent=5 // pred_fallthru
      _
  $region6: #{tpu_custom_call.1} parent=0 // loop_footer
    %s15 = sadd.s32 1, %s11
  $region7: #{tpu_custom_call.1} parent=0 // loop_footer_branch
    %10 = sbr.rel target = $region3
  $region8: #{tpu_custom_call.1} parent=0 // loop_exit
    _

</llo_original>
